<compile_context>
chip_gen: v7x
topology: tpu7x:2x2x1
jax: 0.10.0
libtpu: 0.0.40
codegen_flags: <defaults>
</compile_context>

<pallas_src>
import jax
import jax.numpy as jnp
from jax import lax
from jax.experimental import pallas as pl
from jax.experimental.pallas import tpu as pltpu

NUM_HEADS = 8
SCALE = 0.125      # self.scale in the module (hard-coded)
TAU = 2.0


# -----------------------------------------------------------------------------
# Multi-step LIF neuron (spikingjelly MultiStepLIFNode, decay_input=True,
# v_reset=0.0 -> hard reset).  T is static and small, so unroll in Python.
# State stays 2D/3D; fire & reset are single where-selects per step.
# -----------------------------------------------------------------------------
def _lif(seq, v_th):
    T = seq.shape[0]
    v = jnp.zeros(seq.shape[1:], dtype=seq.dtype)
    spikes = []
    for t in range(T):
        v = v + (seq[t] - v) * (1.0 / TAU)                  # neuronal charge
        fired = v >= v_th                                   # Heaviside fire
        spikes.append(jnp.where(fired, 1.0, 0.0).astype(seq.dtype))
        v = jnp.where(fired, 0.0, v)                        # hard reset to 0
    return jnp.stack(spikes, axis=0)


# -----------------------------------------------------------------------------
# Pallas kernel: one batch element per grid step (batch dim squeezed).
# -----------------------------------------------------------------------------
def _ssa_kernel(x_ref, wqkv_ref, shqkv_ref, wp_ref, shp_ref, mask_ref, o_ref):
    T, N, C = x_ref.shape            # block is (T, N, C); batch dim squeezed
    H = NUM_HEADS

    # ---- fused q|k|v projection (Linear bias + BN folded into w', sh') ------
    x2 = x_ref[...].reshape(T * N, C)                         # leading-dim merge
    y = jnp.dot(x2, wqkv_ref[...], preferred_element_type=jnp.float32)
    y = y + shqkv_ref[...]                                    # (T*N, 3C)

    # One LIF over the concatenated q|k|v channels: LIF is channel-wise
    # independent, so this equals the three separate q/k/v LIF nodes.
    s_qkv = _lif(y.reshape(T, N, 3 * C), 1.0)                 # {0,1} spikes

    q = s_qkv[:, :, 0 * C:1 * C].astype(jnp.bfloat16)         # (T, N, C), exact
    k = s_qkv[:, :, 1 * C:2 * C].astype(jnp.bfloat16)
    v = s_qkv[:, :, 2 * C:3 * C].astype(jnp.bfloat16)

    # ---- multi-head attention via per-head channel masks --------------------
    #   out = sum_h [ (q*m_h) @ (k*m_h)^T * scale ] @ (v*m_h)
    # Two batched contractions over an (H*T) batch; no per-head lane slicing.
    m = mask_ref[...]                                         # (H, 1, N, C) bf16
    qm = (q[None] * m).reshape(H * T, N, C)
    km = (k[None] * m).reshape(H * T, N, C)
    vm = (v[None] * m).reshape(H * T, N, C)

    attn = jnp.einsum('bnc,bmc->bnm', qm, km,
                      preferred_element_type=jnp.float32) * SCALE   # (H*T, N, N)
    outh = jnp.einsum('bnm,bmc->bnc', attn.astype(jnp.bfloat16), vm,
                      preferred_element_type=jnp.float32)           # (H*T, N, C)

    # Sum head contributions along the leading (untiled) dim -> plain VPU adds.
    attn_out = outh[0:T]
    for h in range(1, H):
        attn_out = attn_out + outh[h * T:(h + 1) * T]               # (T, N, C)

    # ---- attn_lif (v_th=0.5) -> proj Linear+BN (folded) -> proj_lif ---------
    s = _lif(attn_out, 0.5)                                         # (T, N, C)
    y2 = jnp.dot(s.reshape(T * N, C), wp_ref[...],
                 preferred_element_type=jnp.float32)
    y2 = (y2 + shp_ref[...]).reshape(T, N, C)

    # proj_lif: write each time step straight into the output block.
    vmem = jnp.zeros((N, C), dtype=jnp.float32)
    for t in range(T):
        vmem = vmem + (y2[t] - vmem) * (1.0 / TAU)
        fired = vmem >= 1.0
        o_ref[t] = jnp.where(fired, 1.0, 0.0).astype(jnp.float32)
        vmem = jnp.where(fired, 0.0, vmem)


# -----------------------------------------------------------------------------
# Wrapper: parameter folding/packing + pallas_call with a parallel grid over B.
# -----------------------------------------------------------------------------
def ssa_pallas(x, params):
    T, B, N, C = x.shape
    H, Ch = NUM_HEADS, C // NUM_HEADS

    def fold(name):
        # module: y = x @ w.T + bias ; bn: y*sc + sh
        # folded: y = x @ (w.T * sc) + (bias*sc + sh)
        w, bias, sc, sh = params[name]
        return w.T * sc[None, :], bias * sc + sh

    wq, sq = fold('q')
    wk, sk = fold('k')
    wv, sv = fold('v')
    wp, sp = fold('proj')
    w_qkv = jnp.concatenate([wq, wk, wv], axis=1)                    # (C, 3C)
    sh_qkv = jnp.concatenate([sq, sk, sv]).reshape(1, 3 * C)
    sh_p = sp.reshape(1, C)

    # Per-head channel mask, pre-broadcast so the in-kernel multiply only
    # broadcasts leading (untiled) dims; bf16 is exact for a 0/1 mask.
    head_of_c = jnp.arange(C, dtype=jnp.int32) // Ch
    mask = (head_of_c[None, :] == jnp.arange(H, dtype=jnp.int32)[:, None])
    mask = jnp.broadcast_to(mask[:, None, None, :], (H, 1, N, C))
    mask = mask.astype(jnp.bfloat16)

    return pl.pallas_call(
        _ssa_kernel,
        out_shape=jax.ShapeDtypeStruct((T, B, N, C), jnp.float32),
        grid_spec=pltpu.PrefetchScalarGridSpec(
            num_scalar_prefetch=0,
            grid=(B,),
            in_specs=[
                pl.BlockSpec((T, None, N, C), lambda b: (0, b, 0, 0)),   # x
                pl.BlockSpec((C, 3 * C), lambda b: (0, 0)),              # w_qkv'
                pl.BlockSpec((1, 3 * C), lambda b: (0, 0)),              # sh_qkv'
                pl.BlockSpec((C, C), lambda b: (0, 0)),                  # w_proj'
                pl.BlockSpec((1, C), lambda b: (0, 0)),                  # sh_proj'
                pl.BlockSpec((H, 1, N, C), lambda b: (0, 0, 0, 0)),      # head mask
            ],
            out_specs=pl.BlockSpec((T, None, N, C), lambda b: (0, b, 0, 0)),
        ),
        compiler_params=pltpu.CompilerParams(
            dimension_semantics=("parallel",)),   # shards B across v7x's 2 TCs
    )(x, w_qkv, sh_qkv, wp, sh_p, mask)


# -----------------------------------------------------------------------------
# Deterministic parameter construction (LinearSuper ~ nn.Linear with bias,
# BNSuper ~ BatchNorm1d with affine + running stats, folded to sc/sh).
# -----------------------------------------------------------------------------
def make_params(key, C):
    ks = jax.random.split(key, 24)
    params = {}
    for i, name in enumerate(('q', 'k', 'v', 'proj')):
        kw, kb, kg, kbe, km, kv = ks[6 * i: 6 * i + 6]
        w = (2.0 / (C ** 0.5)) * jax.random.normal(kw, (C, C), jnp.float32)
        bias = 0.1 * jax.random.normal(kb, (C,), jnp.float32)
        gamma = 1.0 + 0.1 * jax.random.normal(kg, (C,), jnp.float32)
        beta = 0.1 * jax.random.normal(kbe, (C,), jnp.float32)
        mean = 0.1 * jax.random.normal(km, (C,), jnp.float32)
        var = 0.5 + 0.5 * jnp.abs(jax.random.normal(kv, (C,), jnp.float32))
        sc = gamma * lax.rsqrt(var + 1e-5)
        sh = beta - mean * sc
        params[name] = (w, bias, sc, sh)
    return params


# -----------------------------------------------------------------------------
# Pure-JAX reference (mirrors the PyTorch forward, un-folded params).
# -----------------------------------------------------------------------------
def ssa_reference(x, params):
    T, B, N, C = x.shape
    H, Ch = NUM_HEADS, C // NUM_HEADS
    hp = jax.lax.Precision.HIGHEST
    xf = x.reshape(T * B, N, C)

    def branch(name, v_th):
        w, bias, sc, sh = params[name]
        y = jnp.einsum('bnc,dc->bnd', xf, w, precision=hp) + bias
        y = y * sc + sh
        return _lif(y.reshape(T, B, N, C), v_th)

    q = branch('q', 1.0).reshape(T, B, N, H, Ch).transpose(0, 1, 3, 2, 4)
    k = branch('k', 1.0).reshape(T, B, N, H, Ch).transpose(0, 1, 3, 2, 4)
    v = branch('v', 1.0).reshape(T, B, N, H, Ch).transpose(0, 1, 3, 2, 4)

    attn = jnp.einsum('tbhnd,tbhmd->tbhnm', q, k, precision=hp) * SCALE
    out = jnp.einsum('tbhnm,tbhmd->tbhnd', attn, v, precision=hp)
    out = out.transpose(0, 1, 3, 2, 4).reshape(T, B, N, C)
    s = _lif(out, 0.5)

    w, bias, sc, sh = params['proj']
    y = jnp.einsum('bnc,dc->bnd', s.reshape(T * B, N, C), w, precision=hp) + bias
    y = y * sc + sh
    return _lif(y.reshape(T, B, N, C), 1.0)


if __name__ == "__main__":
    key = jax.random.PRNGKey(0)
    kx, kp = jax.random.split(key)

    T, B, N, C = 4, 2, 16, 32          # time, batch, tokens, channels (C % heads == 0)
    x = 3.0 * jax.random.normal(kx, (T, B, N, C), jnp.float32)
    params = make_params(kp, C)

    out = jax.block_until_ready(ssa_pallas(x, params))

    assert out.shape == (T, B, N, C) and out.dtype == jnp.float32
    assert bool(jnp.all(jnp.isfinite(out)))
    assert bool(jnp.all((out == 0.0) | (out == 1.0)))   # outputs are spikes

    ref = ssa_reference(x, params)
    # f32 accumulation-order differences (MXU vs HIGHEST einsum) can flip spikes
    # sitting exactly on the threshold, so compare as a mismatch fraction.
    mismatch_frac = float(jnp.mean(jnp.abs(out - ref)))
    assert mismatch_frac < 0.05, f"spike mismatch fraction too high: {mismatch_frac}"

    print("KERNEL_OK")
</pallas_src>

<mosaic_0001>
module attributes {stable_mosaic.version = 11 : i64} {
  func.func @_ssa_kernel(%arg0: i32, %arg1: memref<4x1x16x32xf32, #tpu.memory_space<vmem>>, %arg2: memref<32x96xf32, #tpu.memory_space<vmem>>, %arg3: memref<1x96xf32, #tpu.memory_space<vmem>>, %arg4: memref<32x32xf32, #tpu.memory_space<vmem>>, %arg5: memref<1x32xf32, #tpu.memory_space<vmem>>, %arg6: memref<8x1x16x32xbf16, #tpu.memory_space<vmem>>, %arg7: memref<4x1x16x32xf32, #tpu.memory_space<vmem>>) attributes {dimension_semantics = [#tpu.dimension_semantics<parallel>], iteration_bounds = array<i64: 2>, scalar_prefetch = 0 : i64, scratch_operands = 0 : i64, tpu.core_type = #tpu.core_type<tc>, window_params = [{transform_indices = @transform_0, window_bounds = array<i64: 4, 1, 16, 32>}, {pipeline_mode = #tpu.pipeline_mode<synchronous>, transform_indices = @transform_1, window_bounds = array<i64: 32, 96>}, {pipeline_mode = #tpu.pipeline_mode<synchronous>, transform_indices = @transform_2, window_bounds = array<i64: 1, 96>}, {pipeline_mode = #tpu.pipeline_mode<synchronous>, transform_indices = @transform_3, window_bounds = array<i64: 32, 32>}, {pipeline_mode = #tpu.pipeline_mode<synchronous>, transform_indices = @transform_4, window_bounds = array<i64: 1, 32>}, {pipeline_mode = #tpu.pipeline_mode<synchronous>, transform_indices = @transform_5, window_bounds = array<i64: 8, 1, 16, 32>}, {transform_indices = @transform_6, window_bounds = array<i64: 4, 1, 16, 32>}]} {
    %c0 = arith.constant 0 : index
    %c0_0 = arith.constant 0 : index
    %c0_1 = arith.constant 0 : index
    %c0_2 = arith.constant 0 : index
    %0 = vector.load %arg1[%c0, %c0_0, %c0_1, %c0_2] : memref<4x1x16x32xf32, #tpu.memory_space<vmem>>, vector<4x1x16x32xf32>
    %1 = vector.shape_cast %0 : vector<4x1x16x32xf32> to vector<4x16x32xf32>
    %2 = vector.shape_cast %1 : vector<4x16x32xf32> to vector<64x32xf32>
    %c0_3 = arith.constant 0 : index
    %c0_4 = arith.constant 0 : index
    %3 = vector.load %arg2[%c0_3, %c0_4] : memref<32x96xf32, #tpu.memory_space<vmem>>, vector<32x96xf32>
    %cst = arith.constant dense<0.000000e+00> : vector<64x96xf32>
    %4 = tpu.matmul %2, %3, %cst {dimension_numbers = #tpu.dot_dimension_numbers<[1], [0], [0], [1], [0, 0, 1, 1], [], []>} : vector<64x32xf32>, vector<32x96xf32>, vector<64x96xf32> -> vector<64x96xf32>
    %c0_5 = arith.constant 0 : index
    %c0_6 = arith.constant 0 : index
    %5 = vector.load %arg3[%c0_5, %c0_6] : memref<1x96xf32, #tpu.memory_space<vmem>>, vector<1x96xf32>
    %6 = vector.broadcast %5 : vector<1x96xf32> to vector<64x96xf32>
    %7 = arith.addf %4, %6 : vector<64x96xf32>
    %8 = vector.shape_cast %7 : vector<64x96xf32> to vector<4x16x96xf32>
    %cst_7 = arith.constant 0.000000e+00 : f32
    %9 = vector.broadcast %cst_7 : f32 to vector<16x96xf32>
    %10 = vector.extract_strided_slice %8 {offsets = [0, 0, 0], sizes = [1, 16, 96], strides = [1, 1, 1]} : vector<4x16x96xf32> to vector<1x16x96xf32>
    %11 = vector.shape_cast %10 : vector<1x16x96xf32> to vector<16x96xf32>
    %12 = arith.subf %11, %9 : vector<16x96xf32>
    %cst_8 = arith.constant 5.000000e-01 : f32
    %13 = vector.broadcast %cst_8 : f32 to vector<16x96xf32>
    %14 = arith.mulf %12, %13 : vector<16x96xf32>
    %15 = arith.addf %9, %14 : vector<16x96xf32>
    %cst_9 = arith.constant 1.000000e+00 : f32
    %16 = vector.broadcast %cst_9 : f32 to vector<16x96xf32>
    %17 = arith.cmpf oge, %15, %16 : vector<16x96xf32>
    %cst_10 = arith.constant 1.000000e+00 : f32
    %cst_11 = arith.constant 0.000000e+00 : f32
    %18 = vector.broadcast %cst_10 : f32 to vector<16x96xf32>
    %19 = vector.broadcast %cst_11 : f32 to vector<16x96xf32>
    %20 = arith.select %17, %18, %19 : vector<16x96xi1>, vector<16x96xf32>
    %cst_12 = arith.constant 0.000000e+00 : f32
    %21 = vector.broadcast %cst_12 : f32 to vector<16x96xf32>
    %22 = arith.select %17, %21, %15 : vector<16x96xi1>, vector<16x96xf32>
    %23 = vector.extract_strided_slice %8 {offsets = [1, 0, 0], sizes = [1, 16, 96], strides = [1, 1, 1]} : vector<4x16x96xf32> to vector<1x16x96xf32>
    %24 = vector.shape_cast %23 : vector<1x16x96xf32> to vector<16x96xf32>
    %25 = arith.subf %24, %22 : vector<16x96xf32>
    %cst_13 = arith.constant 5.000000e-01 : f32
    %26 = vector.broadcast %cst_13 : f32 to vector<16x96xf32>
    %27 = arith.mulf %25, %26 : vector<16x96xf32>
    %28 = arith.addf %22, %27 : vector<16x96xf32>
    %cst_14 = arith.constant 1.000000e+00 : f32
    %29 = vector.broadcast %cst_14 : f32 to vector<16x96xf32>
    %30 = arith.cmpf oge, %28, %29 : vector<16x96xf32>
    %cst_15 = arith.constant 1.000000e+00 : f32
    %cst_16 = arith.constant 0.000000e+00 : f32
    %31 = vector.broadcast %cst_15 : f32 to vector<16x96xf32>
    %32 = vector.broadcast %cst_16 : f32 to vector<16x96xf32>
    %33 = arith.select %30, %31, %32 : vector<16x96xi1>, vector<16x96xf32>
    %cst_17 = arith.constant 0.000000e+00 : f32
    %34 = vector.broadcast %cst_17 : f32 to vector<16x96xf32>
    %35 = arith.select %30, %34, %28 : vector<16x96xi1>, vector<16x96xf32>
    %36 = vector.extract_strided_slice %8 {offsets = [2, 0, 0], sizes = [1, 16, 96], strides = [1, 1, 1]} : vector<4x16x96xf32> to vector<1x16x96xf32>
    %37 = vector.shape_cast %36 : vector<1x16x96xf32> to vector<16x96xf32>
    %38 = arith.subf %37, %35 : vector<16x96xf32>
    %cst_18 = arith.constant 5.000000e-01 : f32
    %39 = vector.broadcast %cst_18 : f32 to vector<16x96xf32>
    %40 = arith.mulf %38, %39 : vector<16x96xf32>
    %41 = arith.addf %35, %40 : vector<16x96xf32>
    %cst_19 = arith.constant 1.000000e+00 : f32
    %42 = vector.broadcast %cst_19 : f32 to vector<16x96xf32>
    %43 = arith.cmpf oge, %41, %42 : vector<16x96xf32>
    %cst_20 = arith.constant 1.000000e+00 : f32
    %cst_21 = arith.constant 0.000000e+00 : f32
    %44 = vector.broadcast %cst_20 : f32 to vector<16x96xf32>
    %45 = vector.broadcast %cst_21 : f32 to vector<16x96xf32>
    %46 = arith.select %43, %44, %45 : vector<16x96xi1>, vector<16x96xf32>
    %cst_22 = arith.constant 0.000000e+00 : f32
    %47 = vector.broadcast %cst_22 : f32 to vector<16x96xf32>
    %48 = arith.select %43, %47, %41 : vector<16x96xi1>, vector<16x96xf32>
    %49 = vector.extract_strided_slice %8 {offsets = [3, 0, 0], sizes = [1, 16, 96], strides = [1, 1, 1]} : vector<4x16x96xf32> to vector<1x16x96xf32>
    %50 = vector.shape_cast %49 : vector<1x16x96xf32> to vector<16x96xf32>
    %51 = arith.subf %50, %48 : vector<16x96xf32>
    %cst_23 = arith.constant 5.000000e-01 : f32
    %52 = vector.broadcast %cst_23 : f32 to vector<16x96xf32>
    %53 = arith.mulf %51, %52 : vector<16x96xf32>
    %54 = arith.addf %48, %53 : vector<16x96xf32>
    %cst_24 = arith.constant 1.000000e+00 : f32
    %55 = vector.broadcast %cst_24 : f32 to vector<16x96xf32>
    %56 = arith.cmpf oge, %54, %55 : vector<16x96xf32>
    %cst_25 = arith.constant 1.000000e+00 : f32
    %cst_26 = arith.constant 0.000000e+00 : f32
    %57 = vector.broadcast %cst_25 : f32 to vector<16x96xf32>
    %58 = vector.broadcast %cst_26 : f32 to vector<16x96xf32>
    %59 = arith.select %56, %57, %58 : vector<16x96xi1>, vector<16x96xf32>
    %60 = vector.shape_cast %20 : vector<16x96xf32> to vector<1x16x96xf32>
    %61 = vector.shape_cast %33 : vector<16x96xf32> to vector<1x16x96xf32>
    %62 = vector.shape_cast %46 : vector<16x96xf32> to vector<1x16x96xf32>
    %63 = vector.shape_cast %59 : vector<16x96xf32> to vector<1x16x96xf32>
    %64 = tpu.concatenate %60, %61, %62, %63 in 0 : vector<1x16x96xf32>, vector<1x16x96xf32>, vector<1x16x96xf32>, vector<1x16x96xf32> -> vector<4x16x96xf32>
    %65 = vector.extract_strided_slice %64 {offsets = [0, 0, 0], sizes = [4, 16, 32], strides = [1, 1, 1]} : vector<4x16x96xf32> to vector<4x16x32xf32>
    %66 = arith.truncf %65 : vector<4x16x32xf32> to vector<4x16x32xbf16>
    %67 = vector.extract_strided_slice %64 {offsets = [0, 0, 32], sizes = [4, 16, 32], strides = [1, 1, 1]} : vector<4x16x96xf32> to vector<4x16x32xf32>
    %68 = arith.truncf %67 : vector<4x16x32xf32> to vector<4x16x32xbf16>
    %69 = vector.extract_strided_slice %64 {offsets = [0, 0, 64], sizes = [4, 16, 32], strides = [1, 1, 1]} : vector<4x16x96xf32> to vector<4x16x32xf32>
    %70 = arith.truncf %69 : vector<4x16x32xf32> to vector<4x16x32xbf16>
    %c0_27 = arith.constant 0 : index
    %c0_28 = arith.constant 0 : index
    %c0_29 = arith.constant 0 : index
    %c0_30 = arith.constant 0 : index
    %71 = vector.load %arg6[%c0_27, %c0_28, %c0_29, %c0_30] : memref<8x1x16x32xbf16, #tpu.memory_space<vmem>>, vector<8x1x16x32xbf16>
    %72 = vector.shape_cast %66 : vector<4x16x32xbf16> to vector<1x4x16x32xbf16>
    %73 = vector.broadcast %72 : vector<1x4x16x32xbf16> to vector<8x4x16x32xbf16>
    %74 = vector.broadcast %71 : vector<8x1x16x32xbf16> to vector<8x4x16x32xbf16>
    %75 = arith.mulf %73, %74 : vector<8x4x16x32xbf16>
    %76 = vector.shape_cast %75 : vector<8x4x16x32xbf16> to vector<32x16x32xbf16>
    %77 = vector.shape_cast %68 : vector<4x16x32xbf16> to vector<1x4x16x32xbf16>
    %78 = vector.broadcast %77 : vector<1x4x16x32xbf16> to vector<8x4x16x32xbf16>
    %79 = vector.broadcast %71 : vector<8x1x16x32xbf16> to vector<8x4x16x32xbf16>
    %80 = arith.mulf %78, %79 : vector<8x4x16x32xbf16>
    %81 = vector.shape_cast %80 : vector<8x4x16x32xbf16> to vector<32x16x32xbf16>
    %82 = vector.shape_cast %70 : vector<4x16x32xbf16> to vector<1x4x16x32xbf16>
    %83 = vector.broadcast %82 : vector<1x4x16x32xbf16> to vector<8x4x16x32xbf16>
    %84 = vector.broadcast %71 : vector<8x1x16x32xbf16> to vector<8x4x16x32xbf16>
    %85 = arith.mulf %83, %84 : vector<8x4x16x32xbf16>
    %86 = vector.shape_cast %85 : vector<8x4x16x32xbf16> to vector<32x16x32xbf16>
    "tpu.trace_start"() <{level = 10 : i32, message = "bnc,bmc->bnm"}> : () -> ()
    %cst_31 = arith.constant dense<0.000000e+00> : vector<32x16x16xf32>
    %87 = tpu.matmul %76, %81, %cst_31 {dimension_numbers = #tpu.dot_dimension_numbers<[2], [2], [1], [1], [0, 0, 0, 1, 1, 1], [0], [0]>} : vector<32x16x32xbf16>, vector<32x16x32xbf16>, vector<32x16x16xf32> -> vector<32x16x16xf32>
    "tpu.trace_stop"() : () -> ()
    %cst_32 = arith.constant 1.250000e-01 : f32
    %88 = vector.broadcast %cst_32 : f32 to vector<32x16x16xf32>
    %89 = arith.mulf %87, %88 : vector<32x16x16xf32>
    %90 = arith.truncf %89 : vector<32x16x16xf32> to vector<32x16x16xbf16>
    "tpu.trace_start"() <{level = 10 : i32, message = "bnm,bmc->bnc"}> : () -> ()
    %cst_33 = arith.constant dense<0.000000e+00> : vector<32x16x32xf32>
    %91 = tpu.matmul %90, %86, %cst_33 {dimension_numbers = #tpu.dot_dimension_numbers<[2], [1], [1], [2], [0, 0, 0, 1, 1, 2], [0], [0]>} : vector<32x16x16xbf16>, vector<32x16x32xbf16>, vector<32x16x32xf32> -> vector<32x16x32xf32>
    "tpu.trace_stop"() : () -> ()
    %92 = vector.extract_strided_slice %91 {offsets = [0, 0, 0], sizes = [4, 16, 32], strides = [1, 1, 1]} : vector<32x16x32xf32> to vector<4x16x32xf32>
    %93 = vector.extract_strided_slice %91 {offsets = [4, 0, 0], sizes = [4, 16, 32], strides = [1, 1, 1]} : vector<32x16x32xf32> to vector<4x16x32xf32>
    %94 = arith.addf %92, %93 : vector<4x16x32xf32>
    %95 = vector.extract_strided_slice %91 {offsets = [8, 0, 0], sizes = [4, 16, 32], strides = [1, 1, 1]} : vector<32x16x32xf32> to vector<4x16x32xf32>
    %96 = arith.addf %94, %95 : vector<4x16x32xf32>
    %97 = vector.extract_strided_slice %91 {offsets = [12, 0, 0], sizes = [4, 16, 32], strides = [1, 1, 1]} : vector<32x16x32xf32> to vector<4x16x32xf32>
    %98 = arith.addf %96, %97 : vector<4x16x32xf32>
    %99 = vector.extract_strided_slice %91 {offsets = [16, 0, 0], sizes = [4, 16, 32], strides = [1, 1, 1]} : vector<32x16x32xf32> to vector<4x16x32xf32>
    %100 = arith.addf %98, %99 : vector<4x16x32xf32>
    %101 = vector.extract_strided_slice %91 {offsets = [20, 0, 0], sizes = [4, 16, 32], strides = [1, 1, 1]} : vector<32x16x32xf32> to vector<4x16x32xf32>
    %102 = arith.addf %100, %101 : vector<4x16x32xf32>
    %103 = vector.extract_strided_slice %91 {offsets = [24, 0, 0], sizes = [4, 16, 32], strides = [1, 1, 1]} : vector<32x16x32xf32> to vector<4x16x32xf32>
    %104 = arith.addf %102, %103 : vector<4x16x32xf32>
    %105 = vector.extract_strided_slice %91 {offsets = [28, 0, 0], sizes = [4, 16, 32], strides = [1, 1, 1]} : vector<32x16x32xf32> to vector<4x16x32xf32>
    %106 = arith.addf %104, %105 : vector<4x16x32xf32>
    %cst_34 = arith.constant 0.000000e+00 : f32
    %107 = vector.broadcast %cst_34 : f32 to vector<16x32xf32>
    %108 = vector.extract_strided_slice %106 {offsets = [0, 0, 0], sizes = [1, 16, 32], strides = [1, 1, 1]} : vector<4x16x32xf32> to vector<1x16x32xf32>
    %109 = vector.shape_cast %108 : vector<1x16x32xf32> to vector<16x32xf32>
    %110 = arith.subf %109, %107 : vector<16x32xf32>
    %cst_35 = arith.constant 5.000000e-01 : f32
    %111 = vector.broadcast %cst_35 : f32 to vector<16x32xf32>
    %112 = arith.mulf %110, %111 : vector<16x32xf32>
    %113 = arith.addf %107, %112 : vector<16x32xf32>
    %cst_36 = arith.constant 5.000000e-01 : f32
    %114 = vector.broadcast %cst_36 : f32 to vector<16x32xf32>
    %115 = arith.cmpf oge, %113, %114 : vector<16x32xf32>
    %cst_37 = arith.constant 1.000000e+00 : f32
    %cst_38 = arith.constant 0.000000e+00 : f32
    %116 = vector.broadcast %cst_37 : f32 to vector<16x32xf32>
    %117 = vector.broadcast %cst_38 : f32 to vector<16x32xf32>
    %118 = arith.select %115, %116, %117 : vector<16x32xi1>, vector<16x32xf32>
    %cst_39 = arith.constant 0.000000e+00 : f32
    %119 = vector.broadcast %cst_39 : f32 to vector<16x32xf32>
    %120 = arith.select %115, %119, %113 : vector<16x32xi1>, vector<16x32xf32>
    %121 = vector.extract_strided_slice %106 {offsets = [1, 0, 0], sizes = [1, 16, 32], strides = [1, 1, 1]} : vector<4x16x32xf32> to vector<1x16x32xf32>
    %122 = vector.shape_cast %121 : vector<1x16x32xf32> to vector<16x32xf32>
    %123 = arith.subf %122, %120 : vector<16x32xf32>
    %cst_40 = arith.constant 5.000000e-01 : f32
    %124 = vector.broadcast %cst_40 : f32 to vector<16x32xf32>
    %125 = arith.mulf %123, %124 : vector<16x32xf32>
    %126 = arith.addf %120, %125 : vector<16x32xf32>
    %cst_41 = arith.constant 5.000000e-01 : f32
    %127 = vector.broadcast %cst_41 : f32 to vector<16x32xf32>
    %128 = arith.cmpf oge, %126, %127 : vector<16x32xf32>
    %cst_42 = arith.constant 1.000000e+00 : f32
    %cst_43 = arith.constant 0.000000e+00 : f32
    %129 = vector.broadcast %cst_42 : f32 to vector<16x32xf32>
    %130 = vector.broadcast %cst_43 : f32 to vector<16x32xf32>
    %131 = arith.select %128, %129, %130 : vector<16x32xi1>, vector<16x32xf32>
    %cst_44 = arith.constant 0.000000e+00 : f32
    %132 = vector.broadcast %cst_44 : f32 to vector<16x32xf32>
    %133 = arith.select %128, %132, %126 : vector<16x32xi1>, vector<16x32xf32>
    %134 = vector.extract_strided_slice %106 {offsets = [2, 0, 0], sizes = [1, 16, 32], strides = [1, 1, 1]} : vector<4x16x32xf32> to vector<1x16x32xf32>
    %135 = vector.shape_cast %134 : vector<1x16x32xf32> to vector<16x32xf32>
    %136 = arith.subf %135, %133 : vector<16x32xf32>
    %cst_45 = arith.constant 5.000000e-01 : f32
    %137 = vector.broadcast %cst_45 : f32 to vector<16x32xf32>
    %138 = arith.mulf %136, %137 : vector<16x32xf32>
    %139 = arith.addf %133, %138 : vector<16x32xf32>
    %cst_46 = arith.constant 5.000000e-01 : f32
    %140 = vector.broadcast %cst_46 : f32 to vector<16x32xf32>
    %141 = arith.cmpf oge, %139, %140 : vector<16x32xf32>
    %cst_47 = arith.constant 1.000000e+00 : f32
    %cst_48 = arith.constant 0.000000e+00 : f32
    %142 = vector.broadcast %cst_47 : f32 to vector<16x32xf32>
    %143 = vector.broadcast %cst_48 : f32 to vector<16x32xf32>
    %144 = arith.select %141, %142, %143 : vector<16x32xi1>, vector<16x32xf32>
    %cst_49 = arith.constant 0.000000e+00 : f32
    %145 = vector.broadcast %cst_49 : f32 to vector<16x32xf32>
    %146 = arith.select %141, %145, %139 : vector<16x32xi1>, vector<16x32xf32>
    %147 = vector.extract_strided_slice %106 {offsets = [3, 0, 0], sizes = [1, 16, 32], strides = [1, 1, 1]} : vector<4x16x32xf32> to vector<1x16x32xf32>
    %148 = vector.shape_cast %147 : vector<1x16x32xf32> to vector<16x32xf32>
    %149 = arith.subf %148, %146 : vector<16x32xf32>
    %cst_50 = arith.constant 5.000000e-01 : f32
    %150 = vector.broadcast %cst_50 : f32 to vector<16x32xf32>
    %151 = arith.mulf %149, %150 : vector<16x32xf32>
    %152 = arith.addf %146, %151 : vector<16x32xf32>
    %cst_51 = arith.constant 5.000000e-01 : f32
    %153 = vector.broadcast %cst_51 : f32 to vector<16x32xf32>
    %154 = arith.cmpf oge, %152, %153 : vector<16x32xf32>
    %cst_52 = arith.constant 1.000000e+00 : f32
    %cst_53 = arith.constant 0.000000e+00 : f32
    %155 = vector.broadcast %cst_52 : f32 to vector<16x32xf32>
    %156 = vector.broadcast %cst_53 : f32 to vector<16x32xf32>
    %157 = arith.select %154, %155, %156 : vector<16x32xi1>, vector<16x32xf32>
    %158 = vector.shape_cast %118 : vector<16x32xf32> to vector<1x16x32xf32>
    %159 = vector.shape_cast %131 : vector<16x32xf32> to vector<1x16x32xf32>
    %160 = vector.shape_cast %144 : vector<16x32xf32> to vector<1x16x32xf32>
    %161 = vector.shape_cast %157 : vector<16x32xf32> to vector<1x16x32xf32>
    %162 = tpu.concatenate %158, %159, %160, %161 in 0 : vector<1x16x32xf32>, vector<1x16x32xf32>, vector<1x16x32xf32>, vector<1x16x32xf32> -> vector<4x16x32xf32>
    %163 = vector.shape_cast %162 : vector<4x16x32xf32> to vector<64x32xf32>
    %c0_54 = arith.constant 0 : index
    %c0_55 = arith.constant 0 : index
    %164 = vector.load %arg4[%c0_54, %c0_55] : memref<32x32xf32, #tpu.memory_space<vmem>>, vector<32x32xf32>
    %cst_56 = arith.constant dense<0.000000e+00> : vector<64x32xf32>
    %165 = tpu.matmul %163, %164, %cst_56 {dimension_numbers = #tpu.dot_dimension_numbers<[1], [0], [0], [1], [0, 0, 1, 1], [], []>} : vector<64x32xf32>, vector<32x32xf32>, vector<64x32xf32> -> vector<64x32xf32>
    %c0_57 = arith.constant 0 : index
    %c0_58 = arith.constant 0 : index
    %166 = vector.load %arg5[%c0_57, %c0_58] : memref<1x32xf32, #tpu.memory_space<vmem>>, vector<1x32xf32>
    %167 = vector.broadcast %166 : vector<1x32xf32> to vector<64x32xf32>
    %168 = arith.addf %165, %167 : vector<64x32xf32>
    %169 = vector.shape_cast %168 : vector<64x32xf32> to vector<4x16x32xf32>
    %cst_59 = arith.constant 0.000000e+00 : f32
    %170 = vector.broadcast %cst_59 : f32 to vector<16x32xf32>
    %171 = vector.extract_strided_slice %169 {offsets = [0, 0, 0], sizes = [1, 16, 32], strides = [1, 1, 1]} : vector<4x16x32xf32> to vector<1x16x32xf32>
    %172 = vector.shape_cast %171 : vector<1x16x32xf32> to vector<16x32xf32>
    %173 = arith.subf %172, %170 : vector<16x32xf32>
    %cst_60 = arith.constant 5.000000e-01 : f32
    %174 = vector.broadcast %cst_60 : f32 to vector<16x32xf32>
    %175 = arith.mulf %173, %174 : vector<16x32xf32>
    %176 = arith.addf %170, %175 : vector<16x32xf32>
    %cst_61 = arith.constant 1.000000e+00 : f32
    %177 = vector.broadcast %cst_61 : f32 to vector<16x32xf32>
    %178 = arith.cmpf oge, %176, %177 : vector<16x32xf32>
    %cst_62 = arith.constant 1.000000e+00 : f32
    %cst_63 = arith.constant 0.000000e+00 : f32
    %179 = vector.broadcast %cst_62 : f32 to vector<16x32xf32>
    %180 = vector.broadcast %cst_63 : f32 to vector<16x32xf32>
    %181 = arith.select %178, %179, %180 : vector<16x32xi1>, vector<16x32xf32>
    %c0_64 = arith.constant 0 : index
    %c0_65 = arith.constant 0 : index
    %c0_66 = arith.constant 0 : index
    %c0_67 = arith.constant 0 : index
    %182 = vector.load %arg7[%c0_64, %c0_65, %c0_66, %c0_67] : memref<4x1x16x32xf32, #tpu.memory_space<vmem>>, vector<1x1x16x32xf32>
    %183 = vector.shape_cast %182 : vector<1x1x16x32xf32> to vector<16x32xf32>
    %184 = vector.shape_cast %181 : vector<16x32xf32> to vector<1x1x16x32xf32>
    tpu.vector_store %arg7[%c0_64, %c0_65, %c0_66, %c0_67], %184 {strides = array<i32>} : memref<4x1x16x32xf32, #tpu.memory_space<vmem>>, vector<1x1x16x32xf32>,
    %cst_68 = arith.constant 0.000000e+00 : f32
    %185 = vector.broadcast %cst_68 : f32 to vector<16x32xf32>
    %186 = arith.select %178, %185, %176 : vector<16x32xi1>, vector<16x32xf32>
    %187 = vector.extract_strided_slice %169 {offsets = [1, 0, 0], sizes = [1, 16, 32], strides = [1, 1, 1]} : vector<4x16x32xf32> to vector<1x16x32xf32>
    %188 = vector.shape_cast %187 : vector<1x16x32xf32> to vector<16x32xf32>
    %189 = arith.subf %188, %186 : vector<16x32xf32>
    %cst_69 = arith.constant 5.000000e-01 : f32
    %190 = vector.broadcast %cst_69 : f32 to vector<16x32xf32>
    %191 = arith.mulf %189, %190 : vector<16x32xf32>
    %192 = arith.addf %186, %191 : vector<16x32xf32>
    %cst_70 = arith.constant 1.000000e+00 : f32
    %193 = vector.broadcast %cst_70 : f32 to vector<16x32xf32>
    %194 = arith.cmpf oge, %192, %193 : vector<16x32xf32>
    %cst_71 = arith.constant 1.000000e+00 : f32
    %cst_72 = arith.constant 0.000000e+00 : f32
    %195 = vector.broadcast %cst_71 : f32 to vector<16x32xf32>
    %196 = vector.broadcast %cst_72 : f32 to vector<16x32xf32>
    %197 = arith.select %194, %195, %196 : vector<16x32xi1>, vector<16x32xf32>
    %c1 = arith.constant 1 : index
    %c0_73 = arith.constant 0 : index
    %c0_74 = arith.constant 0 : index
    %c0_75 = arith.constant 0 : index
    %198 = vector.load %arg7[%c1, %c0_73, %c0_74, %c0_75] : memref<4x1x16x32xf32, #tpu.memory_space<vmem>>, vector<1x1x16x32xf32>
    %199 = vector.shape_cast %198 : vector<1x1x16x32xf32> to vector<16x32xf32>
    %200 = vector.shape_cast %197 : vector<16x32xf32> to vector<1x1x16x32xf32>
    tpu.vector_store %arg7[%c1, %c0_73, %c0_74, %c0_75], %200 {strides = array<i32>} : memref<4x1x16x32xf32, #tpu.memory_space<vmem>>, vector<1x1x16x32xf32>,
    %cst_76 = arith.constant 0.000000e+00 : f32
    %201 = vector.broadcast %cst_76 : f32 to vector<16x32xf32>
    %202 = arith.select %194, %201, %192 : vector<16x32xi1>, vector<16x32xf32>
    %203 = vector.extract_strided_slice %169 {offsets = [2, 0, 0], sizes = [1, 16, 32], strides = [1, 1, 1]} : vector<4x16x32xf32> to vector<1x16x32xf32>
    %204 = vector.shape_cast %203 : vector<1x16x32xf32> to vector<16x32xf32>
    %205 = arith.subf %204, %202 : vector<16x32xf32>
    %cst_77 = arith.constant 5.000000e-01 : f32
    %206 = vector.broadcast %cst_77 : f32 to vector<16x32xf32>
    %207 = arith.mulf %205, %206 : vector<16x32xf32>
    %208 = arith.addf %202, %207 : vector<16x32xf32>
    %cst_78 = arith.constant 1.000000e+00 : f32
    %209 = vector.broadcast %cst_78 : f32 to vector<16x32xf32>
    %210 = arith.cmpf oge, %208, %209 : vector<16x32xf32>
    %cst_79 = arith.constant 1.000000e+00 : f32
    %cst_80 = arith.constant 0.000000e+00 : f32
    %211 = vector.broadcast %cst_79 : f32 to vector<16x32xf32>
    %212 = vector.broadcast %cst_80 : f32 to vector<16x32xf32>
    %213 = arith.select %210, %211, %212 : vector<16x32xi1>, vector<16x32xf32>
    %c2 = arith.constant 2 : index
    %c0_81 = arith.constant 0 : index
    %c0_82 = arith.constant 0 : index
    %c0_83 = arith.constant 0 : index
    %214 = vector.load %arg7[%c2, %c0_81, %c0_82, %c0_83] : memref<4x1x16x32xf32, #tpu.memory_space<vmem>>, vector<1x1x16x32xf32>
    %215 = vector.shape_cast %214 : vector<1x1x16x32xf32> to vector<16x32xf32>
    %216 = vector.shape_cast %213 : vector<16x32xf32> to vector<1x1x16x32xf32>
    tpu.vector_store %arg7[%c2, %c0_81, %c0_82, %c0_83], %216 {strides = array<i32>} : memref<4x1x16x32xf32, #tpu.memory_space<vmem>>, vector<1x1x16x32xf32>,
    %cst_84 = arith.constant 0.000000e+00 : f32
    %217 = vector.broadcast %cst_84 : f32 to vector<16x32xf32>
    %218 = arith.select %210, %217, %208 : vector<16x32xi1>, vector<16x32xf32>
    %219 = vector.extract_strided_slice %169 {offsets = [3, 0, 0], sizes = [1, 16, 32], strides = [1, 1, 1]} : vector<4x16x32xf32> to vector<1x16x32xf32>
    %220 = vector.shape_cast %219 : vector<1x16x32xf32> to vector<16x32xf32>
    %221 = arith.subf %220, %218 : vector<16x32xf32>
    %cst_85 = arith.constant 5.000000e-01 : f32
    %222 = vector.broadcast %cst_85 : f32 to vector<16x32xf32>
    %223 = arith.mulf %221, %222 : vector<16x32xf32>
    %224 = arith.addf %218, %223 : vector<16x32xf32>
    %cst_86 = arith.constant 1.000000e+00 : f32
    %225 = vector.broadcast %cst_86 : f32 to vector<16x32xf32>
    %226 = arith.cmpf oge, %224, %225 : vector<16x32xf32>
    %cst_87 = arith.constant 1.000000e+00 : f32
    %cst_88 = arith.constant 0.000000e+00 : f32
    %227 = vector.broadcast %cst_87 : f32 to vector<16x32xf32>
    %228 = vector.broadcast %cst_88 : f32 to vector<16x32xf32>
    %229 = arith.select %226, %227, %228 : vector<16x32xi1>, vector<16x32xf32>
    %c3 = arith.constant 3 : index
    %c0_89 = arith.constant 0 : index
    %c0_90 = arith.constant 0 : index
    %c0_91 = arith.constant 0 : index
    %230 = vector.load %arg7[%c3, %c0_89, %c0_90, %c0_91] : memref<4x1x16x32xf32, #tpu.memory_space<vmem>>, vector<1x1x16x32xf32>
    %231 = vector.shape_cast %230 : vector<1x1x16x32xf32> to vector<16x32xf32>
    %232 = vector.shape_cast %229 : vector<16x32xf32> to vector<1x1x16x32xf32>
    tpu.vector_store %arg7[%c3, %c0_89, %c0_90, %c0_91], %232 {strides = array<i32>} : memref<4x1x16x32xf32, #tpu.memory_space<vmem>>, vector<1x1x16x32xf32>,
    return
  }
  func.func @transform_0(%arg0: i32) -> (i32, i32, i32, i32) {
    %c0_i32 = arith.constant 0 : i32
    %c0_i32_0 = arith.constant 0 : i32
    %c0_i32_1 = arith.constant 0 : i32
    %c0_i32_2 = arith.constant 0 : i32
    return %c0_i32, %arg0, %c0_i32_0, %c0_i32_1 : i32, i32, i32, i32
  }
  func.func @transform_1(%arg0: i32) -> (i32, i32) {
    %c0_i32 = arith.constant 0 : i32
    %c0_i32_0 = arith.constant 0 : i32
    %c0_i32_1 = arith.constant 0 : i32
    return %c0_i32, %c0_i32_0 : i32, i32
  }
  func.func @transform_2(%arg0: i32) -> (i32, i32) {
    %c0_i32 = arith.constant 0 : i32
    %c0_i32_0 = arith.constant 0 : i32
    %c0_i32_1 = arith.constant 0 : i32
    return %c0_i32, %c0_i32_0 : i32, i32
  }
  func.func @transform_3(%arg0: i32) -> (i32, i32) {
    %c0_i32 = arith.constant 0 : i32
    %c0_i32_0 = arith.constant 0 : i32
    %c0_i32_1 = arith.constant 0 : i32
    return %c0_i32, %c0_i32_0 : i32, i32
  }
  func.func @transform_4(%arg0: i32) -> (i32, i32) {
    %c0_i32 = arith.constant 0 : i32
    %c0_i32_0 = arith.constant 0 : i32
    %c0_i32_1 = arith.constant 0 : i32
    return %c0_i32, %c0_i32_0 : i32, i32
  }
  func.func @transform_5(%arg0: i32) -> (i32, i32, i32, i32) {
    %c0_i32 = arith.constant 0 : i32
    %c0_i32_0 = arith.constant 0 : i32
    %c0_i32_1 = arith.constant 0 : i32
    %c0_i32_2 = arith.constant 0 : i32
    %c0_i32_3 = arith.constant 0 : i32
    return %c0_i32, %c0_i32_0, %c0_i32_1, %c0_i32_2 : i32, i32, i32, i32
  }
  func.func @transform_6(%arg0: i32) -> (i32, i32, i32, i32) {
    %c0_i32 = arith.constant 0 : i32
    %c0_i32_0 = arith.constant 0 : i32
    %c0_i32_1 = arith.constant 0 : i32
    %c0_i32_2 = arith.constant 0 : i32
    return %c0_i32, %arg0, %c0_i32_0, %c0_i32_1 : i32, i32, i32, i32
  }
}

</mosaic_0001>

<llo_original>
// kernel: tpu_custom_call.1
$region0: #{tpu_custom_call.1}
  #allocation0 [shape = 'u32[]', space=smem, size = 0x4, offset = 0x4, fixed_abs, tag = 'smem constant byte address 0x4 - core index']
  #allocation1 [shape = 'u32[144,128]{1,0:T(1,128)}', space=vmem, size = 0x12000, scoped, tag = 'internal scratch']
  #allocation11 [shape = 's32[]', space=sflag, size = 0x4, offset = 0, fixed_abs, tag = 'sflag constant byte address 0x0 - dummy sync flag']
  #allocation13 [shape = 's32[]', space=sflag, size = 0x4, offset = 0, fixed_abs, tag = 'sflag constant byte address 0x0 - dummy sync flag']
  %s0 = inlined_call_operand.hbm [shape: f32[4,2,16,32], index: 0, kind: input, shape index: {}]
  %s1 = inlined_call_operand.hbm [shape: f32[32,96], index: 1, kind: input, shape index: {}]
  %s2 = inlined_call_operand.vmem [shape: f32[1,96], index: 2, kind: input, shape index: {}]
  %s3 = inlined_call_operand.hbm [shape: f32[32,32], index: 3, kind: input, shape index: {}]
  %s4 = inlined_call_operand.vmem [shape: f32[1,32], index: 4, kind: input, shape index: {}]
  %s5 = inlined_call_operand.hbm [shape: bf16[8,1,16,32], index: 5, kind: input, shape index: {}]
  %s6 = inlined_call_operand.hbm [shape: f32[4,2,16,32], index: 6, kind: output, shape index: {}]
  %s7 = sld [smem:[#allocation0]]
  $region73: #{tpu_custom_call.1} parent=0
    _
  %s9 = ssub.s32 1, %s7
  %s10 = scalar_select 0, %s9, %s7
  $region1: #{tpu_custom_call.1} parent=0
    #allocation2 [shape = 'u8[65536]{0}', space=vmem, size = 0x10000, scoped, tag = 'input window, operand 0']
    #allocation3 [shape = 's32[2]{0}', space=sflag, size = 0x8, scoped, tag = 'scoped memory for tpu_custom_call.1']
    #allocation4 [shape = 's32[2]{0}', space=sflag, size = 0x8, scoped, tag = 'scoped memory for tpu_custom_call.1']
    #allocation5 [shape = 'u8[16384]{0}', space=vmem, size = 0x4000, scoped, tag = 'input window, operand 1, single buffered']
    #allocation6 [shape = 's32[1]{0}', space=sflag, size = 0x4, scoped, tag = 'scoped memory for tpu_custom_call.1']
    #allocation7 [shape = 'u8[16384]{0}', space=vmem, size = 0x4000, scoped, tag = 'input window, operand 3, single buffered']
    #allocation8 [shape = 'u8[32768]{0}', space=vmem, size = 0x8000, scoped, tag = 'input window, operand 5, single buffered']
    #allocation9 [shape = 's32[1]{0}', space=sflag, size = 0x4, scoped, tag = 'scoped memory for tpu_custom_call.1']
    #allocation10 [shape = 'u8[65536]{0}', space=vmem, size = 0x10000, scoped, tag = 'output window, operand 0']
    %11 = vsyncpa [#allocation3], 0
    %s12 = scalar_lea.sflag [#allocation3], 1
    %13 = vsyncpa %s12, 0
    %14 = vsyncpa [#allocation6], 0
    %15 = vsyncpa [#allocation9], 0
    %16 = vsyncpa [#allocation4], 0
    %s17 = scalar_lea.sflag [#allocation4], 1
    %18 = vsyncpa %s17, 0
    loop: start=0, step=1, limit=4
    $region2: #{tpu_custom_call.1} parent=1 // loop_pre_header
      _
    $region3: #{tpu_custom_call.1} parent=1 // loop_header
      %s20 = sphi 0, %s24
      %p21 = scmp.ge.s32.totalorder %s20, 4
      %s30 = sphi 0, %s32
      %s33 = sphi 0, %s30
      %s34 = sphi 0, %s33
      %s50 = sphi 0, %s34
      %s54 = sphi 0, %s54
      %s56 = sphi 0, %s54
      %s57 = sphi 0, %s56
      %s71 = sphi 0, %s57
      %s75 = sphi 0, %s75
      %s77 = sphi 0, %s75
      %s78 = sphi 0, %s77
      %s92 = sphi 0, %s78
      %s96 = sphi 0, %s96
      %s98 = sphi 0, %s96
      %s99 = sphi 0, %s98
      %s113 = sphi 0, %s99
      %s117 = sphi 0, %s117
      %s119 = sphi 0, %s117
      %s120 = sphi 0, %s119
      %s134 = sphi 0, %s120
      %s138 = sphi 0, %s138
      %s140 = sphi 0, %s138
      %s141 = sphi 0, %s140
      %s155 = sphi 0, %s141
      %s161 = sphi 0, %s163
      %s164 = sphi 0, %s161
      %s165 = sphi 0, %s164
      %s181 = sphi 0, %s165
    $region4: #{tpu_custom_call.1} parent=1 // loop_header_branch
      %23 = sbr.rel (%p21) target = $region8
    $region5: #{tpu_custom_call.1} parent=1 // loop_body
      %s25 = ssub.s32 %s20, 1
      %s26 = ssub.s32 %s20, 2
      %s27 = sadd.s32 %s20, 1
      %s28 = ssub.s32 %s20, %s27
      %p29 = scmp.eq.s32.totalorder %s28, 0
      %s31 = sadd.s32 %s30, 1
      %s32 = scalar_select %p29, %s30, %s31
      %p35 = pneg %p29
      %p36 = scmp.eq.s32.totalorder %s20, 1
      %p37 = por %p35, %p36
      %p38 = scmp.ne.s32.totalorder %s30, %s33
      %p39 = scmp.eq.s32.totalorder %s20, 0
      %p40 = por %p38, %p39
      %p41 = scmp.ne.s32.totalorder %s30, %s33
      %p42 = scmp.eq.s32.totalorder %s25, 1
      %p43 = por %p41, %p42
      %p44 = scmp.ne.s32.totalorder %s33, %s34
      %p45 = scmp.eq.s32.totalorder %s25, 0
      %p46 = por %p44, %p45
      %p47 = scmp.ne.s32.totalorder %s33, %s34
      %p48 = scmp.eq.s32.totalorder %s26, 1
      %p49 = por %p47, %p48
      %p51 = scmp.ne.s32.totalorder %s34, %s50
      %p52 = scmp.eq.s32.totalorder %s26, 0
      %p53 = por %p51, %p52
      %s55 = sadd.s32 %s54, 1
      %p58 = scmp.eq.s32.totalorder %s20, 1
      %p59 = scmp.ne.s32.totalorder %s54, %s56
      %p60 = scmp.eq.s32.totalorder %s20, 0
      %p61 = por %p59, %p60
      %p62 = scmp.ne.s32.totalorder %s54, %s56
      %p63 = scmp.eq.s32.totalorder %s25, 1
      %p64 = por %p62, %p63
      %p65 = scmp.ne.s32.totalorder %s56, %s57
      %p66 = scmp.eq.s32.totalorder %s25, 0
      %p67 = por %p65, %p66
      %p68 = scmp.ne.s32.totalorder %s56, %s57
      %p69 = scmp.eq.s32.totalorder %s26, 1
      %p70 = por %p68, %p69
      %p72 = scmp.ne.s32.totalorder %s57, %s71
      %p73 = scmp.eq.s32.totalorder %s26, 0
      %p74 = por %p72, %p73
      %s76 = sadd.s32 %s75, 1
      %p79 = scmp.eq.s32.totalorder %s20, 1
      %p80 = scmp.ne.s32.totalorder %s75, %s77
      %p81 = scmp.eq.s32.totalorder %s20, 0
      %p82 = por %p80, %p81
      %p83 = scmp.ne.s32.totalorder %s75, %s77
      %p84 = scmp.eq.s32.totalorder %s25, 1
      %p85 = por %p83, %p84
      %p86 = scmp.ne.s32.totalorder %s77, %s78
      %p87 = scmp.eq.s32.totalorder %s25, 0
      %p88 = por %p86, %p87
      %p89 = scmp.ne.s32.totalorder %s77, %s78
      %p90 = scmp.eq.s32.totalorder %s26, 1
      %p91 = por %p89, %p90
      %p93 = scmp.ne.s32.totalorder %s78, %s92
      %p94 = scmp.eq.s32.totalorder %s26, 0
      %p95 = por %p93, %p94
      %s97 = sadd.s32 %s96, 1
      %p100 = scmp.eq.s32.totalorder %s20, 1
      %p101 = scmp.ne.s32.totalorder %s96, %s98
      %p102 = scmp.eq.s32.totalorder %s20, 0
      %p103 = por %p101, %p102
      %p104 = scmp.ne.s32.totalorder %s96, %s98
      %p105 = scmp.eq.s32.totalorder %s25, 1
      %p106 = por %p104, %p105
      %p107 = scmp.ne.s32.totalorder %s98, %s99
      %p108 = scmp.eq.s32.totalorder %s25, 0
      %p109 = por %p107, %p108
      %p110 = scmp.ne.s32.totalorder %s98, %s99
      %p111 = scmp.eq.s32.totalorder %s26, 1
      %p112 = por %p110, %p111
      %p114 = scmp.ne.s32.totalorder %s99, %s113
      %p115 = scmp.eq.s32.totalorder %s26, 0
      %p116 = por %p114, %p115
      %s118 = sadd.s32 %s117, 1
      %p121 = scmp.eq.s32.totalorder %s20, 1
      %p122 = scmp.ne.s32.totalorder %s117, %s119
      %p123 = scmp.eq.s32.totalorder %s20, 0
      %p124 = por %p122, %p123
      %p125 = scmp.ne.s32.totalorder %s117, %s119
      %p126 = scmp.eq.s32.totalorder %s25, 1
      %p127 = por %p125, %p126
      %p128 = scmp.ne.s32.totalorder %s119, %s120
      %p129 = scmp.eq.s32.totalorder %s25, 0
      %p130 = por %p128, %p129
      %p131 = scmp.ne.s32.totalorder %s119, %s120
      %p132 = scmp.eq.s32.totalorder %s26, 1
      %p133 = por %p131, %p132
      %p135 = scmp.ne.s32.totalorder %s120, %s134
      %p136 = scmp.eq.s32.totalorder %s26, 0
      %p137 = por %p135, %p136
      %s139 = sadd.s32 %s138, 1
      %p142 = scmp.eq.s32.totalorder %s20, 1
      %p143 = scmp.ne.s32.totalorder %s138, %s140
      %p144 = scmp.eq.s32.totalorder %s20, 0
      %p145 = por %p143, %p144
      %p146 = scmp.ne.s32.totalorder %s138, %s140
      %p147 = scmp.eq.s32.totalorder %s25, 1
      %p148 = por %p146, %p147
      %p149 = scmp.ne.s32.totalorder %s140, %s141
      %p150 = scmp.eq.s32.totalorder %s25, 0
      %p151 = por %p149, %p150
      %p152 = scmp.ne.s32.totalorder %s140, %s141
      %p153 = scmp.eq.s32.totalorder %s26, 1
      %p154 = por %p152, %p153
      %p156 = scmp.ne.s32.totalorder %s141, %s155
      %p157 = scmp.eq.s32.totalorder %s26, 0
      %p158 = por %p156, %p157
      %s159 = ssub.s32 %s20, %s27
      %p160 = scmp.eq.s32.totalorder %s159, 0
      %s162 = sadd.s32 %s161, 1
      %s163 = scalar_select %p160, %s161, %s162
      %p166 = pneg %p160
      %p167 = scmp.eq.s32.totalorder %s20, 1
      %p168 = por %p166, %p167
      %p169 = scmp.ne.s32.totalorder %s161, %s164
      %p170 = scmp.eq.s32.totalorder %s20, 0
      %p171 = por %p169, %p170
      %p172 = scmp.ne.s32.totalorder %s161, %s164
      %p173 = scmp.eq.s32.totalorder %s25, 1
      %p174 = por %p172, %p173
      %p175 = scmp.ne.s32.totalorder %s164, %s165
      %p176 = scmp.eq.s32.totalorder %s25, 0
      %p177 = por %p175, %p176
      %p178 = scmp.ne.s32.totalorder %s164, %s165
      %p179 = scmp.eq.s32.totalorder %s26, 1
      %p180 = por %p178, %p179
      %p182 = scmp.ne.s32.totalorder %s165, %s181
      %p183 = scmp.eq.s32.totalorder %s26, 0
      %p184 = por %p182, %p183
      %p185 = scmp.le.s32.totalorder 1, %s20
      %p186 = scmp.lt.s32.totalorder %s20, 3
      %p187 = pnand %p185, %p186
      %p188 = pneg %p187
      // Predicated region
      $region9: #{tpu_custom_call.1} parent=5 // pred_check
        _
      $region10: #{tpu_custom_call.1} parent=5 // pred_check_branch
        %190 = sbr.rel (%p187) target = $region12
      $region11: #{tpu_custom_call.1} parent=5 // pred_region
        %s191 = ssub.s32 %s20, 1
        // Predicated region
        $region13: #{tpu_custom_call.1} parent=11 // pred_check
          %p192 = pneg %p67
        $region14: #{tpu_custom_call.1} parent=11 // pred_check_branch
          %194 = sbr.rel (%p192) target = $region16
        $region15: #{tpu_custom_call.1} parent=11 // pred_region
          %s196 = ssub.s32 512, 512
          %197 = vsyncadd [#allocation6], %s196
          %s198 = sshll.u32 [#allocation5], 4
          %s199 = int_to_ptr.vmem [resolvable:$true] %s198
          %204 = dma.hbm_to_vmem [thread:$0]  %s1, 512, %s199, [#allocation6], 128, 128, 8
        $region16: #{tpu_custom_call.1} parent=11 // pred_fallthru
          _
        // Predicated region
        $region17: #{tpu_custom_call.1} parent=11 // pred_check
          %p205 = pneg %p88
        $region18: #{tpu_custom_call.1} parent=11 // pred_check_branch
          %207 = sbr.rel (%p205) target = $region20
        $region19: #{tpu_custom_call.1} parent=11 // pred_region
          _
        $region20: #{tpu_custom_call.1} parent=11 // pred_fallthru
          _
        // Predicated region
        $region21: #{tpu_custom_call.1} parent=11 // pred_check
          %p208 = pneg %p109
        $region22: #{tpu_custom_call.1} parent=11 // pred_check_branch
          %210 = sbr.rel (%p208) target = $region24
        $region23: #{tpu_custom_call.1} parent=11 // pred_region
          %s212 = ssub.s32 512, 512
          %213 = vsyncadd [#allocation6], %s212
          %s214 = sshll.u32 [#allocation7], 4
          %s215 = int_to_ptr.vmem [resolvable:$true] %s214
          %220 = dma.hbm_to_vmem [thread:$0]  %s3, 512, %s215, [#allocation6], 128, 128, 8
        $region24: #{tpu_custom_call.1} parent=11 // pred_fallthru
          _
        // Predicated region
        $region25: #{tpu_custom_call.1} parent=11 // pred_check
          %p221 = pneg %p130
        $region26: #{tpu_custom_call.1} parent=11 // pred_check_branch
          %223 = sbr.rel (%p221) target = $region28
        $region27: #{tpu_custom_call.1} parent=11 // pred_region
          _
        $region28: #{tpu_custom_call.1} parent=11 // pred_fallthru
          _
        // Predicated region
        $region29: #{tpu_custom_call.1} parent=11 // pred_check
          %p224 = pneg %p151
        $region30: #{tpu_custom_call.1} parent=11 // pred_check_branch
          %226 = sbr.rel (%p224) target = $region32
        $region31: #{tpu_custom_call.1} parent=11 // pred_region
          %s228 = ssub.s32 1024, 1024
          %229 = vsyncadd [#allocation9], %s228
          %s230 = sshll.u32 [#allocation8], 4
          %s231 = int_to_ptr.vmem [resolvable:$true] %s230
          %236 = dma.hbm_to_vmem [thread:$0]  %s5, 1024, %s231, [#allocation9], 64, 64, 4
        $region32: #{tpu_custom_call.1} parent=11 // pred_fallthru
          _
      $region12: #{tpu_custom_call.1} parent=5 // pred_fallthru
        _
      %p237 = scmp.lt.s32.totalorder %s20, 2
      // Predicated region
      $region33: #{tpu_custom_call.1} parent=5 // pred_check
        %p238 = pneg %p237
      $region34: #{tpu_custom_call.1} parent=5 // pred_check_branch
        %240 = sbr.rel (%p238) target = $region36
      $region35: #{tpu_custom_call.1} parent=5 // pred_region
        // Predicated region
        $region37: #{tpu_custom_call.1} parent=35 // pred_check
          %p241 = pneg %p40
        $region38: #{tpu_custom_call.1} parent=35 // pred_check_branch
          %243 = sbr.rel (%p241) target = $region40
        $region39: #{tpu_custom_call.1} parent=35 // pred_region
          #allocation12 [shape = 'u32[6]{0}', space=smem, size = 0x18, scoped, tag = 'DMA stride descriptor']
          %s244 = sand.u32 %s30, 1
          %s245 = scalar_lea.sflag [#allocation3], %s244
          %s246 = sand.u32 %s30, 1
          %s247 = smul.addr %s246, 64
          %s248 = scalar_lea.vmem [#allocation2], %s247
          %s250 = ssub.s32 1024, 1024
          %251 = vsyncadd %s245, %s250
          %s252 = smul.addr %s20, 2
          %s253 = smul.addr %s252, 128
          %s254 = scalar_lea.hbm %s0, %s253
          %s256 = sshll.u32 1, 14
          %s257 = sxor.u32 4294967295, %s256
          %s259 = sld [smem:[#allocation0]]
          %s260 = sadd.s32 2, %s259
          %s262 = sshll.u32 7, 26
          %s263 = sxor.u32 4294967295, %s262
          %s264 = sand.u32 0, %s263
          %s265 = sshll.u32 %s260, 26
          %s266 = sor.u32 %s264, %s265
          %s267 = sshll.u32 %s248, 4
          %s268 = int_to_ptr.vmem [resolvable:$true] %s267
          %274 = sst [smem:[#allocation12]] 512
          %s275 = scalar_lea.smem [#allocation12], 1
          %276 = sst [smem:[%s275]] 256
          %s277 = scalar_lea.smem [#allocation12], 2
          %278 = sst [smem:[%s277]] 2
          %s279 = scalar_lea.smem [#allocation12], 3
          %280 = sst [smem:[%s279]] 128
          %s281 = scalar_lea.smem [#allocation12], 4
          %282 = sst [smem:[%s281]] 128
          %s283 = scalar_lea.smem [#allocation12], 5
          %284 = sst [smem:[%s283]] 8
          %286 = dma.general %s254, 1024, %s268, %s245, [#allocation11], [#allocation12], %s266, 0
        $region40: #{tpu_custom_call.1} parent=35 // pred_fallthru
          _
      $region36: #{tpu_custom_call.1} parent=5 // pred_fallthru
        _
      %p287 = scmp.le.s32.totalorder 1, %s20
      %p288 = scmp.lt.s32.totalorder %s20, 3
      %p289 = pnand %p287, %p288
      %p290 = pneg %p289
      // Predicated region
      $region41: #{tpu_custom_call.1} parent=5 // pred_check
        _
      $region42: #{tpu_custom_call.1} parent=5 // pred_check_branch
        %292 = sbr.rel (%p289) target = $region44
      $region43: #{tpu_custom_call.1} parent=5 // pred_region
        %s293 = ssub.s32 %s20, 1
        %s294 = sand.u32 %s33, 1
        %s295 = scalar_lea.sflag [#allocation3], %s294
        %s296 = sand.u32 %s33, 1
        %s297 = smul.addr %s296, 64
        %s298 = scalar_lea.vmem [#allocation2], %s297
        // Predicated region
        $region45: #{tpu_custom_call.1} parent=43 // pred_check
          %p299 = pneg %p46
        $region46: #{tpu_custom_call.1} parent=43 // pred_check_branch
          %301 = sbr.rel (%p299) target = $region48
        $region47: #{tpu_custom_call.1} parent=43 // pred_region
          %302 = dma.done %s295, 1024
        $region48: #{tpu_custom_call.1} parent=43 // pred_fallthru
          _
        // Predicated region
        $region49: #{tpu_custom_call.1} parent=43 // pred_check
          %p303 = pneg %p67
        $region50: #{tpu_custom_call.1} parent=43 // pred_check_branch
          %305 = sbr.rel (%p303) target = $region52
        $region51: #{tpu_custom_call.1} parent=43 // pred_region
          %306 = dma.done [#allocation6], 512
        $region52: #{tpu_custom_call.1} parent=43 // pred_fallthru
          _
        // Predicated region
        $region53: #{tpu_custom_call.1} parent=43 // pred_check
          %p307 = pneg %p109
        $region54: #{tpu_custom_call.1} parent=43 // pred_check_branch
          %309 = sbr.rel (%p307) target = $region56
        $region55: #{tpu_custom_call.1} parent=43 // pred_region
          %310 = dma.done [#allocation6], 512
        $region56: #{tpu_custom_call.1} parent=43 // pred_fallthru
          _
        // Predicated region
        $region57: #{tpu_custom_call.1} parent=43 // pred_check
          %p311 = pneg %p151
        $region58: #{tpu_custom_call.1} parent=43 // pred_check_branch
          %313 = sbr.rel (%p311) target = $region60
        $region59: #{tpu_custom_call.1} parent=43 // pred_region
          %314 = dma.done [#allocation9], 1024
        $region60: #{tpu_custom_call.1} parent=43 // pred_fallthru
          _
        %s315 = sand.u32 %s33, 1
        %s316 = scalar_lea.sflag [#allocation3], %s315
        %s317 = sand.u32 %s33, 1
        %s318 = smul.addr %s317, 64
        %s319 = scalar_lea.vmem [#allocation2], %s318
        %p320 = pneg %p46
        %p321 = pneg %p43
        %p322 = pneg %p67
        %p323 = pneg %p64
        %p324 = pneg %p88
        %p325 = pneg %p85
        %p326 = pneg %p109
        %p327 = pneg %p106
        %p328 = pneg %p130
        %p329 = pneg %p127
        %p330 = pneg %p151
        %p331 = pneg %p148
        %p332 = pneg %p177
        %p333 = pneg %p174
        %s334 = sand.u32 %s164, 1
        %s335 = scalar_lea.sflag [#allocation4], %s334
        %s336 = sand.u32 %s164, 1
        %s337 = smul.addr %s336, 64
        %s338 = scalar_lea.vmem [#allocation10], %s337
        %v340 = vld [vmem:[%s298] sm:$0xff]
        %v341 = vld [vmem:[%s298 + $0x8] sm:$0xff]
        %v342 = vld [vmem:[%s298 + $0x10] sm:$0xff]
        %v343 = vld [vmem:[%s298 + $0x18] sm:$0xff]
        %v344 = vld [vmem:[%s298 + $0x20] sm:$0xff]
        %v345 = vld [vmem:[%s298 + $0x28] sm:$0xff]
        %v346 = vld [vmem:[%s298 + $0x30] sm:$0xff]
        %v347 = vld [vmem:[%s298 + $0x38] sm:$0xff]
        %v348 = vld [vmem:[#allocation5] sm:$0xff]
        %v349 = vld [vmem:[#allocation5 + $0x8] sm:$0xff]
        %v350 = vld [vmem:[#allocation5 + $0x10] sm:$0xff]
        %v351 = vld [vmem:[#allocation5 + $0x18] sm:$0xff]
        %v352 = vld [vmem:[%s2] sm:$0x1]
        %v354 = vlaneseq
        %v355 = vshrl.u32 %v354, 7
        %v356 = vsub.s32 0, %v355
        %v357 = vrot.slane %v352, %v356
        %vm359 = vcmask 261120
        %v361 = vsel %vm359, %v340, 0
        %v364 = vsel %vm359, %v341, 0
        %v367 = vsel %vm359, %v342, 0
        %v370 = vsel %vm359, %v343, 0
        %v373 = vsel %vm359, %v344, 0
        %v376 = vsel %vm359, %v345, 0
        %v379 = vsel %vm359, %v346, 0
        %v382 = vsel %vm359, %v347, 0
        %384 = vmatprep.subr.mxu0 0.0
        %385 = vmatpush1.msra.mxu0 %v348
        %386 = vmatprep.subr.mxu0 0.0
        %387 = vmatpush1.msra.mxu0 %v349
        %388 = vmatprep.subr.mxu0 0.0
        %389 = vmatpush1.msra.mxu0 %v350
        %390 = vmatprep.subr.mxu0 0.0
        %391 = vmatpush1.msra.mxu0 %v351
        %392 = vmatprep.subr.mxu0 0.0
        %393 = vmatpush1.msra.mxu0 0.0
        %394 = vmatprep.subr.mxu0 0.0
        %395 = vmatpush1.msra.mxu0 0.0
        %396 = vmatprep.subr.mxu0 0.0
        %397 = vmatpush1.msra.mxu0 0.0
        %398 = vmatprep.subr.mxu0 0.0
        %399 = vmatpush1.msra.mxu0 0.0
        %400 = vmatprep.subr.mxu0 0.0
        %401 = vmatpush1.msra.mxu0 0.0
        %402 = vmatprep.subr.mxu0 0.0
        %403 = vmatpush1.msra.mxu0 0.0
        %404 = vmatprep.subr.mxu0 0.0
        %405 = vmatpush1.msra.mxu0 0.0
        %406 = vmatprep.subr.mxu0 0.0
        %407 = vmatpush1.msra.mxu0 0.0
        %408 = vmatprep.subr.mxu0 0.0
        %409 = vmatpush1.msra.mxu0 0.0
        %410 = vmatprep.subr.mxu0 0.0
        %411 = vmatpush1.msra.mxu0 0.0
        %412 = vmatprep.subr.mxu0 0.0
        %413 = vmatpush1.msra.mxu0 0.0
        %414 = vmatprep.subr.mxu0 0.0
        %415 = vmatpush1.msra.mxu0 0.0
        %416 = vmatprep.subr.mxu0 0.0
        %417 = vmatpush1.msra.mxu0 0.0
        %418 = vmatprep.subr.mxu0 0.0
        %419 = vmatpush1.msra.mxu0 0.0
        %420 = vmatprep.subr.mxu0 0.0
        %421 = vmatpush1.msra.mxu0 0.0
        %422 = vmatprep.subr.mxu0 0.0
        %423 = vmatpush1.msra.mxu0 0.0
        %424 = vmatprep.subr.mxu0 0.0
        %425 = vmatpush1.msra.mxu0 0.0
        %426 = vmatprep.subr.mxu0 0.0
        %427 = vmatpush1.msra.mxu0 0.0
        %428 = vmatprep.subr.mxu0 0.0
        %429 = vmatpush1.msra.mxu0 0.0
        %430 = vmatprep.subr.mxu0 0.0
        %431 = vmatpush1.msra.mxu0 0.0
        %432 = vmatprep.subr.mxu0 0.0
        %433 = vmatpush1.msra.mxu0 0.0
        %434 = vmatprep.subr.mxu0 0.0
        %435 = vmatpush1.msra.mxu0 0.0
        %436 = vmatprep.subr.mxu0 0.0
        %437 = vmatpush1.msra.mxu0 0.0
        %438 = vmatprep.subr.mxu0 0.0
        %439 = vmatpush1.msra.mxu0 0.0
        %440 = vmatprep.subr.mxu0 0.0
        %441 = vmatpush1.msra.mxu0 0.0
        %442 = vmatprep.subr.mxu0 0.0
        %443 = vmatpush1.msra.mxu0 0.0
        %444 = vmatprep.subr.mxu0 0.0
        %445 = vmatpush1.msra.mxu0 0.0
        %446 = vmatprep.subr.mxu0 0.0
        %447 = vmatpush1.msra.mxu0 0.0
        %448 = vmatprep.mubr.f32.mxu0 0.0
        %449 = vmatmul.mubr.f32.gmra.mrb[0].mxu0 %v361
        %v450 = vpop.f32.mrb[0].mxu0
        %v451 = vadd.f32 %v357, %v450
        %v452 = vpop.f32.mrb[0].mxu0
        %453 = vmatprep.mubr.f32.mxu0 0.0
        %454 = vmatmul.mubr.f32.gmra.mrb[0].mxu0 %v364
        %v455 = vpop.f32.mrb[0].mxu0
        %v456 = vadd.f32 %v357, %v455
        %v457 = vpop.f32.mrb[0].mxu0
        %458 = vmatprep.mubr.f32.mxu0 0.0
        %459 = vmatmul.mubr.f32.gmra.mrb[0].mxu0 %v367
        %v460 = vpop.f32.mrb[0].mxu0
        %v461 = vadd.f32 %v357, %v460
        %v462 = vpop.f32.mrb[0].mxu0
        %463 = vmatprep.mubr.f32.mxu0 0.0
        %464 = vmatmul.mubr.f32.gmra.mrb[0].mxu0 %v370
        %v465 = vpop.f32.mrb[0].mxu0
        %v466 = vadd.f32 %v357, %v465
        %v467 = vpop.f32.mrb[0].mxu0
        %468 = vmatprep.mubr.f32.mxu0 0.0
        %469 = vmatmul.mubr.f32.gmra.mrb[0].mxu0 %v373
        %v470 = vpop.f32.mrb[0].mxu0
        %v471 = vadd.f32 %v357, %v470
        %v472 = vpop.f32.mrb[0].mxu0
        %473 = vmatprep.mubr.f32.mxu0 0.0
        %474 = vmatmul.mubr.f32.gmra.mrb[0].mxu0 %v376
        %v475 = vpop.f32.mrb[0].mxu0
        %v476 = vadd.f32 %v357, %v475
        %v477 = vpop.f32.mrb[0].mxu0
        %478 = vmatprep.mubr.f32.mxu0 0.0
        %479 = vmatmul.mubr.f32.gmra.mrb[0].mxu0 %v379
        %v480 = vpop.f32.mrb[0].mxu0
        %v481 = vadd.f32 %v357, %v480
        %v482 = vpop.f32.mrb[0].mxu0
        %483 = vmatprep.mubr.f32.mxu0 0.0
        %484 = vmatmul.mubr.f32.gmra.mrb[0].mxu0 %v382
        %v485 = vpop.f32.mrb[0].mxu0
        %v486 = vadd.f32 %v357, %v485
        %v487 = vpop.f32.mrb[0].mxu0
        %488 = vdwg.mxu0
        %v489 = vmul.f32 %v451, 0.5
        %v490 = vmul.f32 %v456, 0.5
        %v491 = vadd.f32 %v489, 0.0
        %v492 = vadd.f32 %v490, 0.0
        %vm493 = vcmp.ge.f32.partialorder %v491, 1.0
        %vm494 = vcmp.ge.f32.partialorder %v492, 1.0
        %v495 = vsel %vm493, 1.0, 0.0
        %v496 = vsel %vm494, 1.0, 0.0
        %v497 = vsel %vm493, 0.0, %v491
        %v498 = vsel %vm494, 0.0, %v492
        %v499 = vsub.f32 %v461, %v497
        %v500 = vsub.f32 %v466, %v498
        %v501 = vmul.f32 %v499, 0.5
        %v502 = vmul.f32 %v500, 0.5
        %v503 = vadd.f32 %v497, %v501
        %v504 = vadd.f32 %v498, %v502
        %vm505 = vcmp.ge.f32.partialorder %v503, 1.0
        %vm506 = vcmp.ge.f32.partialorder %v504, 1.0
        %v507 = vsel %vm505, 1.0, 0.0
        %v508 = vsel %vm506, 1.0, 0.0
        %v509 = vsel %vm505, 0.0, %v503
        %v510 = vsel %vm506, 0.0, %v504
        %v511 = vsub.f32 %v471, %v509
        %v512 = vsub.f32 %v476, %v510
        %v513 = vmul.f32 %v511, 0.5
        %v514 = vmul.f32 %v512, 0.5
        %v515 = vadd.f32 %v509, %v513
        %v516 = vadd.f32 %v510, %v514
        %vm517 = vcmp.ge.f32.partialorder %v515, 1.0
        %vm518 = vcmp.ge.f32.partialorder %v516, 1.0
        %v519 = vsel %vm517, 1.0, 0.0
        %v520 = vsel %vm518, 1.0, 0.0
        %v521 = vsel %vm517, 0.0, %v515
        %v522 = vsel %vm518, 0.0, %v516
        %v523 = vsub.f32 %v481, %v521
        %v524 = vsub.f32 %v486, %v522
        %v525 = vmul.f32 %v523, 0.5
        %v526 = vmul.f32 %v524, 0.5
        %v527 = vadd.f32 %v521, %v525
        %v528 = vadd.f32 %v522, %v526
        %vm529 = vcmp.ge.f32.partialorder %v527, 1.0
        %vm530 = vcmp.ge.f32.partialorder %v528, 1.0
        %v531 = vsel %vm529, 1.0, 0.0
        %v532 = vsel %vm530, 1.0, 0.0
        %v533 = vpack.c.bf16 %v496, %v495
        %v534 = vpack.c.bf16 %v508, %v507
        %v535 = vpack.c.bf16 %v520, %v519
        %v536 = vpack.c.bf16 %v532, %v531
        %v537 = vld [vmem:[#allocation8] sm:$0xf]
        %v538 = vld [vmem:[#allocation8 + $0x4] sm:$0xf]
        %v539 = vld [vmem:[#allocation8 + $0x8] sm:$0xf]
        %v540 = vld [vmem:[#allocation8 + $0xc] sm:$0xf]
        %v541 = vld [vmem:[#allocation8 + $0x10] sm:$0xf]
        %v542 = vld [vmem:[#allocation8 + $0x14] sm:$0xf]
        %v543 = vld [vmem:[#allocation8 + $0x18] sm:$0xf]
        %v544 = vld [vmem:[#allocation8 + $0x1c] sm:$0xf]
        %v545 = vld [vmem:[#allocation8 + $0x20] sm:$0xf]
        %v546 = vld [vmem:[#allocation8 + $0x24] sm:$0xf]
        %v547 = vld [vmem:[#allocation8 + $0x28] sm:$0xf]
        %v548 = vld [vmem:[#allocation8 + $0x2c] sm:$0xf]
        %v549 = vld [vmem:[#allocation8 + $0x30] sm:$0xf]
        %v550 = vld [vmem:[#allocation8 + $0x34] sm:$0xf]
        %v551 = vld [vmem:[#allocation8 + $0x38] sm:$0xf]
        %v552 = vld [vmem:[#allocation8 + $0x3c] sm:$0xf]
        %v569 = vunpack.c.l.b16 %v537
        %v570 = vunpack.c.l.b16 %v538
        %v571 = vunpack.c.l.b16 %v539
        %v572 = vunpack.c.l.b16 %v540
        %v573 = vunpack.c.l.b16 %v541
        %v574 = vunpack.c.l.b16 %v542
        %v575 = vunpack.c.l.b16 %v543
        %v576 = vunpack.c.l.b16 %v544
        %v577 = vunpack.c.l.b16 %v545
        %v578 = vunpack.c.l.b16 %v546
        %v579 = vunpack.c.l.b16 %v547
        %v580 = vunpack.c.l.b16 %v548
        %v581 = vunpack.c.l.b16 %v549
        %v582 = vunpack.c.l.b16 %v550
        %v583 = vunpack.c.l.b16 %v551
        %v584 = vunpack.c.l.b16 %v552
        %v585 = vpack.c.b16 %v570, %v569
        %v586 = vpack.c.b16 %v572, %v571
        %v587 = vpack.c.b16 %v574, %v573
        %v588 = vpack.c.b16 %v576, %v575
        %v589 = vpack.c.b16 %v578, %v577
        %v590 = vpack.c.b16 %v580, %v579
        %v591 = vpack.c.b16 %v582, %v581
        %v592 = vpack.c.b16 %v584, %v583
        %v601 = vmul.bf16 %v533, %v585
        %v602 = vmul.bf16 %v534, %v585
        %v603 = vmul.bf16 %v535, %v585
        %v604 = vmul.bf16 %v536, %v585
        %v605 = vmul.bf16 %v533, %v586
        %v606 = vmul.bf16 %v534, %v586
        %v607 = vmul.bf16 %v535, %v586
        %v608 = vmul.bf16 %v536, %v586
        %v609 = vmul.bf16 %v533, %v587
        %v610 = vmul.bf16 %v534, %v587
        %v611 = vmul.bf16 %v535, %v587
        %v612 = vmul.bf16 %v536, %v587
        %v613 = vmul.bf16 %v533, %v588
        %v614 = vmul.bf16 %v534, %v588
        %v615 = vmul.bf16 %v535, %v588
        %v616 = vmul.bf16 %v536, %v588
        %v617 = vmul.bf16 %v533, %v589
        %v618 = vmul.bf16 %v534, %v589
        %v619 = vmul.bf16 %v535, %v589
        %v620 = vmul.bf16 %v536, %v589
        %v621 = vmul.bf16 %v533, %v590
        %v622 = vmul.bf16 %v534, %v590
        %v623 = vmul.bf16 %v535, %v590
        %v624 = vmul.bf16 %v536, %v590
        %v625 = vmul.bf16 %v533, %v591
        %v626 = vmul.bf16 %v534, %v591
        %v627 = vmul.bf16 %v535, %v591
        %v628 = vmul.bf16 %v536, %v591
        %v629 = vmul.bf16 %v533, %v592
        %v630 = vmul.bf16 %v534, %v592
        %v631 = vmul.bf16 %v535, %v592
        %v632 = vmul.bf16 %v536, %v592
        %633 = vrot.lane.b32.xlu0 %v585, 32
        %v634 = vpop.permute.xlu0 %633
        %635 = vrot.lane.b32.xlu0 %v586, 32
        %v636 = vpop.permute.xlu0 %635
        %637 = vrot.lane.b32.xlu0 %v587, 32
        %v638 = vpop.permute.xlu0 %637
        %639 = vrot.lane.b32.xlu0 %v588, 32
        %v640 = vpop.permute.xlu0 %639
        %641 = vrot.lane.b32.xlu0 %v589, 32
        %v642 = vpop.permute.xlu0 %641
        %643 = vrot.lane.b32.xlu0 %v590, 32
        %v644 = vpop.permute.xlu0 %643
        %645 = vrot.lane.b32.xlu0 %v591, 32
        %v646 = vpop.permute.xlu0 %645
        %647 = vrot.lane.b32.xlu0 %v592, 32
        %v648 = vpop.permute.xlu0 %647
        %v657 = vmul.bf16 %v533, %v634
        %v658 = vmul.bf16 %v534, %v634
        %v659 = vmul.bf16 %v535, %v634
        %v660 = vmul.bf16 %v536, %v634
        %v661 = vmul.bf16 %v533, %v636
        %v662 = vmul.bf16 %v534, %v636
        %v663 = vmul.bf16 %v535, %v636
        %v664 = vmul.bf16 %v536, %v636
        %v665 = vmul.bf16 %v533, %v638
        %v666 = vmul.bf16 %v534, %v638
        %v667 = vmul.bf16 %v535, %v638
        %v668 = vmul.bf16 %v536, %v638
        %v669 = vmul.bf16 %v533, %v640
        %v670 = vmul.bf16 %v534, %v640
        %v671 = vmul.bf16 %v535, %v640
        %v672 = vmul.bf16 %v536, %v640
        %v673 = vmul.bf16 %v533, %v642
        %v674 = vmul.bf16 %v534, %v642
        %v675 = vmul.bf16 %v535, %v642
        %v676 = vmul.bf16 %v536, %v642
        %v677 = vmul.bf16 %v533, %v644
        %v678 = vmul.bf16 %v534, %v644
        %v679 = vmul.bf16 %v535, %v644
        %v680 = vmul.bf16 %v536, %v644
        %v681 = vmul.bf16 %v533, %v646
        %v682 = vmul.bf16 %v534, %v646
        %v683 = vmul.bf16 %v535, %v646
        %v684 = vmul.bf16 %v536, %v646
        %v685 = vmul.bf16 %v533, %v648
        %v686 = vmul.bf16 %v534, %v648
        %v687 = vmul.bf16 %v535, %v648
        %v688 = vmul.bf16 %v536, %v648
        %689 = vrot.lane.b32.xlu0 %v585, 64
        %v690 = vpop.permute.xlu0 %689
        %691 = vrot.lane.b32.xlu0 %v586, 64
        %v692 = vpop.permute.xlu0 %691
        %693 = vrot.lane.b32.xlu0 %v587, 64
        %v694 = vpop.permute.xlu0 %693
        %695 = vrot.lane.b32.xlu0 %v588, 64
        %v696 = vpop.permute.xlu0 %695
        %697 = vrot.lane.b32.xlu0 %v589, 64
        %v698 = vpop.permute.xlu0 %697
        %699 = vrot.lane.b32.xlu0 %v590, 64
        %v700 = vpop.permute.xlu0 %699
        %701 = vrot.lane.b32.xlu0 %v591, 64
        %v702 = vpop.permute.xlu0 %701
        %703 = vrot.lane.b32.xlu0 %v592, 64
        %v704 = vpop.permute.xlu0 %703
        %v713 = vmul.bf16 %v533, %v690
        %v714 = vmul.bf16 %v534, %v690
        %v715 = vmul.bf16 %v535, %v690
        %v716 = vmul.bf16 %v536, %v690
        %v717 = vmul.bf16 %v533, %v692
        %v718 = vmul.bf16 %v534, %v692
        %v719 = vmul.bf16 %v535, %v692
        %v720 = vmul.bf16 %v536, %v692
        %v721 = vmul.bf16 %v533, %v694
        %v722 = vmul.bf16 %v534, %v694
        %v723 = vmul.bf16 %v535, %v694
        %v724 = vmul.bf16 %v536, %v694
        %v725 = vmul.bf16 %v533, %v696
        %v726 = vmul.bf16 %v534, %v696
        %v727 = vmul.bf16 %v535, %v696
        %v728 = vmul.bf16 %v536, %v696
        %v729 = vmul.bf16 %v533, %v698
        %v730 = vmul.bf16 %v534, %v698
        %v731 = vmul.bf16 %v535, %v698
        %v732 = vmul.bf16 %v536, %v698
        %v733 = vmul.bf16 %v533, %v700
        %v734 = vmul.bf16 %v534, %v700
        %v735 = vmul.bf16 %v535, %v700
        %v736 = vmul.bf16 %v536, %v700
        %v737 = vmul.bf16 %v533, %v702
        %v738 = vmul.bf16 %v534, %v702
        %v739 = vmul.bf16 %v535, %v702
        %v740 = vmul.bf16 %v536, %v702
        %v741 = vmul.bf16 %v533, %v704
        %v742 = vmul.bf16 %v534, %v704
        %v743 = vmul.bf16 %v535, %v704
        %v744 = vmul.bf16 %v536, %v704
        %746 = vrot.lane.b32.xlu0 %v657, 96
        %v747 = vpop.permute.xlu0 %746
        %v749 = vsel %vm359, %v601, 0
        %v752 = vsel %vm359, %v747, 0
        %754 = vmatprep.subr.bf16.mxu0 0
        %755 = vmatpush1.bf16.xpose.msra.mxu0 %v752
        %756 = vmatprep.subr.bf16.mxu0 0
        %757 = vmatpush1.bf16.xpose.msra.mxu0 0
        %758 = vmatprep.subr.bf16.mxu0 0
        %759 = vmatpush1.bf16.xpose.msra.mxu0 0
        %760 = vmatprep.subr.bf16.mxu0 0
        %761 = vmatpush1.bf16.xpose.msra.mxu0 0
        %762 = vmatprep.subr.bf16.mxu0 0
        %763 = vmatpush1.bf16.xpose.msra.mxu0 0
        %764 = vmatprep.subr.bf16.mxu0 0
        %765 = vmatpush1.bf16.xpose.msra.mxu0 0
        %766 = vmatprep.subr.bf16.mxu0 0
        %767 = vmatpush1.bf16.xpose.msra.mxu0 0
        %768 = vmatprep.subr.bf16.mxu0 0
        %769 = vmatpush1.bf16.xpose.msra.mxu0 0
        %770 = vmatprep.subr.bf16.mxu0 0
        %771 = vmatpush1.bf16.xpose.msra.mxu0 0
        %772 = vmatprep.subr.bf16.mxu0 0
        %773 = vmatpush1.bf16.xpose.msra.mxu0 0
        %774 = vmatprep.subr.bf16.mxu0 0
        %775 = vmatpush1.bf16.xpose.msra.mxu0 0
        %776 = vmatprep.subr.bf16.mxu0 0
        %777 = vmatpush1.bf16.xpose.msra.mxu0 0
        %778 = vmatprep.subr.bf16.mxu0 0
        %779 = vmatpush1.bf16.xpose.msra.mxu0 0
        %780 = vmatprep.subr.bf16.mxu0 0
        %781 = vmatpush1.bf16.xpose.msra.mxu0 0
        %782 = vmatprep.subr.bf16.mxu0 0
        %783 = vmatpush1.bf16.xpose.msra.mxu0 0
        %784 = vmatprep.subr.bf16.mxu0 0
        %785 = vmatpush1.bf16.xpose.msra.mxu0 0
        %786 = vmatprep.mubr.bf16.mxu0 0
        %787 = vmatmul.mubr.bf16.gmra.mrb[0].mxu0 %v749
        %v788 = vpop.f32.mrb[0].mxu0
        %v789 = vadd.f32 0.0, %v788
        %v790 = vpop.f32.mrb[0].mxu0
        %v791 = vpop.f32.mrb[0].mxu0
        %v792 = vadd.f32 0.0, %v791
        %v793 = vpop.f32.mrb[0].mxu0
        %794 = vdwg.mxu0
        %796 = vrot.lane.b32.xlu0 %v658, 96
        %v797 = vpop.permute.xlu0 %796
        %v799 = vsel %vm359, %v602, 0
        %v802 = vsel %vm359, %v797, 0
        %804 = vmatprep.subr.bf16.mxu0 0
        %805 = vmatpush1.bf16.xpose.msra.mxu0 %v802
        %806 = vmatprep.subr.bf16.mxu0 0
        %807 = vmatpush1.bf16.xpose.msra.mxu0 0
        %808 = vmatprep.subr.bf16.mxu0 0
        %809 = vmatpush1.bf16.xpose.msra.mxu0 0
        %810 = vmatprep.subr.bf16.mxu0 0
        %811 = vmatpush1.bf16.xpose.msra.mxu0 0
        %812 = vmatprep.subr.bf16.mxu0 0
        %813 = vmatpush1.bf16.xpose.msra.mxu0 0
        %814 = vmatprep.subr.bf16.mxu0 0
        %815 = vmatpush1.bf16.xpose.msra.mxu0 0
        %816 = vmatprep.subr.bf16.mxu0 0
        %817 = vmatpush1.bf16.xpose.msra.mxu0 0
        %818 = vmatprep.subr.bf16.mxu0 0
        %819 = vmatpush1.bf16.xpose.msra.mxu0 0
        %820 = vmatprep.subr.bf16.mxu0 0
        %821 = vmatpush1.bf16.xpose.msra.mxu0 0
        %822 = vmatprep.subr.bf16.mxu0 0
        %823 = vmatpush1.bf16.xpose.msra.mxu0 0
        %824 = vmatprep.subr.bf16.mxu0 0
        %825 = vmatpush1.bf16.xpose.msra.mxu0 0
        %826 = vmatprep.subr.bf16.mxu0 0
        %827 = vmatpush1.bf16.xpose.msra.mxu0 0
        %828 = vmatprep.subr.bf16.mxu0 0
        %829 = vmatpush1.bf16.xpose.msra.mxu0 0
        %830 = vmatprep.subr.bf16.mxu0 0
        %831 = vmatpush1.bf16.xpose.msra.mxu0 0
        %832 = vmatprep.subr.bf16.mxu0 0
        %833 = vmatpush1.bf16.xpose.msra.mxu0 0
        %834 = vmatprep.subr.bf16.mxu0 0
        %835 = vmatpush1.bf16.xpose.msra.mxu0 0
        %836 = vmatprep.mubr.bf16.mxu0 0
        %837 = vmatmul.mubr.bf16.gmra.mrb[0].mxu0 %v799
        %v838 = vpop.f32.mrb[0].mxu0
        %v839 = vadd.f32 0.0, %v838
        %v840 = vpop.f32.mrb[0].mxu0
        %v841 = vpop.f32.mrb[0].mxu0
        %v842 = vadd.f32 0.0, %v841
        %v843 = vpop.f32.mrb[0].mxu0
        %844 = vdwg.mxu0
        %846 = vrot.lane.b32.xlu0 %v659, 96
        %v847 = vpop.permute.xlu0 %846
        %v849 = vsel %vm359, %v603, 0
        %v852 = vsel %vm359, %v847, 0
        %854 = vmatprep.subr.bf16.mxu0 0
        %855 = vmatpush1.bf16.xpose.msra.mxu0 %v852
        %856 = vmatprep.subr.bf16.mxu0 0
        %857 = vmatpush1.bf16.xpose.msra.mxu0 0
        %858 = vmatprep.subr.bf16.mxu0 0
        %859 = vmatpush1.bf16.xpose.msra.mxu0 0
        %860 = vmatprep.subr.bf16.mxu0 0
        %861 = vmatpush1.bf16.xpose.msra.mxu0 0
        %862 = vmatprep.subr.bf16.mxu0 0
        %863 = vmatpush1.bf16.xpose.msra.mxu0 0
        %864 = vmatprep.subr.bf16.mxu0 0
        %865 = vmatpush1.bf16.xpose.msra.mxu0 0
        %866 = vmatprep.subr.bf16.mxu0 0
        %867 = vmatpush1.bf16.xpose.msra.mxu0 0
        %868 = vmatprep.subr.bf16.mxu0 0
        %869 = vmatpush1.bf16.xpose.msra.mxu0 0
        %870 = vmatprep.subr.bf16.mxu0 0
        %871 = vmatpush1.bf16.xpose.msra.mxu0 0
        %872 = vmatprep.subr.bf16.mxu0 0
        %873 = vmatpush1.bf16.xpose.msra.mxu0 0
        %874 = vmatprep.subr.bf16.mxu0 0
        %875 = vmatpush1.bf16.xpose.msra.mxu0 0
        %876 = vmatprep.subr.bf16.mxu0 0
        %877 = vmatpush1.bf16.xpose.msra.mxu0 0
        %878 = vmatprep.subr.bf16.mxu0 0
        %879 = vmatpush1.bf16.xpose.msra.mxu0 0
        %880 = vmatprep.subr.bf16.mxu0 0
        %881 = vmatpush1.bf16.xpose.msra.mxu0 0
        %882 = vmatprep.subr.bf16.mxu0 0
        %883 = vmatpush1.bf16.xpose.msra.mxu0 0
        %884 = vmatprep.subr.bf16.mxu0 0
        %885 = vmatpush1.bf16.xpose.msra.mxu0 0
        %886 = vmatprep.mubr.bf16.mxu0 0
        %887 = vmatmul.mubr.bf16.gmra.mrb[0].mxu0 %v849
        %v888 = vpop.f32.mrb[0].mxu0
        %v889 = vadd.f32 0.0, %v888
        %v890 = vpop.f32.mrb[0].mxu0
        %v891 = vpop.f32.mrb[0].mxu0
        %v892 = vadd.f32 0.0, %v891
        %v893 = vpop.f32.mrb[0].mxu0
        %894 = vdwg.mxu0
        %896 = vrot.lane.b32.xlu0 %v660, 96
        %v897 = vpop.permute.xlu0 %896
        %v899 = vsel %vm359, %v604, 0
        %v902 = vsel %vm359, %v897, 0
        %904 = vmatprep.subr.bf16.mxu0 0
        %905 = vmatpush1.bf16.xpose.msra.mxu0 %v902
        %906 = vmatprep.subr.bf16.mxu0 0
        %907 = vmatpush1.bf16.xpose.msra.mxu0 0
        %908 = vmatprep.subr.bf16.mxu0 0
        %909 = vmatpush1.bf16.xpose.msra.mxu0 0
        %910 = vmatprep.subr.bf16.mxu0 0
        %911 = vmatpush1.bf16.xpose.msra.mxu0 0
        %912 = vmatprep.subr.bf16.mxu0 0
        %913 = vmatpush1.bf16.xpose.msra.mxu0 0
        %914 = vmatprep.subr.bf16.mxu0 0
        %915 = vmatpush1.bf16.xpose.msra.mxu0 0
        %916 = vmatprep.subr.bf16.mxu0 0
        %917 = vmatpush1.bf16.xpose.msra.mxu0 0
        %918 = vmatprep.subr.bf16.mxu0 0
        %919 = vmatpush1.bf16.xpose.msra.mxu0 0
        %920 = vmatprep.subr.bf16.mxu0 0
        %921 = vmatpush1.bf16.xpose.msra.mxu0 0
        %922 = vmatprep.subr.bf16.mxu0 0
        %923 = vmatpush1.bf16.xpose.msra.mxu0 0
        %924 = vmatprep.subr.bf16.mxu0 0
        %925 = vmatpush1.bf16.xpose.msra.mxu0 0
        %926 = vmatprep.subr.bf16.mxu0 0
        %927 = vmatpush1.bf16.xpose.msra.mxu0 0
        %928 = vmatprep.subr.bf16.mxu0 0
        %929 = vmatpush1.bf16.xpose.msra.mxu0 0
        %930 = vmatprep.subr.bf16.mxu0 0
        %931 = vmatpush1.bf16.xpose.msra.mxu0 0
        %932 = vmatprep.subr.bf16.mxu0 0
        %933 = vmatpush1.bf16.xpose.msra.mxu0 0
        %934 = vmatprep.subr.bf16.mxu0 0
        %935 = vmatpush1.bf16.xpose.msra.mxu0 0
        %936 = vmatprep.mubr.bf16.mxu0 0
        %937 = vmatmul.mubr.bf16.gmra.mrb[0].mxu0 %v899
        %v938 = vpop.f32.mrb[0].mxu0
        %v939 = vadd.f32 0.0, %v938
        %v940 = vpop.f32.mrb[0].mxu0
        %v941 = vpop.f32.mrb[0].mxu0
        %v942 = vadd.f32 0.0, %v941
        %v943 = vpop.f32.mrb[0].mxu0
        %944 = vdwg.mxu0
        %946 = vrot.lane.b32.xlu0 %v661, 96
        %v947 = vpop.permute.xlu0 %946
        %v949 = vsel %vm359, %v605, 0
        %v952 = vsel %vm359, %v947, 0
        %954 = vmatprep.subr.bf16.mxu0 0
        %955 = vmatpush1.bf16.xpose.msra.mxu0 %v952
        %956 = vmatprep.subr.bf16.mxu0 0
        %957 = vmatpush1.bf16.xpose.msra.mxu0 0
        %958 = vmatprep.subr.bf16.mxu0 0
        %959 = vmatpush1.bf16.xpose.msra.mxu0 0
        %960 = vmatprep.subr.bf16.mxu0 0
        %961 = vmatpush1.bf16.xpose.msra.mxu0 0
        %962 = vmatprep.subr.bf16.mxu0 0
        %963 = vmatpush1.bf16.xpose.msra.mxu0 0
        %964 = vmatprep.subr.bf16.mxu0 0
        %965 = vmatpush1.bf16.xpose.msra.mxu0 0
        %966 = vmatprep.subr.bf16.mxu0 0
        %967 = vmatpush1.bf16.xpose.msra.mxu0 0
        %968 = vmatprep.subr.bf16.mxu0 0
        %969 = vmatpush1.bf16.xpose.msra.mxu0 0
        %970 = vmatprep.subr.bf16.mxu0 0
        %971 = vmatpush1.bf16.xpose.msra.mxu0 0
        %972 = vmatprep.subr.bf16.mxu0 0
        %973 = vmatpush1.bf16.xpose.msra.mxu0 0
        %974 = vmatprep.subr.bf16.mxu0 0
        %975 = vmatpush1.bf16.xpose.msra.mxu0 0
        %976 = vmatprep.subr.bf16.mxu0 0
        %977 = vmatpush1.bf16.xpose.msra.mxu0 0
        %978 = vmatprep.subr.bf16.mxu0 0
        %979 = vmatpush1.bf16.xpose.msra.mxu0 0
        %980 = vmatprep.subr.bf16.mxu0 0
        %981 = vmatpush1.bf16.xpose.msra.mxu0 0
        %982 = vmatprep.subr.bf16.mxu0 0
        %983 = vmatpush1.bf16.xpose.msra.mxu0 0
        %984 = vmatprep.subr.bf16.mxu0 0
        %985 = vmatpush1.bf16.xpose.msra.mxu0 0
        %986 = vmatprep.mubr.bf16.mxu0 0
        %987 = vmatmul.mubr.bf16.gmra.mrb[0].mxu0 %v949
        %v988 = vpop.f32.mrb[0].mxu0
        %v989 = vadd.f32 0.0, %v988
        %v990 = vpop.f32.mrb[0].mxu0
        %v991 = vpop.f32.mrb[0].mxu0
        %v992 = vadd.f32 0.0, %v991
        %v993 = vpop.f32.mrb[0].mxu0
        %994 = vdwg.mxu0
        %996 = vrot.lane.b32.xlu0 %v662, 96
        %v997 = vpop.permute.xlu0 %996
        %v999 = vsel %vm359, %v606, 0
        %v1002 = vsel %vm359, %v997, 0
        %1004 = vmatprep.subr.bf16.mxu0 0
        %1005 = vmatpush1.bf16.xpose.msra.mxu0 %v1002
        %1006 = vmatprep.subr.bf16.mxu0 0
        %1007 = vmatpush1.bf16.xpose.msra.mxu0 0
        %1008 = vmatprep.subr.bf16.mxu0 0
        %1009 = vmatpush1.bf16.xpose.msra.mxu0 0
        %1010 = vmatprep.subr.bf16.mxu0 0
        %1011 = vmatpush1.bf16.xpose.msra.mxu0 0
        %1012 = vmatprep.subr.bf16.mxu0 0
        %1013 = vmatpush1.bf16.xpose.msra.mxu0 0
        %1014 = vmatprep.subr.bf16.mxu0 0
        %1015 = vmatpush1.bf16.xpose.msra.mxu0 0
        %1016 = vmatprep.subr.bf16.mxu0 0
        %1017 = vmatpush1.bf16.xpose.msra.mxu0 0
        %1018 = vmatprep.subr.bf16.mxu0 0
        %1019 = vmatpush1.bf16.xpose.msra.mxu0 0
        %1020 = vmatprep.subr.bf16.mxu0 0
        %1021 = vmatpush1.bf16.xpose.msra.mxu0 0
        %1022 = vmatprep.subr.bf16.mxu0 0
        %1023 = vmatpush1.bf16.xpose.msra.mxu0 0
        %1024 = vmatprep.subr.bf16.mxu0 0
        %1025 = vmatpush1.bf16.xpose.msra.mxu0 0
        %1026 = vmatprep.subr.bf16.mxu0 0
        %1027 = vmatpush1.bf16.xpose.msra.mxu0 0
        %1028 = vmatprep.subr.bf16.mxu0 0
        %1029 = vmatpush1.bf16.xpose.msra.mxu0 0
        %1030 = vmatprep.subr.bf16.mxu0 0
        %1031 = vmatpush1.bf16.xpose.msra.mxu0 0
        %1032 = vmatprep.subr.bf16.mxu0 0
        %1033 = vmatpush1.bf16.xpose.msra.mxu0 0
        %1034 = vmatprep.subr.bf16.mxu0 0
        %1035 = vmatpush1.bf16.xpose.msra.mxu0 0
        %1036 = vmatprep.mubr.bf16.mxu0 0
        %1037 = vmatmul.mubr.bf16.gmra.mrb[0].mxu0 %v999
        %v1038 = vpop.f32.mrb[0].mxu0
        %v1039 = vadd.f32 0.0, %v1038
        %v1040 = vpop.f32.mrb[0].mxu0
        %v1041 = vpop.f32.mrb[0].mxu0
        %v1042 = vadd.f32 0.0, %v1041
        %v1043 = vpop.f32.mrb[0].mxu0
        %1044 = vdwg.mxu0
        %1046 = vrot.lane.b32.xlu0 %v663, 96
        %v1047 = vpop.permute.xlu0 %1046
        %v1049 = vsel %vm359, %v607, 0
        %v1052 = vsel %vm359, %v1047, 0
        %1054 = vmatprep.subr.bf16.mxu0 0
        %1055 = vmatpush1.bf16.xpose.msra.mxu0 %v1052
        %1056 = vmatprep.subr.bf16.mxu0 0
        %1057 = vmatpush1.bf16.xpose.msra.mxu0 0
        %1058 = vmatprep.subr.bf16.mxu0 0
        %1059 = vmatpush1.bf16.xpose.msra.mxu0 0
        %1060 = vmatprep.subr.bf16.mxu0 0
        %1061 = vmatpush1.bf16.xpose.msra.mxu0 0
        %1062 = vmatprep.subr.bf16.mxu0 0
        %1063 = vmatpush1.bf16.xpose.msra.mxu0 0
        %1064 = vmatprep.subr.bf16.mxu0 0
        %1065 = vmatpush1.bf16.xpose.msra.mxu0 0
        %1066 = vmatprep.subr.bf16.mxu0 0
        %1067 = vmatpush1.bf16.xpose.msra.mxu0 0
        %1068 = vmatprep.subr.bf16.mxu0 0
        %1069 = vmatpush1.bf16.xpose.msra.mxu0 0
        %1070 = vmatprep.subr.bf16.mxu0 0
        %1071 = vmatpush1.bf16.xpose.msra.mxu0 0
        %1072 = vmatprep.subr.bf16.mxu0 0
        %1073 = vmatpush1.bf16.xpose.msra.mxu0 0
        %1074 = vmatprep.subr.bf16.mxu0 0
        %1075 = vmatpush1.bf16.xpose.msra.mxu0 0
        %1076 = vmatprep.subr.bf16.mxu0 0
        %1077 = vmatpush1.bf16.xpose.msra.mxu0 0
        %1078 = vmatprep.subr.bf16.mxu0 0
        %1079 = vmatpush1.bf16.xpose.msra.mxu0 0
        %1080 = vmatprep.subr.bf16.mxu0 0
        %1081 = vmatpush1.bf16.xpose.msra.mxu0 0
        %1082 = vmatprep.subr.bf16.mxu0 0
        %1083 = vmatpush1.bf16.xpose.msra.mxu0 0
        %1084 = vmatprep.subr.bf16.mxu0 0
        %1085 = vmatpush1.bf16.xpose.msra.mxu0 0
        %1086 = vmatprep.mubr.bf16.mxu0 0
        %1087 = vmatmul.mubr.bf16.gmra.mrb[0].mxu0 %v1049
        %v1088 = vpop.f32.mrb[0].mxu0
        %v1089 = vadd.f32 0.0, %v1088
        %v1090 = vpop.f32.mrb[0].mxu0
        %v1091 = vpop.f32.mrb[0].mxu0
        %v1092 = vadd.f32 0.0, %v1091
        %v1093 = vpop.f32.mrb[0].mxu0
        %1094 = vdwg.mxu0
        %1096 = vrot.lane.b32.xlu0 %v664, 96
        %v1097 = vpop.permute.xlu0 %1096
        %v1099 = vsel %vm359, %v608, 0
        %v1102 = vsel %vm359, %v1097, 0
        %1104 = vmatprep.subr.bf16.mxu0 0
        %1105 = vmatpush1.bf16.xpose.msra.mxu0 %v1102
        %1106 = vmatprep.subr.bf16.mxu0 0
        %1107 = vmatpush1.bf16.xpose.msra.mxu0 0
        %1108 = vmatprep.subr.bf16.mxu0 0
        %1109 = vmatpush1.bf16.xpose.msra.mxu0 0
        %1110 = vmatprep.subr.bf16.mxu0 0
        %1111 = vmatpush1.bf16.xpose.msra.mxu0 0
        %1112 = vmatprep.subr.bf16.mxu0 0
        %1113 = vmatpush1.bf16.xpose.msra.mxu0 0
        %1114 = vmatprep.subr.bf16.mxu0 0
        %1115 = vmatpush1.bf16.xpose.msra.mxu0 0
        %1116 = vmatprep.subr.bf16.mxu0 0
        %1117 = vmatpush1.bf16.xpose.msra.mxu0 0
        %1118 = vmatprep.subr.bf16.mxu0 0
        %1119 = vmatpush1.bf16.xpose.msra.mxu0 0
        %1120 = vmatprep.subr.bf16.mxu0 0
        %1121 = vmatpush1.bf16.xpose.msra.mxu0 0
        %1122 = vmatprep.subr.bf16.mxu0 0
        %1123 = vmatpush1.bf16.xpose.msra.mxu0 0
        %1124 = vmatprep.subr.bf16.mxu0 0
        %1125 = vmatpush1.bf16.xpose.msra.mxu0 0
        %1126 = vmatprep.subr.bf16.mxu0 0
        %1127 = vmatpush1.bf16.xpose.msra.mxu0 0
        %1128 = vmatprep.subr.bf16.mxu0 0
        %1129 = vmatpush1.bf16.xpose.msra.mxu0 0
        %1130 = vmatprep.subr.bf16.mxu0 0
        %1131 = vmatpush1.bf16.xpose.msra.mxu0 0
        %1132 = vmatprep.subr.bf16.mxu0 0
        %1133 = vmatpush1.bf16.xpose.msra.mxu0 0
        %1134 = vmatprep.subr.bf16.mxu0 0
        %1135 = vmatpush1.bf16.xpose.msra.mxu0 0
        %1136 = vmatprep.mubr.bf16.mxu0 0
        %1137 = vmatmul.mubr.bf16.gmra.mrb[0].mxu0 %v1099
        %v1138 = vpop.f32.mrb[0].mxu0
        %v1139 = vadd.f32 0.0, %v1138
        %v1140 = vpop.f32.mrb[0].mxu0
        %v1141 = vpop.f32.mrb[0].mxu0
        %v1142 = vadd.f32 0.0, %v1141
        %v1143 = vpop.f32.mrb[0].mxu0
        %1144 = vdwg.mxu0
        %1146 = vrot.lane.b32.xlu0 %v665, 96
        %v1147 = vpop.permute.xlu0 %1146
        %v1149 = vsel %vm359, %v609, 0
        %v1152 = vsel %vm359, %v1147, 0
        %1154 = vmatprep.subr.bf16.mxu0 0
        %1155 = vmatpush1.bf16.xpose.msra.mxu0 %v1152
        %1156 = vmatprep.subr.bf16.mxu0 0
        %1157 = vmatpush1.bf16.xpose.msra.mxu0 0
        %1158 = vmatprep.subr.bf16.mxu0 0
        %1159 = vmatpush1.bf16.xpose.msra.mxu0 0
        %1160 = vmatprep.subr.bf16.mxu0 0
        %1161 = vmatpush1.bf16.xpose.msra.mxu0 0
        %1162 = vmatprep.subr.bf16.mxu0 0
        %1163 = vmatpush1.bf16.xpose.msra.mxu0 0
        %1164 = vmatprep.subr.bf16.mxu0 0
        %1165 = vmatpush1.bf16.xpose.msra.mxu0 0
        %1166 = vmatprep.subr.bf16.mxu0 0
        %1167 = vmatpush1.bf16.xpose.msra.mxu0 0
        %1168 = vmatprep.subr.bf16.mxu0 0
        %1169 = vmatpush1.bf16.xpose.msra.mxu0 0
        %1170 = vmatprep.subr.bf16.mxu0 0
        %1171 = vmatpush1.bf16.xpose.msra.mxu0 0
        %1172 = vmatprep.subr.bf16.mxu0 0
        %1173 = vmatpush1.bf16.xpose.msra.mxu0 0
        %1174 = vmatprep.subr.bf16.mxu0 0
        %1175 = vmatpush1.bf16.xpose.msra.mxu0 0
        %1176 = vmatprep.subr.bf16.mxu0 0
        %1177 = vmatpush1.bf16.xpose.msra.mxu0 0
        %1178 = vmatprep.subr.bf16.mxu0 0
        %1179 = vmatpush1.bf16.xpose.msra.mxu0 0
        %1180 = vmatprep.subr.bf16.mxu0 0
        %1181 = vmatpush1.bf16.xpose.msra.mxu0 0
        %1182 = vmatprep.subr.bf16.mxu0 0
        %1183 = vmatpush1.bf16.xpose.msra.mxu0 0
        %1184 = vmatprep.subr.bf16.mxu0 0
        %1185 = vmatpush1.bf16.xpose.msra.mxu0 0
        %1186 = vmatprep.mubr.bf16.mxu0 0
        %1187 = vmatmul.mubr.bf16.gmra.mrb[0].mxu0 %v1149
        %v1188 = vpop.f32.mrb[0].mxu0
        %v1189 = vadd.f32 0.0, %v1188
        %v1190 = vpop.f32.mrb[0].mxu0
        %v1191 = vpop.f32.mrb[0].mxu0
        %v1192 = vadd.f32 0.0, %v1191
        %v1193 = vpop.f32.mrb[0].mxu0
        %1194 = vdwg.mxu0
        %1196 = vrot.lane.b32.xlu0 %v666, 96
        %v1197 = vpop.permute.xlu0 %1196
        %v1199 = vsel %vm359, %v610, 0
        %v1202 = vsel %vm359, %v1197, 0
        %1204 = vmatprep.subr.bf16.mxu0 0
        %1205 = vmatpush1.bf16.xpose.msra.mxu0 %v1202
        %1206 = vmatprep.subr.bf16.mxu0 0
        %1207 = vmatpush1.bf16.xpose.msra.mxu0 0
        %1208 = vmatprep.subr.bf16.mxu0 0
        %1209 = vmatpush1.bf16.xpose.msra.mxu0 0
        %1210 = vmatprep.subr.bf16.mxu0 0
        %1211 = vmatpush1.bf16.xpose.msra.mxu0 0
        %1212 = vmatprep.subr.bf16.mxu0 0
        %1213 = vmatpush1.bf16.xpose.msra.mxu0 0
        %1214 = vmatprep.subr.bf16.mxu0 0
        %1215 = vmatpush1.bf16.xpose.msra.mxu0 0
        %1216 = vmatprep.subr.bf16.mxu0 0
        %1217 = vmatpush1.bf16.xpose.msra.mxu0 0
        %1218 = vmatprep.subr.bf16.mxu0 0
        %1219 = vmatpush1.bf16.xpose.msra.mxu0 0
        %1220 = vmatprep.subr.bf16.mxu0 0
        %1221 = vmatpush1.bf16.xpose.msra.mxu0 0
        %1222 = vmatprep.subr.bf16.mxu0 0
        %1223 = vmatpush1.bf16.xpose.msra.mxu0 0
        %1224 = vmatprep.subr.bf16.mxu0 0
        %1225 = vmatpush1.bf16.xpose.msra.mxu0 0
        %1226 = vmatprep.subr.bf16.mxu0 0
        %1227 = vmatpush1.bf16.xpose.msra.mxu0 0
        %1228 = vmatprep.subr.bf16.mxu0 0
        %1229 = vmatpush1.bf16.xpose.msra.mxu0 0
        %1230 = vmatprep.subr.bf16.mxu0 0
        %1231 = vmatpush1.bf16.xpose.msra.mxu0 0
        %1232 = vmatprep.subr.bf16.mxu0 0
        %1233 = vmatpush1.bf16.xpose.msra.mxu0 0
        %1234 = vmatprep.subr.bf16.mxu0 0
        %1235 = vmatpush1.bf16.xpose.msra.mxu0 0
        %1236 = vmatprep.mubr.bf16.mxu0 0
        %1237 = vmatmul.mubr.bf16.gmra.mrb[0].mxu0 %v1199
        %v1238 = vpop.f32.mrb[0].mxu0
        %v1239 = vadd.f32 0.0, %v1238
        %v1240 = vpop.f32.mrb[0].mxu0
        %v1241 = vpop.f32.mrb[0].mxu0
        %v1242 = vadd.f32 0.0, %v1241
        %v1243 = vpop.f32.mrb[0].mxu0
        %1244 = vdwg.mxu0
        %1246 = vrot.lane.b32.xlu0 %v667, 96
        %v1247 = vpop.permute.xlu0 %1246
        %v1249 = vsel %vm359, %v611, 0
        %v1252 = vsel %vm359, %v1247, 0
        %1254 = vmatprep.subr.bf16.mxu0 0
        %1255 = vmatpush1.bf16.xpose.msra.mxu0 %v1252
        %1256 = vmatprep.subr.bf16.mxu0 0
        %1257 = vmatpush1.bf16.xpose.msra.mxu0 0
        %1258 = vmatprep.subr.bf16.mxu0 0
        %1259 = vmatpush1.bf16.xpose.msra.mxu0 0
        %1260 = vmatprep.subr.bf16.mxu0 0
        %1261 = vmatpush1.bf16.xpose.msra.mxu0 0
        %1262 = vmatprep.subr.bf16.mxu0 0
        %1263 = vmatpush1.bf16.xpose.msra.mxu0 0
        %1264 = vmatprep.subr.bf16.mxu0 0
        %1265 = vmatpush1.bf16.xpose.msra.mxu0 0
        %1266 = vmatprep.subr.bf16.mxu0 0
        %1267 = vmatpush1.bf16.xpose.msra.mxu0 0
        %1268 = vmatprep.subr.bf16.mxu0 0
        %1269 = vmatpush1.bf16.xpose.msra.mxu0 0
        %1270 = vmatprep.subr.bf16.mxu0 0
        %1271 = vmatpush1.bf16.xpose.msra.mxu0 0
        %1272 = vmatprep.subr.bf16.mxu0 0
        %1273 = vmatpush1.bf16.xpose.msra.mxu0 0
        %1274 = vmatprep.subr.bf16.mxu0 0
        %1275 = vmatpush1.bf16.xpose.msra.mxu0 0
        %1276 = vmatprep.subr.bf16.mxu0 0
        %1277 = vmatpush1.bf16.xpose.msra.mxu0 0
        %1278 = vmatprep.subr.bf16.mxu0 0
        %1279 = vmatpush1.bf16.xpose.msra.mxu0 0
        %1280 = vmatprep.subr.bf16.mxu0 0
        %1281 = vmatpush1.bf16.xpose.msra.mxu0 0
        %1282 = vmatprep.subr.bf16.mxu0 0
        %1283 = vmatpush1.bf16.xpose.msra.mxu0 0
        %1284 = vmatprep.subr.bf16.mxu0 0
        %1285 = vmatpush1.bf16.xpose.msra.mxu0 0
        %1286 = vmatprep.mubr.bf16.mxu0 0
        %1287 = vmatmul.mubr.bf16.gmra.mrb[0].mxu0 %v1249
        %v1288 = vpop.f32.mrb[0].mxu0
        %v1289 = vadd.f32 0.0, %v1288
        %v1290 = vpop.f32.mrb[0].mxu0
        %v1291 = vpop.f32.mrb[0].mxu0
        %v1292 = vadd.f32 0.0, %v1291
        %v1293 = vpop.f32.mrb[0].mxu0
        %1294 = vdwg.mxu0
        %1296 = vrot.lane.b32.xlu0 %v668, 96
        %v1297 = vpop.permute.xlu0 %1296
        %v1299 = vsel %vm359, %v612, 0
        %v1302 = vsel %vm359, %v1297, 0
        %1304 = vmatprep.subr.bf16.mxu0 0
        %1305 = vmatpush1.bf16.xpose.msra.mxu0 %v1302
        %1306 = vmatprep.subr.bf16.mxu0 0
        %1307 = vmatpush1.bf16.xpose.msra.mxu0 0
        %1308 = vmatprep.subr.bf16.mxu0 0
        %1309 = vmatpush1.bf16.xpose.msra.mxu0 0
        %1310 = vmatprep.subr.bf16.mxu0 0
        %1311 = vmatpush1.bf16.xpose.msra.mxu0 0
        %1312 = vmatprep.subr.bf16.mxu0 0
        %1313 = vmatpush1.bf16.xpose.msra.mxu0 0
        %1314 = vmatprep.subr.bf16.mxu0 0
        %1315 = vmatpush1.bf16.xpose.msra.mxu0 0
        %1316 = vmatprep.subr.bf16.mxu0 0
        %1317 = vmatpush1.bf16.xpose.msra.mxu0 0
        %1318 = vmatprep.subr.bf16.mxu0 0
        %1319 = vmatpush1.bf16.xpose.msra.mxu0 0
        %1320 = vmatprep.subr.bf16.mxu0 0
        %1321 = vmatpush1.bf16.xpose.msra.mxu0 0
        %1322 = vmatprep.subr.bf16.mxu0 0
        %1323 = vmatpush1.bf16.xpose.msra.mxu0 0
        %1324 = vmatprep.subr.bf16.mxu0 0
        %1325 = vmatpush1.bf16.xpose.msra.mxu0 0
        %1326 = vmatprep.subr.bf16.mxu0 0
        %1327 = vmatpush1.bf16.xpose.msra.mxu0 0
        %1328 = vmatprep.subr.bf16.mxu0 0
        %1329 = vmatpush1.bf16.xpose.msra.mxu0 0
        %1330 = vmatprep.subr.bf16.mxu0 0
        %1331 = vmatpush1.bf16.xpose.msra.mxu0 0
        %1332 = vmatprep.subr.bf16.mxu0 0
        %1333 = vmatpush1.bf16.xpose.msra.mxu0 0
        %1334 = vmatprep.subr.bf16.mxu0 0
        %1335 = vmatpush1.bf16.xpose.msra.mxu0 0
        %1336 = vmatprep.mubr.bf16.mxu0 0
        %1337 = vmatmul.mubr.bf16.gmra.mrb[0].mxu0 %v1299
        %v1338 = vpop.f32.mrb[0].mxu0
        %v1339 = vadd.f32 0.0, %v1338
        %v1340 = vpop.f32.mrb[0].mxu0
        %v1341 = vpop.f32.mrb[0].mxu0
        %v1342 = vadd.f32 0.0, %v1341
        %v1343 = vpop.f32.mrb[0].mxu0
        %1344 = vdwg.mxu0
        %1346 = vrot.lane.b32.xlu0 %v669, 96
        %v1347 = vpop.permute.xlu0 %1346
        %v1349 = vsel %vm359, %v613, 0
        %v1352 = vsel %vm359, %v1347, 0
        %1354 = vmatprep.subr.bf16.mxu0 0
        %1355 = vmatpush1.bf16.xpose.msra.mxu0 %v1352
        %1356 = vmatprep.subr.bf16.mxu0 0
        %1357 = vmatpush1.bf16.xpose.msra.mxu0 0
        %1358 = vmatprep.subr.bf16.mxu0 0
        %1359 = vmatpush1.bf16.xpose.msra.mxu0 0
        %1360 = vmatprep.subr.bf16.mxu0 0
        %1361 = vmatpush1.bf16.xpose.msra.mxu0 0
        %1362 = vmatprep.subr.bf16.mxu0 0
        %1363 = vmatpush1.bf16.xpose.msra.mxu0 0
        %1364 = vmatprep.subr.bf16.mxu0 0
        %1365 = vmatpush1.bf16.xpose.msra.mxu0 0
        %1366 = vmatprep.subr.bf16.mxu0 0
        %1367 = vmatpush1.bf16.xpose.msra.mxu0 0
        %1368 = vmatprep.subr.bf16.mxu0 0
        %1369 = vmatpush1.bf16.xpose.msra.mxu0 0
        %1370 = vmatprep.subr.bf16.mxu0 0
        %1371 = vmatpush1.bf16.xpose.msra.mxu0 0
        %1372 = vmatprep.subr.bf16.mxu0 0
        %1373 = vmatpush1.bf16.xpose.msra.mxu0 0
        %1374 = vmatprep.subr.bf16.mxu0 0
        %1375 = vmatpush1.bf16.xpose.msra.mxu0 0
        %1376 = vmatprep.subr.bf16.mxu0 0
        %1377 = vmatpush1.bf16.xpose.msra.mxu0 0
        %1378 = vmatprep.subr.bf16.mxu0 0
        %1379 = vmatpush1.bf16.xpose.msra.mxu0 0
        %1380 = vmatprep.subr.bf16.mxu0 0
        %1381 = vmatpush1.bf16.xpose.msra.mxu0 0
        %1382 = vmatprep.subr.bf16.mxu0 0
        %1383 = vmatpush1.bf16.xpose.msra.mxu0 0
        %1384 = vmatprep.subr.bf16.mxu0 0
        %1385 = vmatpush1.bf16.xpose.msra.mxu0 0
        %1386 = vmatprep.mubr.bf16.mxu0 0
        %1387 = vmatmul.mubr.bf16.gmra.mrb[0].mxu0 %v1349
        %v1388 = vpop.f32.mrb[0].mxu0
        %v1389 = vadd.f32 0.0, %v1388
        %v1390 = vpop.f32.mrb[0].mxu0
        %v1391 = vpop.f32.mrb[0].mxu0
        %v1392 = vadd.f32 0.0, %v1391
        %v1393 = vpop.f32.mrb[0].mxu0
        %1394 = vdwg.mxu0
        %1396 = vrot.lane.b32.xlu0 %v670, 96
        %v1397 = vpop.permute.xlu0 %1396
        %v1399 = vsel %vm359, %v614, 0
        %v1402 = vsel %vm359, %v1397, 0
        %1404 = vmatprep.subr.bf16.mxu0 0
        %1405 = vmatpush1.bf16.xpose.msra.mxu0 %v1402
        %1406 = vmatprep.subr.bf16.mxu0 0
        %1407 = vmatpush1.bf16.xpose.msra.mxu0 0
        %1408 = vmatprep.subr.bf16.mxu0 0
        %1409 = vmatpush1.bf16.xpose.msra.mxu0 0
        %1410 = vmatprep.subr.bf16.mxu0 0
        %1411 = vmatpush1.bf16.xpose.msra.mxu0 0
        %1412 = vmatprep.subr.bf16.mxu0 0
        %1413 = vmatpush1.bf16.xpose.msra.mxu0 0
        %1414 = vmatprep.subr.bf16.mxu0 0
        %1415 = vmatpush1.bf16.xpose.msra.mxu0 0
        %1416 = vmatprep.subr.bf16.mxu0 0
        %1417 = vmatpush1.bf16.xpose.msra.mxu0 0
        %1418 = vmatprep.subr.bf16.mxu0 0
        %1419 = vmatpush1.bf16.xpose.msra.mxu0 0
        %1420 = vmatprep.subr.bf16.mxu0 0
        %1421 = vmatpush1.bf16.xpose.msra.mxu0 0
        %1422 = vmatprep.subr.bf16.mxu0 0
        %1423 = vmatpush1.bf16.xpose.msra.mxu0 0
        %1424 = vmatprep.subr.bf16.mxu0 0
        %1425 = vmatpush1.bf16.xpose.msra.mxu0 0
        %1426 = vmatprep.subr.bf16.mxu0 0
        %1427 = vmatpush1.bf16.xpose.msra.mxu0 0
        %1428 = vmatprep.subr.bf16.mxu0 0
        %1429 = vmatpush1.bf16.xpose.msra.mxu0 0
        %1430 = vmatprep.subr.bf16.mxu0 0
        %1431 = vmatpush1.bf16.xpose.msra.mxu0 0
        %1432 = vmatprep.subr.bf16.mxu0 0
        %1433 = vmatpush1.bf16.xpose.msra.mxu0 0
        %1434 = vmatprep.subr.bf16.mxu0 0
        %1435 = vmatpush1.bf16.xpose.msra.mxu0 0
        %1436 = vmatprep.mubr.bf16.mxu0 0
        %1437 = vmatmul.mubr.bf16.gmra.mrb[0].mxu0 %v1399
        %v1438 = vpop.f32.mrb[0].mxu0
        %v1439 = vadd.f32 0.0, %v1438
        %v1440 = vpop.f32.mrb[0].mxu0
        %v1441 = vpop.f32.mrb[0].mxu0
        %v1442 = vadd.f32 0.0, %v1441
        %v1443 = vpop.f32.mrb[0].mxu0
        %1444 = vdwg.mxu0
        %1446 = vrot.lane.b32.xlu0 %v671, 96
        %v1447 = vpop.permute.xlu0 %1446
        %v1449 = vsel %vm359, %v615, 0
        %v1452 = vsel %vm359, %v1447, 0
        %1454 = vmatprep.subr.bf16.mxu0 0
        %1455 = vmatpush1.bf16.xpose.msra.mxu0 %v1452
        %1456 = vmatprep.subr.bf16.mxu0 0
        %1457 = vmatpush1.bf16.xpose.msra.mxu0 0
        %1458 = vmatprep.subr.bf16.mxu0 0
        %1459 = vmatpush1.bf16.xpose.msra.mxu0 0
        %1460 = vmatprep.subr.bf16.mxu0 0
        %1461 = vmatpush1.bf16.xpose.msra.mxu0 0
        %1462 = vmatprep.subr.bf16.mxu0 0
        %1463 = vmatpush1.bf16.xpose.msra.mxu0 0
        %1464 = vmatprep.subr.bf16.mxu0 0
        %1465 = vmatpush1.bf16.xpose.msra.mxu0 0
        %1466 = vmatprep.subr.bf16.mxu0 0
        %1467 = vmatpush1.bf16.xpose.msra.mxu0 0
        %1468 = vmatprep.subr.bf16.mxu0 0
        %1469 = vmatpush1.bf16.xpose.msra.mxu0 0
        %1470 = vmatprep.subr.bf16.mxu0 0
        %1471 = vmatpush1.bf16.xpose.msra.mxu0 0
        %1472 = vmatprep.subr.bf16.mxu0 0
        %1473 = vmatpush1.bf16.xpose.msra.mxu0 0
        %1474 = vmatprep.subr.bf16.mxu0 0
        %1475 = vmatpush1.bf16.xpose.msra.mxu0 0
        %1476 = vmatprep.subr.bf16.mxu0 0
        %1477 = vmatpush1.bf16.xpose.msra.mxu0 0
        %1478 = vmatprep.subr.bf16.mxu0 0
        %1479 = vmatpush1.bf16.xpose.msra.mxu0 0
        %1480 = vmatprep.subr.bf16.mxu0 0
        %1481 = vmatpush1.bf16.xpose.msra.mxu0 0
        %1482 = vmatprep.subr.bf16.mxu0 0
        %1483 = vmatpush1.bf16.xpose.msra.mxu0 0
        %1484 = vmatprep.subr.bf16.mxu0 0
        %1485 = vmatpush1.bf16.xpose.msra.mxu0 0
        %1486 = vmatprep.mubr.bf16.mxu0 0
        %1487 = vmatmul.mubr.bf16.gmra.mrb[0].mxu0 %v1449
        %v1488 = vpop.f32.mrb[0].mxu0
        %v1489 = vadd.f32 0.0, %v1488
        %v1490 = vpop.f32.mrb[0].mxu0
        %v1491 = vpop.f32.mrb[0].mxu0
        %v1492 = vadd.f32 0.0, %v1491
        %v1493 = vpop.f32.mrb[0].mxu0
        %1494 = vdwg.mxu0
        %1496 = vrot.lane.b32.xlu0 %v672, 96
        %v1497 = vpop.permute.xlu0 %1496
        %v1499 = vsel %vm359, %v616, 0
        %v1502 = vsel %vm359, %v1497, 0
        %1504 = vmatprep.subr.bf16.mxu0 0
        %1505 = vmatpush1.bf16.xpose.msra.mxu0 %v1502
        %1506 = vmatprep.subr.bf16.mxu0 0
        %1507 = vmatpush1.bf16.xpose.msra.mxu0 0
        %1508 = vmatprep.subr.bf16.mxu0 0
        %1509 = vmatpush1.bf16.xpose.msra.mxu0 0
        %1510 = vmatprep.subr.bf16.mxu0 0
        %1511 = vmatpush1.bf16.xpose.msra.mxu0 0
        %1512 = vmatprep.subr.bf16.mxu0 0
        %1513 = vmatpush1.bf16.xpose.msra.mxu0 0
        %1514 = vmatprep.subr.bf16.mxu0 0
        %1515 = vmatpush1.bf16.xpose.msra.mxu0 0
        %1516 = vmatprep.subr.bf16.mxu0 0
        %1517 = vmatpush1.bf16.xpose.msra.mxu0 0
        %1518 = vmatprep.subr.bf16.mxu0 0
        %1519 = vmatpush1.bf16.xpose.msra.mxu0 0
        %1520 = vmatprep.subr.bf16.mxu0 0
        %1521 = vmatpush1.bf16.xpose.msra.mxu0 0
        %1522 = vmatprep.subr.bf16.mxu0 0
        %1523 = vmatpush1.bf16.xpose.msra.mxu0 0
        %1524 = vmatprep.subr.bf16.mxu0 0
        %1525 = vmatpush1.bf16.xpose.msra.mxu0 0
        %1526 = vmatprep.subr.bf16.mxu0 0
        %1527 = vmatpush1.bf16.xpose.msra.mxu0 0
        %1528 = vmatprep.subr.bf16.mxu0 0
        %1529 = vmatpush1.bf16.xpose.msra.mxu0 0
        %1530 = vmatprep.subr.bf16.mxu0 0
        %1531 = vmatpush1.bf16.xpose.msra.mxu0 0
        %1532 = vmatprep.subr.bf16.mxu0 0
        %1533 = vmatpush1.bf16.xpose.msra.mxu0 0
        %1534 = vmatprep.subr.bf16.mxu0 0
        %1535 = vmatpush1.bf16.xpose.msra.mxu0 0
        %1536 = vmatprep.mubr.bf16.mxu0 0
        %1537 = vmatmul.mubr.bf16.gmra.mrb[0].mxu0 %v1499
        %v1538 = vpop.f32.mrb[0].mxu0
        %v1539 = vadd.f32 0.0, %v1538
        %v1540 = vpop.f32.mrb[0].mxu0
        %v1541 = vpop.f32.mrb[0].mxu0
        %v1542 = vadd.f32 0.0, %v1541
        %v1543 = vpop.f32.mrb[0].mxu0
        %1544 = vdwg.mxu0
        %1546 = vrot.lane.b32.xlu0 %v673, 96
        %v1547 = vpop.permute.xlu0 %1546
        %v1549 = vsel %vm359, %v617, 0
        %v1552 = vsel %vm359, %v1547, 0
        %1554 = vmatprep.subr.bf16.mxu0 0
        %1555 = vmatpush1.bf16.xpose.msra.mxu0 %v1552
        %1556 = vmatprep.subr.bf16.mxu0 0
        %1557 = vmatpush1.bf16.xpose.msra.mxu0 0
        %1558 = vmatprep.subr.bf16.mxu0 0
        %1559 = vmatpush1.bf16.xpose.msra.mxu0 0
        %1560 = vmatprep.subr.bf16.mxu0 0
        %1561 = vmatpush1.bf16.xpose.msra.mxu0 0
        %1562 = vmatprep.subr.bf16.mxu0 0
        %1563 = vmatpush1.bf16.xpose.msra.mxu0 0
        %1564 = vmatprep.subr.bf16.mxu0 0
        %1565 = vmatpush1.bf16.xpose.msra.mxu0 0
        %1566 = vmatprep.subr.bf16.mxu0 0
        %1567 = vmatpush1.bf16.xpose.msra.mxu0 0
        %1568 = vmatprep.subr.bf16.mxu0 0
        %1569 = vmatpush1.bf16.xpose.msra.mxu0 0
        %1570 = vmatprep.subr.bf16.mxu0 0
        %1571 = vmatpush1.bf16.xpose.msra.mxu0 0
        %1572 = vmatprep.subr.bf16.mxu0 0
        %1573 = vmatpush1.bf16.xpose.msra.mxu0 0
        %1574 = vmatprep.subr.bf16.mxu0 0
        %1575 = vmatpush1.bf16.xpose.msra.mxu0 0
        %1576 = vmatprep.subr.bf16.mxu0 0
        %1577 = vmatpush1.bf16.xpose.msra.mxu0 0
        %1578 = vmatprep.subr.bf16.mxu0 0
        %1579 = vmatpush1.bf16.xpose.msra.mxu0 0
        %1580 = vmatprep.subr.bf16.mxu0 0
        %1581 = vmatpush1.bf16.xpose.msra.mxu0 0
        %1582 = vmatprep.subr.bf16.mxu0 0
        %1583 = vmatpush1.bf16.xpose.msra.mxu0 0
        %1584 = vmatprep.subr.bf16.mxu0 0
        %1585 = vmatpush1.bf16.xpose.msra.mxu0 0
        %1586 = vmatprep.mubr.bf16.mxu0 0
        %1587 = vmatmul.mubr.bf16.gmra.mrb[0].mxu0 %v1549
        %v1588 = vpop.f32.mrb[0].mxu0
        %v1589 = vadd.f32 0.0, %v1588
        %v1590 = vpop.f32.mrb[0].mxu0
        %v1591 = vpop.f32.mrb[0].mxu0
        %v1592 = vadd.f32 0.0, %v1591
        %v1593 = vpop.f32.mrb[0].mxu0
        %1594 = vdwg.mxu0
        %1596 = vrot.lane.b32.xlu0 %v674, 96
        %v1597 = vpop.permute.xlu0 %1596
        %v1599 = vsel %vm359, %v618, 0
        %v1602 = vsel %vm359, %v1597, 0
        %1604 = vmatprep.subr.bf16.mxu0 0
        %1605 = vmatpush1.bf16.xpose.msra.mxu0 %v1602
        %1606 = vmatprep.subr.bf16.mxu0 0
        %1607 = vmatpush1.bf16.xpose.msra.mxu0 0
        %1608 = vmatprep.subr.bf16.mxu0 0
        %1609 = vmatpush1.bf16.xpose.msra.mxu0 0
        %1610 = vmatprep.subr.bf16.mxu0 0
        %1611 = vmatpush1.bf16.xpose.msra.mxu0 0
        %1612 = vmatprep.subr.bf16.mxu0 0
        %1613 = vmatpush1.bf16.xpose.msra.mxu0 0
        %1614 = vmatprep.subr.bf16.mxu0 0
        %1615 = vmatpush1.bf16.xpose.msra.mxu0 0
        %1616 = vmatprep.subr.bf16.mxu0 0
        %1617 = vmatpush1.bf16.xpose.msra.mxu0 0
        %1618 = vmatprep.subr.bf16.mxu0 0
        %1619 = vmatpush1.bf16.xpose.msra.mxu0 0
        %1620 = vmatprep.subr.bf16.mxu0 0
        %1621 = vmatpush1.bf16.xpose.msra.mxu0 0
        %1622 = vmatprep.subr.bf16.mxu0 0
        %1623 = vmatpush1.bf16.xpose.msra.mxu0 0
        %1624 = vmatprep.subr.bf16.mxu0 0
        %1625 = vmatpush1.bf16.xpose.msra.mxu0 0
        %1626 = vmatprep.subr.bf16.mxu0 0
        %1627 = vmatpush1.bf16.xpose.msra.mxu0 0
        %1628 = vmatprep.subr.bf16.mxu0 0
        %1629 = vmatpush1.bf16.xpose.msra.mxu0 0
        %1630 = vmatprep.subr.bf16.mxu0 0
        %1631 = vmatpush1.bf16.xpose.msra.mxu0 0
        %1632 = vmatprep.subr.bf16.mxu0 0
        %1633 = vmatpush1.bf16.xpose.msra.mxu0 0
        %1634 = vmatprep.subr.bf16.mxu0 0
        %1635 = vmatpush1.bf16.xpose.msra.mxu0 0
        %1636 = vmatprep.mubr.bf16.mxu0 0
        %1637 = vmatmul.mubr.bf16.gmra.mrb[0].mxu0 %v1599
        %v1638 = vpop.f32.mrb[0].mxu0
        %v1639 = vadd.f32 0.0, %v1638
        %v1640 = vpop.f32.mrb[0].mxu0
        %v1641 = vpop.f32.mrb[0].mxu0
        %v1642 = vadd.f32 0.0, %v1641
        %v1643 = vpop.f32.mrb[0].mxu0
        %1644 = vdwg.mxu0
        %1646 = vrot.lane.b32.xlu0 %v675, 96
        %v1647 = vpop.permute.xlu0 %1646
        %v1649 = vsel %vm359, %v619, 0
        %v1652 = vsel %vm359, %v1647, 0
        %1654 = vmatprep.subr.bf16.mxu0 0
        %1655 = vmatpush1.bf16.xpose.msra.mxu0 %v1652
        %1656 = vmatprep.subr.bf16.mxu0 0
        %1657 = vmatpush1.bf16.xpose.msra.mxu0 0
        %1658 = vmatprep.subr.bf16.mxu0 0
        %1659 = vmatpush1.bf16.xpose.msra.mxu0 0
        %1660 = vmatprep.subr.bf16.mxu0 0
        %1661 = vmatpush1.bf16.xpose.msra.mxu0 0
        %1662 = vmatprep.subr.bf16.mxu0 0
        %1663 = vmatpush1.bf16.xpose.msra.mxu0 0
        %1664 = vmatprep.subr.bf16.mxu0 0
        %1665 = vmatpush1.bf16.xpose.msra.mxu0 0
        %1666 = vmatprep.subr.bf16.mxu0 0
        %1667 = vmatpush1.bf16.xpose.msra.mxu0 0
        %1668 = vmatprep.subr.bf16.mxu0 0
        %1669 = vmatpush1.bf16.xpose.msra.mxu0 0
        %1670 = vmatprep.subr.bf16.mxu0 0
        %1671 = vmatpush1.bf16.xpose.msra.mxu0 0
        %1672 = vmatprep.subr.bf16.mxu0 0
        %1673 = vmatpush1.bf16.xpose.msra.mxu0 0
        %1674 = vmatprep.subr.bf16.mxu0 0
        %1675 = vmatpush1.bf16.xpose.msra.mxu0 0
        %1676 = vmatprep.subr.bf16.mxu0 0
        %1677 = vmatpush1.bf16.xpose.msra.mxu0 0
        %1678 = vmatprep.subr.bf16.mxu0 0
        %1679 = vmatpush1.bf16.xpose.msra.mxu0 0
        %1680 = vmatprep.subr.bf16.mxu0 0
        %1681 = vmatpush1.bf16.xpose.msra.mxu0 0
        %1682 = vmatprep.subr.bf16.mxu0 0
        %1683 = vmatpush1.bf16.xpose.msra.mxu0 0
        %1684 = vmatprep.subr.bf16.mxu0 0
        %1685 = vmatpush1.bf16.xpose.msra.mxu0 0
        %1686 = vmatprep.mubr.bf16.mxu0 0
        %1687 = vmatmul.mubr.bf16.gmra.mrb[0].mxu0 %v1649
        %v1688 = vpop.f32.mrb[0].mxu0
        %v1689 = vadd.f32 0.0, %v1688
        %v1690 = vpop.f32.mrb[0].mxu0
        %v1691 = vpop.f32.mrb[0].mxu0
        %v1692 = vadd.f32 0.0, %v1691
        %v1693 = vpop.f32.mrb[0].mxu0
        %1694 = vdwg.mxu0
        %1696 = vrot.lane.b32.xlu0 %v676, 96
        %v1697 = vpop.permute.xlu0 %1696
        %v1699 = vsel %vm359, %v620, 0
        %v1702 = vsel %vm359, %v1697, 0
        %1704 = vmatprep.subr.bf16.mxu0 0
        %1705 = vmatpush1.bf16.xpose.msra.mxu0 %v1702
        %1706 = vmatprep.subr.bf16.mxu0 0
        %1707 = vmatpush1.bf16.xpose.msra.mxu0 0
        %1708 = vmatprep.subr.bf16.mxu0 0
        %1709 = vmatpush1.bf16.xpose.msra.mxu0 0
        %1710 = vmatprep.subr.bf16.mxu0 0
        %1711 = vmatpush1.bf16.xpose.msra.mxu0 0
        %1712 = vmatprep.subr.bf16.mxu0 0
        %1713 = vmatpush1.bf16.xpose.msra.mxu0 0
        %1714 = vmatprep.subr.bf16.mxu0 0
        %1715 = vmatpush1.bf16.xpose.msra.mxu0 0
        %1716 = vmatprep.subr.bf16.mxu0 0
        %1717 = vmatpush1.bf16.xpose.msra.mxu0 0
        %1718 = vmatprep.subr.bf16.mxu0 0
        %1719 = vmatpush1.bf16.xpose.msra.mxu0 0
        %1720 = vmatprep.subr.bf16.mxu0 0
        %1721 = vmatpush1.bf16.xpose.msra.mxu0 0
        %1722 = vmatprep.subr.bf16.mxu0 0
        %1723 = vmatpush1.bf16.xpose.msra.mxu0 0
        %1724 = vmatprep.subr.bf16.mxu0 0
        %1725 = vmatpush1.bf16.xpose.msra.mxu0 0
        %1726 = vmatprep.subr.bf16.mxu0 0
        %1727 = vmatpush1.bf16.xpose.msra.mxu0 0
        %1728 = vmatprep.subr.bf16.mxu0 0
        %1729 = vmatpush1.bf16.xpose.msra.mxu0 0
        %1730 = vmatprep.subr.bf16.mxu0 0
        %1731 = vmatpush1.bf16.xpose.msra.mxu0 0
        %1732 = vmatprep.subr.bf16.mxu0 0
        %1733 = vmatpush1.bf16.xpose.msra.mxu0 0
        %1734 = vmatprep.subr.bf16.mxu0 0
        %1735 = vmatpush1.bf16.xpose.msra.mxu0 0
        %1736 = vmatprep.mubr.bf16.mxu0 0
        %1737 = vmatmul.mubr.bf16.gmra.mrb[0].mxu0 %v1699
        %v1738 = vpop.f32.mrb[0].mxu0
        %v1739 = vadd.f32 0.0, %v1738
        %v1740 = vpop.f32.mrb[0].mxu0
        %v1741 = vpop.f32.mrb[0].mxu0
        %v1742 = vadd.f32 0.0, %v1741
        %v1743 = vpop.f32.mrb[0].mxu0
        %1744 = vdwg.mxu0
        %1746 = vrot.lane.b32.xlu0 %v677, 96
        %v1747 = vpop.permute.xlu0 %1746
        %v1749 = vsel %vm359, %v621, 0
        %v1752 = vsel %vm359, %v1747, 0
        %1754 = vmatprep.subr.bf16.mxu0 0
        %1755 = vmatpush1.bf16.xpose.msra.mxu0 %v1752
        %1756 = vmatprep.subr.bf16.mxu0 0
        %1757 = vmatpush1.bf16.xpose.msra.mxu0 0
        %1758 = vmatprep.subr.bf16.mxu0 0
        %1759 = vmatpush1.bf16.xpose.msra.mxu0 0
        %1760 = vmatprep.subr.bf16.mxu0 0
        %1761 = vmatpush1.bf16.xpose.msra.mxu0 0
        %1762 = vmatprep.subr.bf16.mxu0 0
        %1763 = vmatpush1.bf16.xpose.msra.mxu0 0
        %1764 = vmatprep.subr.bf16.mxu0 0
        %1765 = vmatpush1.bf16.xpose.msra.mxu0 0
        %1766 = vmatprep.subr.bf16.mxu0 0
        %1767 = vmatpush1.bf16.xpose.msra.mxu0 0
        %1768 = vmatprep.subr.bf16.mxu0 0
        %1769 = vmatpush1.bf16.xpose.msra.mxu0 0
        %1770 = vmatprep.subr.bf16.mxu0 0
        %1771 = vmatpush1.bf16.xpose.msra.mxu0 0
        %1772 = vmatprep.subr.bf16.mxu0 0
        %1773 = vmatpush1.bf16.xpose.msra.mxu0 0
        %1774 = vmatprep.subr.bf16.mxu0 0
        %1775 = vmatpush1.bf16.xpose.msra.mxu0 0
        %1776 = vmatprep.subr.bf16.mxu0 0
        %1777 = vmatpush1.bf16.xpose.msra.mxu0 0
        %1778 = vmatprep.subr.bf16.mxu0 0
        %1779 = vmatpush1.bf16.xpose.msra.mxu0 0
        %1780 = vmatprep.subr.bf16.mxu0 0
        %1781 = vmatpush1.bf16.xpose.msra.mxu0 0
        %1782 = vmatprep.subr.bf16.mxu0 0
        %1783 = vmatpush1.bf16.xpose.msra.mxu0 0
        %1784 = vmatprep.subr.bf16.mxu0 0
        %1785 = vmatpush1.bf16.xpose.msra.mxu0 0
        %1786 = vmatprep.mubr.bf16.mxu0 0
        %1787 = vmatmul.mubr.bf16.gmra.mrb[0].mxu0 %v1749
        %v1788 = vpop.f32.mrb[0].mxu0
        %v1789 = vadd.f32 0.0, %v1788
        %v1790 = vpop.f32.mrb[0].mxu0
        %v1791 = vpop.f32.mrb[0].mxu0
        %v1792 = vadd.f32 0.0, %v1791
        %v1793 = vpop.f32.mrb[0].mxu0
        %1794 = vdwg.mxu0
        %1796 = vrot.lane.b32.xlu0 %v678, 96
        %v1797 = vpop.permute.xlu0 %1796
        %v1799 = vsel %vm359, %v622, 0
        %v1802 = vsel %vm359, %v1797, 0
        %1804 = vmatprep.subr.bf16.mxu0 0
        %1805 = vmatpush1.bf16.xpose.msra.mxu0 %v1802
        %1806 = vmatprep.subr.bf16.mxu0 0
        %1807 = vmatpush1.bf16.xpose.msra.mxu0 0
        %1808 = vmatprep.subr.bf16.mxu0 0
        %1809 = vmatpush1.bf16.xpose.msra.mxu0 0
        %1810 = vmatprep.subr.bf16.mxu0 0
        %1811 = vmatpush1.bf16.xpose.msra.mxu0 0
        %1812 = vmatprep.subr.bf16.mxu0 0
        %1813 = vmatpush1.bf16.xpose.msra.mxu0 0
        %1814 = vmatprep.subr.bf16.mxu0 0
        %1815 = vmatpush1.bf16.xpose.msra.mxu0 0
        %1816 = vmatprep.subr.bf16.mxu0 0
        %1817 = vmatpush1.bf16.xpose.msra.mxu0 0
        %1818 = vmatprep.subr.bf16.mxu0 0
        %1819 = vmatpush1.bf16.xpose.msra.mxu0 0
        %1820 = vmatprep.subr.bf16.mxu0 0
        %1821 = vmatpush1.bf16.xpose.msra.mxu0 0
        %1822 = vmatprep.subr.bf16.mxu0 0
        %1823 = vmatpush1.bf16.xpose.msra.mxu0 0
        %1824 = vmatprep.subr.bf16.mxu0 0
        %1825 = vmatpush1.bf16.xpose.msra.mxu0 0
        %1826 = vmatprep.subr.bf16.mxu0 0
        %1827 = vmatpush1.bf16.xpose.msra.mxu0 0
        %1828 = vmatprep.subr.bf16.mxu0 0
        %1829 = vmatpush1.bf16.xpose.msra.mxu0 0
        %1830 = vmatprep.subr.bf16.mxu0 0
        %1831 = vmatpush1.bf16.xpose.msra.mxu0 0
        %1832 = vmatprep.subr.bf16.mxu0 0
        %1833 = vmatpush1.bf16.xpose.msra.mxu0 0
        %1834 = vmatprep.subr.bf16.mxu0 0
        %1835 = vmatpush1.bf16.xpose.msra.mxu0 0
        %1836 = vmatprep.mubr.bf16.mxu0 0
        %1837 = vmatmul.mubr.bf16.gmra.mrb[0].mxu0 %v1799
        %v1838 = vpop.f32.mrb[0].mxu0
        %v1839 = vadd.f32 0.0, %v1838
        %v1840 = vpop.f32.mrb[0].mxu0
        %v1841 = vpop.f32.mrb[0].mxu0
        %v1842 = vadd.f32 0.0, %v1841
        %v1843 = vpop.f32.mrb[0].mxu0
        %1844 = vdwg.mxu0
        %1846 = vrot.lane.b32.xlu0 %v679, 96
        %v1847 = vpop.permute.xlu0 %1846
        %v1849 = vsel %vm359, %v623, 0
        %v1852 = vsel %vm359, %v1847, 0
        %1854 = vmatprep.subr.bf16.mxu0 0
        %1855 = vmatpush1.bf16.xpose.msra.mxu0 %v1852
        %1856 = vmatprep.subr.bf16.mxu0 0
        %1857 = vmatpush1.bf16.xpose.msra.mxu0 0
        %1858 = vmatprep.subr.bf16.mxu0 0
        %1859 = vmatpush1.bf16.xpose.msra.mxu0 0
        %1860 = vmatprep.subr.bf16.mxu0 0
        %1861 = vmatpush1.bf16.xpose.msra.mxu0 0
        %1862 = vmatprep.subr.bf16.mxu0 0
        %1863 = vmatpush1.bf16.xpose.msra.mxu0 0
        %1864 = vmatprep.subr.bf16.mxu0 0
        %1865 = vmatpush1.bf16.xpose.msra.mxu0 0
        %1866 = vmatprep.subr.bf16.mxu0 0
        %1867 = vmatpush1.bf16.xpose.msra.mxu0 0
        %1868 = vmatprep.subr.bf16.mxu0 0
        %1869 = vmatpush1.bf16.xpose.msra.mxu0 0
        %1870 = vmatprep.subr.bf16.mxu0 0
        %1871 = vmatpush1.bf16.xpose.msra.mxu0 0
        %1872 = vmatprep.subr.bf16.mxu0 0
        %1873 = vmatpush1.bf16.xpose.msra.mxu0 0
        %1874 = vmatprep.subr.bf16.mxu0 0
        %1875 = vmatpush1.bf16.xpose.msra.mxu0 0
        %1876 = vmatprep.subr.bf16.mxu0 0
        %1877 = vmatpush1.bf16.xpose.msra.mxu0 0
        %1878 = vmatprep.subr.bf16.mxu0 0
        %1879 = vmatpush1.bf16.xpose.msra.mxu0 0
        %1880 = vmatprep.subr.bf16.mxu0 0
        %1881 = vmatpush1.bf16.xpose.msra.mxu0 0
        %1882 = vmatprep.subr.bf16.mxu0 0
        %1883 = vmatpush1.bf16.xpose.msra.mxu0 0
        %1884 = vmatprep.subr.bf16.mxu0 0
        %1885 = vmatpush1.bf16.xpose.msra.mxu0 0
        %1886 = vmatprep.mubr.bf16.mxu0 0
        %1887 = vmatmul.mubr.bf16.gmra.mrb[0].mxu0 %v1849
        %v1888 = vpop.f32.mrb[0].mxu0
        %v1889 = vadd.f32 0.0, %v1888
        %v1890 = vpop.f32.mrb[0].mxu0
        %v1891 = vpop.f32.mrb[0].mxu0
        %v1892 = vadd.f32 0.0, %v1891
        %v1893 = vpop.f32.mrb[0].mxu0
        %1894 = vdwg.mxu0
        %1896 = vrot.lane.b32.xlu0 %v680, 96
        %v1897 = vpop.permute.xlu0 %1896
        %v1899 = vsel %vm359, %v624, 0
        %v1902 = vsel %vm359, %v1897, 0
        %1904 = vmatprep.subr.bf16.mxu0 0
        %1905 = vmatpush1.bf16.xpose.msra.mxu0 %v1902
        %1906 = vmatprep.subr.bf16.mxu0 0
        %1907 = vmatpush1.bf16.xpose.msra.mxu0 0
        %1908 = vmatprep.subr.bf16.mxu0 0
        %1909 = vmatpush1.bf16.xpose.msra.mxu0 0
        %1910 = vmatprep.subr.bf16.mxu0 0
        %1911 = vmatpush1.bf16.xpose.msra.mxu0 0
        %1912 = vmatprep.subr.bf16.mxu0 0
        %1913 = vmatpush1.bf16.xpose.msra.mxu0 0
        %1914 = vmatprep.subr.bf16.mxu0 0
        %1915 = vmatpush1.bf16.xpose.msra.mxu0 0
        %1916 = vmatprep.subr.bf16.mxu0 0
        %1917 = vmatpush1.bf16.xpose.msra.mxu0 0
        %1918 = vmatprep.subr.bf16.mxu0 0
        %1919 = vmatpush1.bf16.xpose.msra.mxu0 0
        %1920 = vmatprep.subr.bf16.mxu0 0
        %1921 = vmatpush1.bf16.xpose.msra.mxu0 0
        %1922 = vmatprep.subr.bf16.mxu0 0
        %1923 = vmatpush1.bf16.xpose.msra.mxu0 0
        %1924 = vmatprep.subr.bf16.mxu0 0
        %1925 = vmatpush1.bf16.xpose.msra.mxu0 0
        %1926 = vmatprep.subr.bf16.mxu0 0
        %1927 = vmatpush1.bf16.xpose.msra.mxu0 0
        %1928 = vmatprep.subr.bf16.mxu0 0
        %1929 = vmatpush1.bf16.xpose.msra.mxu0 0
        %1930 = vmatprep.subr.bf16.mxu0 0
        %1931 = vmatpush1.bf16.xpose.msra.mxu0 0
        %1932 = vmatprep.subr.bf16.mxu0 0
        %1933 = vmatpush1.bf16.xpose.msra.mxu0 0
        %1934 = vmatprep.subr.bf16.mxu0 0
        %1935 = vmatpush1.bf16.xpose.msra.mxu0 0
        %1936 = vmatprep.mubr.bf16.mxu0 0
        %1937 = vmatmul.mubr.bf16.gmra.mrb[0].mxu0 %v1899
        %v1938 = vpop.f32.mrb[0].mxu0
        %v1939 = vadd.f32 0.0, %v1938
        %v1940 = vpop.f32.mrb[0].mxu0
        %v1941 = vpop.f32.mrb[0].mxu0
        %v1942 = vadd.f32 0.0, %v1941
        %v1943 = vpop.f32.mrb[0].mxu0
        %1944 = vdwg.mxu0
        %1946 = vrot.lane.b32.xlu0 %v681, 96
        %v1947 = vpop.permute.xlu0 %1946
        %v1949 = vsel %vm359, %v625, 0
        %v1952 = vsel %vm359, %v1947, 0
        %1954 = vmatprep.subr.bf16.mxu0 0
        %1955 = vmatpush1.bf16.xpose.msra.mxu0 %v1952
        %1956 = vmatprep.subr.bf16.mxu0 0
        %1957 = vmatpush1.bf16.xpose.msra.mxu0 0
        %1958 = vmatprep.subr.bf16.mxu0 0
        %1959 = vmatpush1.bf16.xpose.msra.mxu0 0
        %1960 = vmatprep.subr.bf16.mxu0 0
        %1961 = vmatpush1.bf16.xpose.msra.mxu0 0
        %1962 = vmatprep.subr.bf16.mxu0 0
        %1963 = vmatpush1.bf16.xpose.msra.mxu0 0
        %1964 = vmatprep.subr.bf16.mxu0 0
        %1965 = vmatpush1.bf16.xpose.msra.mxu0 0
        %1966 = vmatprep.subr.bf16.mxu0 0
        %1967 = vmatpush1.bf16.xpose.msra.mxu0 0
        %1968 = vmatprep.subr.bf16.mxu0 0
        %1969 = vmatpush1.bf16.xpose.msra.mxu0 0
        %1970 = vmatprep.subr.bf16.mxu0 0
        %1971 = vmatpush1.bf16.xpose.msra.mxu0 0
        %1972 = vmatprep.subr.bf16.mxu0 0
        %1973 = vmatpush1.bf16.xpose.msra.mxu0 0
        %1974 = vmatprep.subr.bf16.mxu0 0
        %1975 = vmatpush1.bf16.xpose.msra.mxu0 0
        %1976 = vmatprep.subr.bf16.mxu0 0
        %1977 = vmatpush1.bf16.xpose.msra.mxu0 0
        %1978 = vmatprep.subr.bf16.mxu0 0
        %1979 = vmatpush1.bf16.xpose.msra.mxu0 0
        %1980 = vmatprep.subr.bf16.mxu0 0
        %1981 = vmatpush1.bf16.xpose.msra.mxu0 0
        %1982 = vmatprep.subr.bf16.mxu0 0
        %1983 = vmatpush1.bf16.xpose.msra.mxu0 0
        %1984 = vmatprep.subr.bf16.mxu0 0
        %1985 = vmatpush1.bf16.xpose.msra.mxu0 0
        %1986 = vmatprep.mubr.bf16.mxu0 0
        %1987 = vmatmul.mubr.bf16.gmra.mrb[0].mxu0 %v1949
        %v1988 = vpop.f32.mrb[0].mxu0
        %v1989 = vadd.f32 0.0, %v1988
        %v1990 = vpop.f32.mrb[0].mxu0
        %v1991 = vpop.f32.mrb[0].mxu0
        %v1992 = vadd.f32 0.0, %v1991
        %v1993 = vpop.f32.mrb[0].mxu0
        %1994 = vdwg.mxu0
        %1996 = vrot.lane.b32.xlu0 %v682, 96
        %v1997 = vpop.permute.xlu0 %1996
        %v1999 = vsel %vm359, %v626, 0
        %v2002 = vsel %vm359, %v1997, 0
        %2004 = vmatprep.subr.bf16.mxu0 0
        %2005 = vmatpush1.bf16.xpose.msra.mxu0 %v2002
        %2006 = vmatprep.subr.bf16.mxu0 0
        %2007 = vmatpush1.bf16.xpose.msra.mxu0 0
        %2008 = vmatprep.subr.bf16.mxu0 0
        %2009 = vmatpush1.bf16.xpose.msra.mxu0 0
        %2010 = vmatprep.subr.bf16.mxu0 0
        %2011 = vmatpush1.bf16.xpose.msra.mxu0 0
        %2012 = vmatprep.subr.bf16.mxu0 0
        %2013 = vmatpush1.bf16.xpose.msra.mxu0 0
        %2014 = vmatprep.subr.bf16.mxu0 0
        %2015 = vmatpush1.bf16.xpose.msra.mxu0 0
        %2016 = vmatprep.subr.bf16.mxu0 0
        %2017 = vmatpush1.bf16.xpose.msra.mxu0 0
        %2018 = vmatprep.subr.bf16.mxu0 0
        %2019 = vmatpush1.bf16.xpose.msra.mxu0 0
        %2020 = vmatprep.subr.bf16.mxu0 0
        %2021 = vmatpush1.bf16.xpose.msra.mxu0 0
        %2022 = vmatprep.subr.bf16.mxu0 0
        %2023 = vmatpush1.bf16.xpose.msra.mxu0 0
        %2024 = vmatprep.subr.bf16.mxu0 0
        %2025 = vmatpush1.bf16.xpose.msra.mxu0 0
        %2026 = vmatprep.subr.bf16.mxu0 0
        %2027 = vmatpush1.bf16.xpose.msra.mxu0 0
        %2028 = vmatprep.subr.bf16.mxu0 0
        %2029 = vmatpush1.bf16.xpose.msra.mxu0 0
        %2030 = vmatprep.subr.bf16.mxu0 0
        %2031 = vmatpush1.bf16.xpose.msra.mxu0 0
        %2032 = vmatprep.subr.bf16.mxu0 0
        %2033 = vmatpush1.bf16.xpose.msra.mxu0 0
        %2034 = vmatprep.subr.bf16.mxu0 0
        %2035 = vmatpush1.bf16.xpose.msra.mxu0 0
        %2036 = vmatprep.mubr.bf16.mxu0 0
        %2037 = vmatmul.mubr.bf16.gmra.mrb[0].mxu0 %v1999
        %v2038 = vpop.f32.mrb[0].mxu0
        %v2039 = vadd.f32 0.0, %v2038
        %v2040 = vpop.f32.mrb[0].mxu0
        %v2041 = vpop.f32.mrb[0].mxu0
        %v2042 = vadd.f32 0.0, %v2041
        %v2043 = vpop.f32.mrb[0].mxu0
        %2044 = vdwg.mxu0
        %2046 = vrot.lane.b32.xlu0 %v683, 96
        %v2047 = vpop.permute.xlu0 %2046
        %v2049 = vsel %vm359, %v627, 0
        %v2052 = vsel %vm359, %v2047, 0
        %2054 = vmatprep.subr.bf16.mxu0 0
        %2055 = vmatpush1.bf16.xpose.msra.mxu0 %v2052
        %2056 = vmatprep.subr.bf16.mxu0 0
        %2057 = vmatpush1.bf16.xpose.msra.mxu0 0
        %2058 = vmatprep.subr.bf16.mxu0 0
        %2059 = vmatpush1.bf16.xpose.msra.mxu0 0
        %2060 = vmatprep.subr.bf16.mxu0 0
        %2061 = vmatpush1.bf16.xpose.msra.mxu0 0
        %2062 = vmatprep.subr.bf16.mxu0 0
        %2063 = vmatpush1.bf16.xpose.msra.mxu0 0
        %2064 = vmatprep.subr.bf16.mxu0 0
        %2065 = vmatpush1.bf16.xpose.msra.mxu0 0
        %2066 = vmatprep.subr.bf16.mxu0 0
        %2067 = vmatpush1.bf16.xpose.msra.mxu0 0
        %2068 = vmatprep.subr.bf16.mxu0 0
        %2069 = vmatpush1.bf16.xpose.msra.mxu0 0
        %2070 = vmatprep.subr.bf16.mxu0 0
        %2071 = vmatpush1.bf16.xpose.msra.mxu0 0
        %2072 = vmatprep.subr.bf16.mxu0 0
        %2073 = vmatpush1.bf16.xpose.msra.mxu0 0
        %2074 = vmatprep.subr.bf16.mxu0 0
        %2075 = vmatpush1.bf16.xpose.msra.mxu0 0
        %2076 = vmatprep.subr.bf16.mxu0 0
        %2077 = vmatpush1.bf16.xpose.msra.mxu0 0
        %2078 = vmatprep.subr.bf16.mxu0 0
        %2079 = vmatpush1.bf16.xpose.msra.mxu0 0
        %2080 = vmatprep.subr.bf16.mxu0 0
        %2081 = vmatpush1.bf16.xpose.msra.mxu0 0
        %2082 = vmatprep.subr.bf16.mxu0 0
        %2083 = vmatpush1.bf16.xpose.msra.mxu0 0
        %2084 = vmatprep.subr.bf16.mxu0 0
        %2085 = vmatpush1.bf16.xpose.msra.mxu0 0
        %2086 = vmatprep.mubr.bf16.mxu0 0
        %2087 = vmatmul.mubr.bf16.gmra.mrb[0].mxu0 %v2049
        %v2088 = vpop.f32.mrb[0].mxu0
        %v2089 = vadd.f32 0.0, %v2088
        %v2090 = vpop.f32.mrb[0].mxu0
        %v2091 = vpop.f32.mrb[0].mxu0
        %v2092 = vadd.f32 0.0, %v2091
        %v2093 = vpop.f32.mrb[0].mxu0
        %2094 = vdwg.mxu0
        %2096 = vrot.lane.b32.xlu0 %v684, 96
        %v2097 = vpop.permute.xlu0 %2096
        %v2099 = vsel %vm359, %v628, 0
        %v2102 = vsel %vm359, %v2097, 0
        %2104 = vmatprep.subr.bf16.mxu0 0
        %2105 = vmatpush1.bf16.xpose.msra.mxu0 %v2102
        %2106 = vmatprep.subr.bf16.mxu0 0
        %2107 = vmatpush1.bf16.xpose.msra.mxu0 0
        %2108 = vmatprep.subr.bf16.mxu0 0
        %2109 = vmatpush1.bf16.xpose.msra.mxu0 0
        %2110 = vmatprep.subr.bf16.mxu0 0
        %2111 = vmatpush1.bf16.xpose.msra.mxu0 0
        %2112 = vmatprep.subr.bf16.mxu0 0
        %2113 = vmatpush1.bf16.xpose.msra.mxu0 0
        %2114 = vmatprep.subr.bf16.mxu0 0
        %2115 = vmatpush1.bf16.xpose.msra.mxu0 0
        %2116 = vmatprep.subr.bf16.mxu0 0
        %2117 = vmatpush1.bf16.xpose.msra.mxu0 0
        %2118 = vmatprep.subr.bf16.mxu0 0
        %2119 = vmatpush1.bf16.xpose.msra.mxu0 0
        %2120 = vmatprep.subr.bf16.mxu0 0
        %2121 = vmatpush1.bf16.xpose.msra.mxu0 0
        %2122 = vmatprep.subr.bf16.mxu0 0
        %2123 = vmatpush1.bf16.xpose.msra.mxu0 0
        %2124 = vmatprep.subr.bf16.mxu0 0
        %2125 = vmatpush1.bf16.xpose.msra.mxu0 0
        %2126 = vmatprep.subr.bf16.mxu0 0
        %2127 = vmatpush1.bf16.xpose.msra.mxu0 0
        %2128 = vmatprep.subr.bf16.mxu0 0
        %2129 = vmatpush1.bf16.xpose.msra.mxu0 0
        %2130 = vmatprep.subr.bf16.mxu0 0
        %2131 = vmatpush1.bf16.xpose.msra.mxu0 0
        %2132 = vmatprep.subr.bf16.mxu0 0
        %2133 = vmatpush1.bf16.xpose.msra.mxu0 0
        %2134 = vmatprep.subr.bf16.mxu0 0
        %2135 = vmatpush1.bf16.xpose.msra.mxu0 0
        %2136 = vmatprep.mubr.bf16.mxu0 0
        %2137 = vmatmul.mubr.bf16.gmra.mrb[0].mxu0 %v2099
        %v2138 = vpop.f32.mrb[0].mxu0
        %v2139 = vadd.f32 0.0, %v2138
        %v2140 = vpop.f32.mrb[0].mxu0
        %v2141 = vpop.f32.mrb[0].mxu0
        %v2142 = vadd.f32 0.0, %v2141
        %v2143 = vpop.f32.mrb[0].mxu0
        %2144 = vdwg.mxu0
        %2146 = vrot.lane.b32.xlu0 %v685, 96
        %v2147 = vpop.permute.xlu0 %2146
        %v2149 = vsel %vm359, %v629, 0
        %v2152 = vsel %vm359, %v2147, 0
        %2154 = vmatprep.subr.bf16.mxu0 0
        %2155 = vmatpush1.bf16.xpose.msra.mxu0 %v2152
        %2156 = vmatprep.subr.bf16.mxu0 0
        %2157 = vmatpush1.bf16.xpose.msra.mxu0 0
        %2158 = vmatprep.subr.bf16.mxu0 0
        %2159 = vmatpush1.bf16.xpose.msra.mxu0 0
        %2160 = vmatprep.subr.bf16.mxu0 0
        %2161 = vmatpush1.bf16.xpose.msra.mxu0 0
        %2162 = vmatprep.subr.bf16.mxu0 0
        %2163 = vmatpush1.bf16.xpose.msra.mxu0 0
        %2164 = vmatprep.subr.bf16.mxu0 0
        %2165 = vmatpush1.bf16.xpose.msra.mxu0 0
        %2166 = vmatprep.subr.bf16.mxu0 0
        %2167 = vmatpush1.bf16.xpose.msra.mxu0 0
        %2168 = vmatprep.subr.bf16.mxu0 0
        %2169 = vmatpush1.bf16.xpose.msra.mxu0 0
        %2170 = vmatprep.subr.bf16.mxu0 0
        %2171 = vmatpush1.bf16.xpose.msra.mxu0 0
        %2172 = vmatprep.subr.bf16.mxu0 0
        %2173 = vmatpush1.bf16.xpose.msra.mxu0 0
        %2174 = vmatprep.subr.bf16.mxu0 0
        %2175 = vmatpush1.bf16.xpose.msra.mxu0 0
        %2176 = vmatprep.subr.bf16.mxu0 0
        %2177 = vmatpush1.bf16.xpose.msra.mxu0 0
        %2178 = vmatprep.subr.bf16.mxu0 0
        %2179 = vmatpush1.bf16.xpose.msra.mxu0 0
        %2180 = vmatprep.subr.bf16.mxu0 0
        %2181 = vmatpush1.bf16.xpose.msra.mxu0 0
        %2182 = vmatprep.subr.bf16.mxu0 0
        %2183 = vmatpush1.bf16.xpose.msra.mxu0 0
        %2184 = vmatprep.subr.bf16.mxu0 0
        %2185 = vmatpush1.bf16.xpose.msra.mxu0 0
        %2186 = vmatprep.mubr.bf16.mxu0 0
        %2187 = vmatmul.mubr.bf16.gmra.mrb[0].mxu0 %v2149
        %v2188 = vpop.f32.mrb[0].mxu0
        %v2189 = vadd.f32 0.0, %v2188
        %v2190 = vpop.f32.mrb[0].mxu0
        %v2191 = vpop.f32.mrb[0].mxu0
        %v2192 = vadd.f32 0.0, %v2191
        %v2193 = vpop.f32.mrb[0].mxu0
        %2194 = vdwg.mxu0
        %2196 = vrot.lane.b32.xlu0 %v686, 96
        %v2197 = vpop.permute.xlu0 %2196
        %v2199 = vsel %vm359, %v630, 0
        %v2202 = vsel %vm359, %v2197, 0
        %2204 = vmatprep.subr.bf16.mxu0 0
        %2205 = vmatpush1.bf16.xpose.msra.mxu0 %v2202
        %2206 = vmatprep.subr.bf16.mxu0 0
        %2207 = vmatpush1.bf16.xpose.msra.mxu0 0
        %2208 = vmatprep.subr.bf16.mxu0 0
        %2209 = vmatpush1.bf16.xpose.msra.mxu0 0
        %2210 = vmatprep.subr.bf16.mxu0 0
        %2211 = vmatpush1.bf16.xpose.msra.mxu0 0
        %2212 = vmatprep.subr.bf16.mxu0 0
        %2213 = vmatpush1.bf16.xpose.msra.mxu0 0
        %2214 = vmatprep.subr.bf16.mxu0 0
        %2215 = vmatpush1.bf16.xpose.msra.mxu0 0
        %2216 = vmatprep.subr.bf16.mxu0 0
        %2217 = vmatpush1.bf16.xpose.msra.mxu0 0
        %2218 = vmatprep.subr.bf16.mxu0 0
        %2219 = vmatpush1.bf16.xpose.msra.mxu0 0
        %2220 = vmatprep.subr.bf16.mxu0 0
        %2221 = vmatpush1.bf16.xpose.msra.mxu0 0
        %2222 = vmatprep.subr.bf16.mxu0 0
        %2223 = vmatpush1.bf16.xpose.msra.mxu0 0
        %2224 = vmatprep.subr.bf16.mxu0 0
        %2225 = vmatpush1.bf16.xpose.msra.mxu0 0
        %2226 = vmatprep.subr.bf16.mxu0 0
        %2227 = vmatpush1.bf16.xpose.msra.mxu0 0
        %2228 = vmatprep.subr.bf16.mxu0 0
        %2229 = vmatpush1.bf16.xpose.msra.mxu0 0
        %2230 = vmatprep.subr.bf16.mxu0 0
        %2231 = vmatpush1.bf16.xpose.msra.mxu0 0
        %2232 = vmatprep.subr.bf16.mxu0 0
        %2233 = vmatpush1.bf16.xpose.msra.mxu0 0
        %2234 = vmatprep.subr.bf16.mxu0 0
        %2235 = vmatpush1.bf16.xpose.msra.mxu0 0
        %2236 = vmatprep.mubr.bf16.mxu0 0
        %2237 = vmatmul.mubr.bf16.gmra.mrb[0].mxu0 %v2199
        %v2238 = vpop.f32.mrb[0].mxu0
        %v2239 = vadd.f32 0.0, %v2238
        %v2240 = vpop.f32.mrb[0].mxu0
        %v2241 = vpop.f32.mrb[0].mxu0
        %v2242 = vadd.f32 0.0, %v2241
        %v2243 = vpop.f32.mrb[0].mxu0
        %2244 = vdwg.mxu0
        %2246 = vrot.lane.b32.xlu0 %v687, 96
        %v2247 = vpop.permute.xlu0 %2246
        %v2249 = vsel %vm359, %v631, 0
        %v2252 = vsel %vm359, %v2247, 0
        %2254 = vmatprep.subr.bf16.mxu0 0
        %2255 = vmatpush1.bf16.xpose.msra.mxu0 %v2252
        %2256 = vmatprep.subr.bf16.mxu0 0
        %2257 = vmatpush1.bf16.xpose.msra.mxu0 0
        %2258 = vmatprep.subr.bf16.mxu0 0
        %2259 = vmatpush1.bf16.xpose.msra.mxu0 0
        %2260 = vmatprep.subr.bf16.mxu0 0
        %2261 = vmatpush1.bf16.xpose.msra.mxu0 0
        %2262 = vmatprep.subr.bf16.mxu0 0
        %2263 = vmatpush1.bf16.xpose.msra.mxu0 0
        %2264 = vmatprep.subr.bf16.mxu0 0
        %2265 = vmatpush1.bf16.xpose.msra.mxu0 0
        %2266 = vmatprep.subr.bf16.mxu0 0
        %2267 = vmatpush1.bf16.xpose.msra.mxu0 0
        %2268 = vmatprep.subr.bf16.mxu0 0
        %2269 = vmatpush1.bf16.xpose.msra.mxu0 0
        %2270 = vmatprep.subr.bf16.mxu0 0
        %2271 = vmatpush1.bf16.xpose.msra.mxu0 0
        %2272 = vmatprep.subr.bf16.mxu0 0
        %2273 = vmatpush1.bf16.xpose.msra.mxu0 0
        %2274 = vmatprep.subr.bf16.mxu0 0
        %2275 = vmatpush1.bf16.xpose.msra.mxu0 0
        %2276 = vmatprep.subr.bf16.mxu0 0
        %2277 = vmatpush1.bf16.xpose.msra.mxu0 0
        %2278 = vmatprep.subr.bf16.mxu0 0
        %2279 = vmatpush1.bf16.xpose.msra.mxu0 0
        %2280 = vmatprep.subr.bf16.mxu0 0
        %2281 = vmatpush1.bf16.xpose.msra.mxu0 0
        %2282 = vmatprep.subr.bf16.mxu0 0
        %2283 = vmatpush1.bf16.xpose.msra.mxu0 0
        %2284 = vmatprep.subr.bf16.mxu0 0
        %2285 = vmatpush1.bf16.xpose.msra.mxu0 0
        %2286 = vmatprep.mubr.bf16.mxu0 0
        %2287 = vmatmul.mubr.bf16.gmra.mrb[0].mxu0 %v2249
        %v2288 = vpop.f32.mrb[0].mxu0
        %v2289 = vadd.f32 0.0, %v2288
        %v2290 = vpop.f32.mrb[0].mxu0
        %v2291 = vpop.f32.mrb[0].mxu0
        %v2292 = vadd.f32 0.0, %v2291
        %v2293 = vpop.f32.mrb[0].mxu0
        %2294 = vdwg.mxu0
        %2296 = vrot.lane.b32.xlu0 %v688, 96
        %v2297 = vpop.permute.xlu0 %2296
        %v2299 = vsel %vm359, %v632, 0
        %v2302 = vsel %vm359, %v2297, 0
        %2304 = vmatprep.subr.bf16.mxu0 0
        %2305 = vmatpush1.bf16.xpose.msra.mxu0 %v2302
        %2306 = vmatprep.subr.bf16.mxu0 0
        %2307 = vmatpush1.bf16.xpose.msra.mxu0 0
        %2308 = vmatprep.subr.bf16.mxu0 0
        %2309 = vmatpush1.bf16.xpose.msra.mxu0 0
        %2310 = vmatprep.subr.bf16.mxu0 0
        %2311 = vmatpush1.bf16.xpose.msra.mxu0 0
        %2312 = vmatprep.subr.bf16.mxu0 0
        %2313 = vmatpush1.bf16.xpose.msra.mxu0 0
        %2314 = vmatprep.subr.bf16.mxu0 0
        %2315 = vmatpush1.bf16.xpose.msra.mxu0 0
        %2316 = vmatprep.subr.bf16.mxu0 0
        %2317 = vmatpush1.bf16.xpose.msra.mxu0 0
        %2318 = vmatprep.subr.bf16.mxu0 0
        %2319 = vmatpush1.bf16.xpose.msra.mxu0 0
        %2320 = vmatprep.subr.bf16.mxu0 0
        %2321 = vmatpush1.bf16.xpose.msra.mxu0 0
        %2322 = vmatprep.subr.bf16.mxu0 0
        %2323 = vmatpush1.bf16.xpose.msra.mxu0 0
        %2324 = vmatprep.subr.bf16.mxu0 0
        %2325 = vmatpush1.bf16.xpose.msra.mxu0 0
        %2326 = vmatprep.subr.bf16.mxu0 0
        %2327 = vmatpush1.bf16.xpose.msra.mxu0 0
        %2328 = vmatprep.subr.bf16.mxu0 0
        %2329 = vmatpush1.bf16.xpose.msra.mxu0 0
        %2330 = vmatprep.subr.bf16.mxu0 0
        %2331 = vmatpush1.bf16.xpose.msra.mxu0 0
        %2332 = vmatprep.subr.bf16.mxu0 0
        %2333 = vmatpush1.bf16.xpose.msra.mxu0 0
        %2334 = vmatprep.subr.bf16.mxu0 0
        %2335 = vmatpush1.bf16.xpose.msra.mxu0 0
        %2336 = vmatprep.mubr.bf16.mxu0 0
        %2337 = vmatmul.mubr.bf16.gmra.mrb[0].mxu0 %v2299
        %v2338 = vpop.f32.mrb[0].mxu0
        %v2339 = vadd.f32 0.0, %v2338
        %v2340 = vpop.f32.mrb[0].mxu0
        %v2341 = vpop.f32.mrb[0].mxu0
        %v2342 = vadd.f32 0.0, %v2341
        %v2343 = vpop.f32.mrb[0].mxu0
        %2344 = vdwg.mxu0
        %v2345 = vmul.f32 %v789, 0.125
        %v2346 = vmul.f32 %v792, 0.125
        %v2347 = vmul.f32 %v839, 0.125
        %v2348 = vmul.f32 %v842, 0.125
        %v2349 = vmul.f32 %v889, 0.125
        %v2350 = vmul.f32 %v892, 0.125
        %v2351 = vmul.f32 %v939, 0.125
        %v2352 = vmul.f32 %v942, 0.125
        %v2353 = vmul.f32 %v989, 0.125
        %v2354 = vmul.f32 %v992, 0.125
        %v2355 = vmul.f32 %v1039, 0.125
        %v2356 = vmul.f32 %v1042, 0.125
        %v2357 = vmul.f32 %v1089, 0.125
        %v2358 = vmul.f32 %v1092, 0.125
        %v2359 = vmul.f32 %v1139, 0.125
        %v2360 = vmul.f32 %v1142, 0.125
        %v2361 = vmul.f32 %v1189, 0.125
        %v2362 = vmul.f32 %v1192, 0.125
        %v2363 = vmul.f32 %v1239, 0.125
        %v2364 = vmul.f32 %v1242, 0.125
        %v2365 = vmul.f32 %v1289, 0.125
        %v2366 = vmul.f32 %v1292, 0.125
        %v2367 = vmul.f32 %v1339, 0.125
        %v2368 = vmul.f32 %v1342, 0.125
        %v2369 = vmul.f32 %v1389, 0.125
        %v2370 = vmul.f32 %v1392, 0.125
        %v2371 = vmul.f32 %v1439, 0.125
        %v2372 = vmul.f32 %v1442, 0.125
        %v2373 = vmul.f32 %v1489, 0.125
        %v2374 = vmul.f32 %v1492, 0.125
        %v2375 = vmul.f32 %v1539, 0.125
        %v2376 = vmul.f32 %v1542, 0.125
        %v2377 = vmul.f32 %v1589, 0.125
        %v2378 = vmul.f32 %v1592, 0.125
        %v2379 = vmul.f32 %v1639, 0.125
        %v2380 = vmul.f32 %v1642, 0.125
        %v2381 = vmul.f32 %v1689, 0.125
        %v2382 = vmul.f32 %v1692, 0.125
        %v2383 = vmul.f32 %v1739, 0.125
        %v2384 = vmul.f32 %v1742, 0.125
        %v2385 = vmul.f32 %v1789, 0.125
        %v2386 = vmul.f32 %v1792, 0.125
        %v2387 = vmul.f32 %v1839, 0.125
        %v2388 = vmul.f32 %v1842, 0.125
        %v2389 = vmul.f32 %v1889, 0.125
        %v2390 = vmul.f32 %v1892, 0.125
        %v2391 = vmul.f32 %v1939, 0.125
        %v2392 = vmul.f32 %v1942, 0.125
        %v2393 = vmul.f32 %v1989, 0.125
        %v2394 = vmul.f32 %v1992, 0.125
        %v2395 = vmul.f32 %v2039, 0.125
        %v2396 = vmul.f32 %v2042, 0.125
        %v2397 = vmul.f32 %v2089, 0.125
        %v2398 = vmul.f32 %v2092, 0.125
        %v2399 = vmul.f32 %v2139, 0.125
        %v2400 = vmul.f32 %v2142, 0.125
        %v2401 = vmul.f32 %v2189, 0.125
        %v2402 = vmul.f32 %v2192, 0.125
        %v2403 = vmul.f32 %v2239, 0.125
        %v2404 = vmul.f32 %v2242, 0.125
        %v2405 = vmul.f32 %v2289, 0.125
        %v2406 = vmul.f32 %v2292, 0.125
        %v2407 = vmul.f32 %v2339, 0.125
        %v2408 = vmul.f32 %v2342, 0.125
        %v2409 = vpack.c.bf16 %v2346, %v2345
        %v2410 = vpack.c.bf16 %v2348, %v2347
        %v2411 = vpack.c.bf16 %v2350, %v2349
        %v2412 = vpack.c.bf16 %v2352, %v2351
        %v2413 = vpack.c.bf16 %v2354, %v2353
        %v2414 = vpack.c.bf16 %v2356, %v2355
        %v2415 = vpack.c.bf16 %v2358, %v2357
        %v2416 = vpack.c.bf16 %v2360, %v2359
        %v2417 = vpack.c.bf16 %v2362, %v2361
        %v2418 = vpack.c.bf16 %v2364, %v2363
        %v2419 = vpack.c.bf16 %v2366, %v2365
        %v2420 = vpack.c.bf16 %v2368, %v2367
        %v2421 = vpack.c.bf16 %v2370, %v2369
        %v2422 = vpack.c.bf16 %v2372, %v2371
        %v2423 = vpack.c.bf16 %v2374, %v2373
        %v2424 = vpack.c.bf16 %v2376, %v2375
        %v2425 = vpack.c.bf16 %v2378, %v2377
        %v2426 = vpack.c.bf16 %v2380, %v2379
        %v2427 = vpack.c.bf16 %v2382, %v2381
        %v2428 = vpack.c.bf16 %v2384, %v2383
        %v2429 = vpack.c.bf16 %v2386, %v2385
        %v2430 = vpack.c.bf16 %v2388, %v2387
        %v2431 = vpack.c.bf16 %v2390, %v2389
        %v2432 = vpack.c.bf16 %v2392, %v2391
        %v2433 = vpack.c.bf16 %v2394, %v2393
        %v2434 = vpack.c.bf16 %v2396, %v2395
        %v2435 = vpack.c.bf16 %v2398, %v2397
        %v2436 = vpack.c.bf16 %v2400, %v2399
        %v2437 = vpack.c.bf16 %v2402, %v2401
        %v2438 = vpack.c.bf16 %v2404, %v2403
        %v2439 = vpack.c.bf16 %v2406, %v2405
        %v2440 = vpack.c.bf16 %v2408, %v2407
        %2442 = vrot.lane.b32.xlu0 %v713, 64
        %v2443 = vpop.permute.xlu0 %2442
        %vm2445 = vcmask 130048
        %v2447 = vsel %vm2445, %v2409, 0
        %2449 = vmatprep.subr.bf16.mxu0 0
        %2450 = vmatpush1.bf16.msra.mxu0 %v2443
        %2451 = vmatprep.subr.bf16.mxu0 0
        %2452 = vmatpush1.bf16.msra.mxu0 0
        %2453 = vmatprep.subr.bf16.mxu0 0
        %2454 = vmatpush1.bf16.msra.mxu0 0
        %2455 = vmatprep.subr.bf16.mxu0 0
        %2456 = vmatpush1.bf16.msra.mxu0 0
        %2457 = vmatprep.subr.bf16.mxu0 0
        %2458 = vmatpush1.bf16.msra.mxu0 0
        %2459 = vmatprep.subr.bf16.mxu0 0
        %2460 = vmatpush1.bf16.msra.mxu0 0
        %2461 = vmatprep.subr.bf16.mxu0 0
        %2462 = vmatpush1.bf16.msra.mxu0 0
        %2463 = vmatprep.subr.bf16.mxu0 0
        %2464 = vmatpush1.bf16.msra.mxu0 0
        %2465 = vmatprep.subr.bf16.mxu0 0
        %2466 = vmatpush1.bf16.msra.mxu0 0
        %2467 = vmatprep.subr.bf16.mxu0 0
        %2468 = vmatpush1.bf16.msra.mxu0 0
        %2469 = vmatprep.subr.bf16.mxu0 0
        %2470 = vmatpush1.bf16.msra.mxu0 0
        %2471 = vmatprep.subr.bf16.mxu0 0
        %2472 = vmatpush1.bf16.msra.mxu0 0
        %2473 = vmatprep.subr.bf16.mxu0 0
        %2474 = vmatpush1.bf16.msra.mxu0 0
        %2475 = vmatprep.subr.bf16.mxu0 0
        %2476 = vmatpush1.bf16.msra.mxu0 0
        %2477 = vmatprep.subr.bf16.mxu0 0
        %2478 = vmatpush1.bf16.msra.mxu0 0
        %2479 = vmatprep.subr.bf16.mxu0 0
        %2480 = vmatpush1.bf16.msra.mxu0 0
        %2481 = vmatprep.mubr.bf16.mxu0 0
        %2482 = vmatmul.mubr.bf16.gmra.mrb[0].mxu0 %v2447
        %v2483 = vpop.f32.mrb[0].mxu0
        %v2484 = vadd.f32 0.0, %v2483
        %v2485 = vpop.f32.mrb[0].mxu0
        %v2486 = vpop.f32.mrb[0].mxu0
        %v2487 = vadd.f32 0.0, %v2486
        %v2488 = vpop.f32.mrb[0].mxu0
        %2489 = vdwg.mxu0
        %2491 = vrot.lane.b32.xlu0 %v714, 64
        %v2492 = vpop.permute.xlu0 %2491
        %v2495 = vsel %vm2445, %v2410, 0
        %2497 = vmatprep.subr.bf16.mxu0 0
        %2498 = vmatpush1.bf16.msra.mxu0 %v2492
        %2499 = vmatprep.subr.bf16.mxu0 0
        %2500 = vmatpush1.bf16.msra.mxu0 0
        %2501 = vmatprep.subr.bf16.mxu0 0
        %2502 = vmatpush1.bf16.msra.mxu0 0
        %2503 = vmatprep.subr.bf16.mxu0 0
        %2504 = vmatpush1.bf16.msra.mxu0 0
        %2505 = vmatprep.subr.bf16.mxu0 0
        %2506 = vmatpush1.bf16.msra.mxu0 0
        %2507 = vmatprep.subr.bf16.mxu0 0
        %2508 = vmatpush1.bf16.msra.mxu0 0
        %2509 = vmatprep.subr.bf16.mxu0 0
        %2510 = vmatpush1.bf16.msra.mxu0 0
        %2511 = vmatprep.subr.bf16.mxu0 0
        %2512 = vmatpush1.bf16.msra.mxu0 0
        %2513 = vmatprep.subr.bf16.mxu0 0
        %2514 = vmatpush1.bf16.msra.mxu0 0
        %2515 = vmatprep.subr.bf16.mxu0 0
        %2516 = vmatpush1.bf16.msra.mxu0 0
        %2517 = vmatprep.subr.bf16.mxu0 0
        %2518 = vmatpush1.bf16.msra.mxu0 0
        %2519 = vmatprep.subr.bf16.mxu0 0
        %2520 = vmatpush1.bf16.msra.mxu0 0
        %2521 = vmatprep.subr.bf16.mxu0 0
        %2522 = vmatpush1.bf16.msra.mxu0 0
        %2523 = vmatprep.subr.bf16.mxu0 0
        %2524 = vmatpush1.bf16.msra.mxu0 0
        %2525 = vmatprep.subr.bf16.mxu0 0
        %2526 = vmatpush1.bf16.msra.mxu0 0
        %2527 = vmatprep.subr.bf16.mxu0 0
        %2528 = vmatpush1.bf16.msra.mxu0 0
        %2529 = vmatprep.mubr.bf16.mxu0 0
        %2530 = vmatmul.mubr.bf16.gmra.mrb[0].mxu0 %v2495
        %v2531 = vpop.f32.mrb[0].mxu0
        %v2532 = vadd.f32 0.0, %v2531
        %v2533 = vpop.f32.mrb[0].mxu0
        %v2534 = vpop.f32.mrb[0].mxu0
        %v2535 = vadd.f32 0.0, %v2534
        %v2536 = vpop.f32.mrb[0].mxu0
        %2537 = vdwg.mxu0
        %2539 = vrot.lane.b32.xlu0 %v715, 64
        %v2540 = vpop.permute.xlu0 %2539
        %v2543 = vsel %vm2445, %v2411, 0
        %2545 = vmatprep.subr.bf16.mxu0 0
        %2546 = vmatpush1.bf16.msra.mxu0 %v2540
        %2547 = vmatprep.subr.bf16.mxu0 0
        %2548 = vmatpush1.bf16.msra.mxu0 0
        %2549 = vmatprep.subr.bf16.mxu0 0
        %2550 = vmatpush1.bf16.msra.mxu0 0
        %2551 = vmatprep.subr.bf16.mxu0 0
        %2552 = vmatpush1.bf16.msra.mxu0 0
        %2553 = vmatprep.subr.bf16.mxu0 0
        %2554 = vmatpush1.bf16.msra.mxu0 0
        %2555 = vmatprep.subr.bf16.mxu0 0
        %2556 = vmatpush1.bf16.msra.mxu0 0
        %2557 = vmatprep.subr.bf16.mxu0 0
        %2558 = vmatpush1.bf16.msra.mxu0 0
        %2559 = vmatprep.subr.bf16.mxu0 0
        %2560 = vmatpush1.bf16.msra.mxu0 0
        %2561 = vmatprep.subr.bf16.mxu0 0
        %2562 = vmatpush1.bf16.msra.mxu0 0
        %2563 = vmatprep.subr.bf16.mxu0 0
        %2564 = vmatpush1.bf16.msra.mxu0 0
        %2565 = vmatprep.subr.bf16.mxu0 0
        %2566 = vmatpush1.bf16.msra.mxu0 0
        %2567 = vmatprep.subr.bf16.mxu0 0
        %2568 = vmatpush1.bf16.msra.mxu0 0
        %2569 = vmatprep.subr.bf16.mxu0 0
        %2570 = vmatpush1.bf16.msra.mxu0 0
        %2571 = vmatprep.subr.bf16.mxu0 0
        %2572 = vmatpush1.bf16.msra.mxu0 0
        %2573 = vmatprep.subr.bf16.mxu0 0
        %2574 = vmatpush1.bf16.msra.mxu0 0
        %2575 = vmatprep.subr.bf16.mxu0 0
        %2576 = vmatpush1.bf16.msra.mxu0 0
        %2577 = vmatprep.mubr.bf16.mxu0 0
        %2578 = vmatmul.mubr.bf16.gmra.mrb[0].mxu0 %v2543
        %v2579 = vpop.f32.mrb[0].mxu0
        %v2580 = vadd.f32 0.0, %v2579
        %v2581 = vpop.f32.mrb[0].mxu0
        %v2582 = vpop.f32.mrb[0].mxu0
        %v2583 = vadd.f32 0.0, %v2582
        %v2584 = vpop.f32.mrb[0].mxu0
        %2585 = vdwg.mxu0
        %2587 = vrot.lane.b32.xlu0 %v716, 64
        %v2588 = vpop.permute.xlu0 %2587
        %v2591 = vsel %vm2445, %v2412, 0
        %2593 = vmatprep.subr.bf16.mxu0 0
        %2594 = vmatpush1.bf16.msra.mxu0 %v2588
        %2595 = vmatprep.subr.bf16.mxu0 0
        %2596 = vmatpush1.bf16.msra.mxu0 0
        %2597 = vmatprep.subr.bf16.mxu0 0
        %2598 = vmatpush1.bf16.msra.mxu0 0
        %2599 = vmatprep.subr.bf16.mxu0 0
        %2600 = vmatpush1.bf16.msra.mxu0 0
        %2601 = vmatprep.subr.bf16.mxu0 0
        %2602 = vmatpush1.bf16.msra.mxu0 0
        %2603 = vmatprep.subr.bf16.mxu0 0
        %2604 = vmatpush1.bf16.msra.mxu0 0
        %2605 = vmatprep.subr.bf16.mxu0 0
        %2606 = vmatpush1.bf16.msra.mxu0 0
        %2607 = vmatprep.subr.bf16.mxu0 0
        %2608 = vmatpush1.bf16.msra.mxu0 0
        %2609 = vmatprep.subr.bf16.mxu0 0
        %2610 = vmatpush1.bf16.msra.mxu0 0
        %2611 = vmatprep.subr.bf16.mxu0 0
        %2612 = vmatpush1.bf16.msra.mxu0 0
        %2613 = vmatprep.subr.bf16.mxu0 0
        %2614 = vmatpush1.bf16.msra.mxu0 0
        %2615 = vmatprep.subr.bf16.mxu0 0
        %2616 = vmatpush1.bf16.msra.mxu0 0
        %2617 = vmatprep.subr.bf16.mxu0 0
        %2618 = vmatpush1.bf16.msra.mxu0 0
        %2619 = vmatprep.subr.bf16.mxu0 0
        %2620 = vmatpush1.bf16.msra.mxu0 0
        %2621 = vmatprep.subr.bf16.mxu0 0
        %2622 = vmatpush1.bf16.msra.mxu0 0
        %2623 = vmatprep.subr.bf16.mxu0 0
        %2624 = vmatpush1.bf16.msra.mxu0 0
        %2625 = vmatprep.mubr.bf16.mxu0 0
        %2626 = vmatmul.mubr.bf16.gmra.mrb[0].mxu0 %v2591
        %v2627 = vpop.f32.mrb[0].mxu0
        %v2628 = vadd.f32 0.0, %v2627
        %v2629 = vpop.f32.mrb[0].mxu0
        %v2630 = vpop.f32.mrb[0].mxu0
        %v2631 = vadd.f32 0.0, %v2630
        %v2632 = vpop.f32.mrb[0].mxu0
        %2633 = vdwg.mxu0
        %2635 = vrot.lane.b32.xlu0 %v717, 64
        %v2636 = vpop.permute.xlu0 %2635
        %v2639 = vsel %vm2445, %v2413, 0
        %2641 = vmatprep.subr.bf16.mxu0 0
        %2642 = vmatpush1.bf16.msra.mxu0 %v2636
        %2643 = vmatprep.subr.bf16.mxu0 0
        %2644 = vmatpush1.bf16.msra.mxu0 0
        %2645 = vmatprep.subr.bf16.mxu0 0
        %2646 = vmatpush1.bf16.msra.mxu0 0
        %2647 = vmatprep.subr.bf16.mxu0 0
        %2648 = vmatpush1.bf16.msra.mxu0 0
        %2649 = vmatprep.subr.bf16.mxu0 0
        %2650 = vmatpush1.bf16.msra.mxu0 0
        %2651 = vmatprep.subr.bf16.mxu0 0
        %2652 = vmatpush1.bf16.msra.mxu0 0
        %2653 = vmatprep.subr.bf16.mxu0 0
        %2654 = vmatpush1.bf16.msra.mxu0 0
        %2655 = vmatprep.subr.bf16.mxu0 0
        %2656 = vmatpush1.bf16.msra.mxu0 0
        %2657 = vmatprep.subr.bf16.mxu0 0
        %2658 = vmatpush1.bf16.msra.mxu0 0
        %2659 = vmatprep.subr.bf16.mxu0 0
        %2660 = vmatpush1.bf16.msra.mxu0 0
        %2661 = vmatprep.subr.bf16.mxu0 0
        %2662 = vmatpush1.bf16.msra.mxu0 0
        %2663 = vmatprep.subr.bf16.mxu0 0
        %2664 = vmatpush1.bf16.msra.mxu0 0
        %2665 = vmatprep.subr.bf16.mxu0 0
        %2666 = vmatpush1.bf16.msra.mxu0 0
        %2667 = vmatprep.subr.bf16.mxu0 0
        %2668 = vmatpush1.bf16.msra.mxu0 0
        %2669 = vmatprep.subr.bf16.mxu0 0
        %2670 = vmatpush1.bf16.msra.mxu0 0
        %2671 = vmatprep.subr.bf16.mxu0 0
        %2672 = vmatpush1.bf16.msra.mxu0 0
        %2673 = vmatprep.mubr.bf16.mxu0 0
        %2674 = vmatmul.mubr.bf16.gmra.mrb[0].mxu0 %v2639
        %v2675 = vpop.f32.mrb[0].mxu0
        %v2676 = vadd.f32 0.0, %v2675
        %v2677 = vpop.f32.mrb[0].mxu0
        %v2678 = vpop.f32.mrb[0].mxu0
        %v2679 = vadd.f32 0.0, %v2678
        %v2680 = vpop.f32.mrb[0].mxu0
        %2681 = vdwg.mxu0
        %2683 = vrot.lane.b32.xlu0 %v718, 64
        %v2684 = vpop.permute.xlu0 %2683
        %v2687 = vsel %vm2445, %v2414, 0
        %2689 = vmatprep.subr.bf16.mxu0 0
        %2690 = vmatpush1.bf16.msra.mxu0 %v2684
        %2691 = vmatprep.subr.bf16.mxu0 0
        %2692 = vmatpush1.bf16.msra.mxu0 0
        %2693 = vmatprep.subr.bf16.mxu0 0
        %2694 = vmatpush1.bf16.msra.mxu0 0
        %2695 = vmatprep.subr.bf16.mxu0 0
        %2696 = vmatpush1.bf16.msra.mxu0 0
        %2697 = vmatprep.subr.bf16.mxu0 0
        %2698 = vmatpush1.bf16.msra.mxu0 0
        %2699 = vmatprep.subr.bf16.mxu0 0
        %2700 = vmatpush1.bf16.msra.mxu0 0
        %2701 = vmatprep.subr.bf16.mxu0 0
        %2702 = vmatpush1.bf16.msra.mxu0 0
        %2703 = vmatprep.subr.bf16.mxu0 0
        %2704 = vmatpush1.bf16.msra.mxu0 0
        %2705 = vmatprep.subr.bf16.mxu0 0
        %2706 = vmatpush1.bf16.msra.mxu0 0
        %2707 = vmatprep.subr.bf16.mxu0 0
        %2708 = vmatpush1.bf16.msra.mxu0 0
        %2709 = vmatprep.subr.bf16.mxu0 0
        %2710 = vmatpush1.bf16.msra.mxu0 0
        %2711 = vmatprep.subr.bf16.mxu0 0
        %2712 = vmatpush1.bf16.msra.mxu0 0
        %2713 = vmatprep.subr.bf16.mxu0 0
        %2714 = vmatpush1.bf16.msra.mxu0 0
        %2715 = vmatprep.subr.bf16.mxu0 0
        %2716 = vmatpush1.bf16.msra.mxu0 0
        %2717 = vmatprep.subr.bf16.mxu0 0
        %2718 = vmatpush1.bf16.msra.mxu0 0
        %2719 = vmatprep.subr.bf16.mxu0 0
        %2720 = vmatpush1.bf16.msra.mxu0 0
        %2721 = vmatprep.mubr.bf16.mxu0 0
        %2722 = vmatmul.mubr.bf16.gmra.mrb[0].mxu0 %v2687
        %v2723 = vpop.f32.mrb[0].mxu0
        %v2724 = vadd.f32 0.0, %v2723
        %v2725 = vpop.f32.mrb[0].mxu0
        %v2726 = vpop.f32.mrb[0].mxu0
        %v2727 = vadd.f32 0.0, %v2726
        %v2728 = vpop.f32.mrb[0].mxu0
        %2729 = vdwg.mxu0
        %2731 = vrot.lane.b32.xlu0 %v719, 64
        %v2732 = vpop.permute.xlu0 %2731
        %v2735 = vsel %vm2445, %v2415, 0
        %2737 = vmatprep.subr.bf16.mxu0 0
        %2738 = vmatpush1.bf16.msra.mxu0 %v2732
        %2739 = vmatprep.subr.bf16.mxu0 0
        %2740 = vmatpush1.bf16.msra.mxu0 0
        %2741 = vmatprep.subr.bf16.mxu0 0
        %2742 = vmatpush1.bf16.msra.mxu0 0
        %2743 = vmatprep.subr.bf16.mxu0 0
        %2744 = vmatpush1.bf16.msra.mxu0 0
        %2745 = vmatprep.subr.bf16.mxu0 0
        %2746 = vmatpush1.bf16.msra.mxu0 0
        %2747 = vmatprep.subr.bf16.mxu0 0
        %2748 = vmatpush1.bf16.msra.mxu0 0
        %2749 = vmatprep.subr.bf16.mxu0 0
        %2750 = vmatpush1.bf16.msra.mxu0 0
        %2751 = vmatprep.subr.bf16.mxu0 0
        %2752 = vmatpush1.bf16.msra.mxu0 0
        %2753 = vmatprep.subr.bf16.mxu0 0
        %2754 = vmatpush1.bf16.msra.mxu0 0
        %2755 = vmatprep.subr.bf16.mxu0 0
        %2756 = vmatpush1.bf16.msra.mxu0 0
        %2757 = vmatprep.subr.bf16.mxu0 0
        %2758 = vmatpush1.bf16.msra.mxu0 0
        %2759 = vmatprep.subr.bf16.mxu0 0
        %2760 = vmatpush1.bf16.msra.mxu0 0
        %2761 = vmatprep.subr.bf16.mxu0 0
        %2762 = vmatpush1.bf16.msra.mxu0 0
        %2763 = vmatprep.subr.bf16.mxu0 0
        %2764 = vmatpush1.bf16.msra.mxu0 0
        %2765 = vmatprep.subr.bf16.mxu0 0
        %2766 = vmatpush1.bf16.msra.mxu0 0
        %2767 = vmatprep.subr.bf16.mxu0 0
        %2768 = vmatpush1.bf16.msra.mxu0 0
        %2769 = vmatprep.mubr.bf16.mxu0 0
        %2770 = vmatmul.mubr.bf16.gmra.mrb[0].mxu0 %v2735
        %v2771 = vpop.f32.mrb[0].mxu0
        %v2772 = vadd.f32 0.0, %v2771
        %v2773 = vpop.f32.mrb[0].mxu0
        %v2774 = vpop.f32.mrb[0].mxu0
        %v2775 = vadd.f32 0.0, %v2774
        %v2776 = vpop.f32.mrb[0].mxu0
        %2777 = vdwg.mxu0
        %2779 = vrot.lane.b32.xlu0 %v720, 64
        %v2780 = vpop.permute.xlu0 %2779
        %v2783 = vsel %vm2445, %v2416, 0
        %2785 = vmatprep.subr.bf16.mxu0 0
        %2786 = vmatpush1.bf16.msra.mxu0 %v2780
        %2787 = vmatprep.subr.bf16.mxu0 0
        %2788 = vmatpush1.bf16.msra.mxu0 0
        %2789 = vmatprep.subr.bf16.mxu0 0
        %2790 = vmatpush1.bf16.msra.mxu0 0
        %2791 = vmatprep.subr.bf16.mxu0 0
        %2792 = vmatpush1.bf16.msra.mxu0 0
        %2793 = vmatprep.subr.bf16.mxu0 0
        %2794 = vmatpush1.bf16.msra.mxu0 0
        %2795 = vmatprep.subr.bf16.mxu0 0
        %2796 = vmatpush1.bf16.msra.mxu0 0
        %2797 = vmatprep.subr.bf16.mxu0 0
        %2798 = vmatpush1.bf16.msra.mxu0 0
        %2799 = vmatprep.subr.bf16.mxu0 0
        %2800 = vmatpush1.bf16.msra.mxu0 0
        %2801 = vmatprep.subr.bf16.mxu0 0
        %2802 = vmatpush1.bf16.msra.mxu0 0
        %2803 = vmatprep.subr.bf16.mxu0 0
        %2804 = vmatpush1.bf16.msra.mxu0 0
        %2805 = vmatprep.subr.bf16.mxu0 0
        %2806 = vmatpush1.bf16.msra.mxu0 0
        %2807 = vmatprep.subr.bf16.mxu0 0
        %2808 = vmatpush1.bf16.msra.mxu0 0
        %2809 = vmatprep.subr.bf16.mxu0 0
        %2810 = vmatpush1.bf16.msra.mxu0 0
        %2811 = vmatprep.subr.bf16.mxu0 0
        %2812 = vmatpush1.bf16.msra.mxu0 0
        %2813 = vmatprep.subr.bf16.mxu0 0
        %2814 = vmatpush1.bf16.msra.mxu0 0
        %2815 = vmatprep.subr.bf16.mxu0 0
        %2816 = vmatpush1.bf16.msra.mxu0 0
        %2817 = vmatprep.mubr.bf16.mxu0 0
        %2818 = vmatmul.mubr.bf16.gmra.mrb[0].mxu0 %v2783
        %v2819 = vpop.f32.mrb[0].mxu0
        %v2820 = vadd.f32 0.0, %v2819
        %v2821 = vpop.f32.mrb[0].mxu0
        %v2822 = vpop.f32.mrb[0].mxu0
        %v2823 = vadd.f32 0.0, %v2822
        %v2824 = vpop.f32.mrb[0].mxu0
        %2825 = vdwg.mxu0
        %2827 = vrot.lane.b32.xlu0 %v721, 64
        %v2828 = vpop.permute.xlu0 %2827
        %v2831 = vsel %vm2445, %v2417, 0
        %2833 = vmatprep.subr.bf16.mxu0 0
        %2834 = vmatpush1.bf16.msra.mxu0 %v2828
        %2835 = vmatprep.subr.bf16.mxu0 0
        %2836 = vmatpush1.bf16.msra.mxu0 0
        %2837 = vmatprep.subr.bf16.mxu0 0
        %2838 = vmatpush1.bf16.msra.mxu0 0
        %2839 = vmatprep.subr.bf16.mxu0 0
        %2840 = vmatpush1.bf16.msra.mxu0 0
        %2841 = vmatprep.subr.bf16.mxu0 0
        %2842 = vmatpush1.bf16.msra.mxu0 0
        %2843 = vmatprep.subr.bf16.mxu0 0
        %2844 = vmatpush1.bf16.msra.mxu0 0
        %2845 = vmatprep.subr.bf16.mxu0 0
        %2846 = vmatpush1.bf16.msra.mxu0 0
        %2847 = vmatprep.subr.bf16.mxu0 0
        %2848 = vmatpush1.bf16.msra.mxu0 0
        %2849 = vmatprep.subr.bf16.mxu0 0
        %2850 = vmatpush1.bf16.msra.mxu0 0
        %2851 = vmatprep.subr.bf16.mxu0 0
        %2852 = vmatpush1.bf16.msra.mxu0 0
        %2853 = vmatprep.subr.bf16.mxu0 0
        %2854 = vmatpush1.bf16.msra.mxu0 0
        %2855 = vmatprep.subr.bf16.mxu0 0
        %2856 = vmatpush1.bf16.msra.mxu0 0
        %2857 = vmatprep.subr.bf16.mxu0 0
        %2858 = vmatpush1.bf16.msra.mxu0 0
        %2859 = vmatprep.subr.bf16.mxu0 0
        %2860 = vmatpush1.bf16.msra.mxu0 0
        %2861 = vmatprep.subr.bf16.mxu0 0
        %2862 = vmatpush1.bf16.msra.mxu0 0
        %2863 = vmatprep.subr.bf16.mxu0 0
        %2864 = vmatpush1.bf16.msra.mxu0 0
        %2865 = vmatprep.mubr.bf16.mxu0 0
        %2866 = vmatmul.mubr.bf16.gmra.mrb[0].mxu0 %v2831
        %v2867 = vpop.f32.mrb[0].mxu0
        %v2868 = vadd.f32 0.0, %v2867
        %v2869 = vpop.f32.mrb[0].mxu0
        %v2870 = vpop.f32.mrb[0].mxu0
        %v2871 = vadd.f32 0.0, %v2870
        %v2872 = vpop.f32.mrb[0].mxu0
        %2873 = vdwg.mxu0
        %2875 = vrot.lane.b32.xlu0 %v722, 64
        %v2876 = vpop.permute.xlu0 %2875
        %v2879 = vsel %vm2445, %v2418, 0
        %2881 = vmatprep.subr.bf16.mxu0 0
        %2882 = vmatpush1.bf16.msra.mxu0 %v2876
        %2883 = vmatprep.subr.bf16.mxu0 0
        %2884 = vmatpush1.bf16.msra.mxu0 0
        %2885 = vmatprep.subr.bf16.mxu0 0
        %2886 = vmatpush1.bf16.msra.mxu0 0
        %2887 = vmatprep.subr.bf16.mxu0 0
        %2888 = vmatpush1.bf16.msra.mxu0 0
        %2889 = vmatprep.subr.bf16.mxu0 0
        %2890 = vmatpush1.bf16.msra.mxu0 0
        %2891 = vmatprep.subr.bf16.mxu0 0
        %2892 = vmatpush1.bf16.msra.mxu0 0
        %2893 = vmatprep.subr.bf16.mxu0 0
        %2894 = vmatpush1.bf16.msra.mxu0 0
        %2895 = vmatprep.subr.bf16.mxu0 0
        %2896 = vmatpush1.bf16.msra.mxu0 0
        %2897 = vmatprep.subr.bf16.mxu0 0
        %2898 = vmatpush1.bf16.msra.mxu0 0
        %2899 = vmatprep.subr.bf16.mxu0 0
        %2900 = vmatpush1.bf16.msra.mxu0 0
        %2901 = vmatprep.subr.bf16.mxu0 0
        %2902 = vmatpush1.bf16.msra.mxu0 0
        %2903 = vmatprep.subr.bf16.mxu0 0
        %2904 = vmatpush1.bf16.msra.mxu0 0
        %2905 = vmatprep.subr.bf16.mxu0 0
        %2906 = vmatpush1.bf16.msra.mxu0 0
        %2907 = vmatprep.subr.bf16.mxu0 0
        %2908 = vmatpush1.bf16.msra.mxu0 0
        %2909 = vmatprep.subr.bf16.mxu0 0
        %2910 = vmatpush1.bf16.msra.mxu0 0
        %2911 = vmatprep.subr.bf16.mxu0 0
        %2912 = vmatpush1.bf16.msra.mxu0 0
        %2913 = vmatprep.mubr.bf16.mxu0 0
        %2914 = vmatmul.mubr.bf16.gmra.mrb[0].mxu0 %v2879
        %v2915 = vpop.f32.mrb[0].mxu0
        %v2916 = vadd.f32 0.0, %v2915
        %v2917 = vpop.f32.mrb[0].mxu0
        %v2918 = vpop.f32.mrb[0].mxu0
        %v2919 = vadd.f32 0.0, %v2918
        %v2920 = vpop.f32.mrb[0].mxu0
        %2921 = vdwg.mxu0
        %2923 = vrot.lane.b32.xlu0 %v723, 64
        %v2924 = vpop.permute.xlu0 %2923
        %v2927 = vsel %vm2445, %v2419, 0
        %2929 = vmatprep.subr.bf16.mxu0 0
        %2930 = vmatpush1.bf16.msra.mxu0 %v2924
        %2931 = vmatprep.subr.bf16.mxu0 0
        %2932 = vmatpush1.bf16.msra.mxu0 0
        %2933 = vmatprep.subr.bf16.mxu0 0
        %2934 = vmatpush1.bf16.msra.mxu0 0
        %2935 = vmatprep.subr.bf16.mxu0 0
        %2936 = vmatpush1.bf16.msra.mxu0 0
        %2937 = vmatprep.subr.bf16.mxu0 0
        %2938 = vmatpush1.bf16.msra.mxu0 0
        %2939 = vmatprep.subr.bf16.mxu0 0
        %2940 = vmatpush1.bf16.msra.mxu0 0
        %2941 = vmatprep.subr.bf16.mxu0 0
        %2942 = vmatpush1.bf16.msra.mxu0 0
        %2943 = vmatprep.subr.bf16.mxu0 0
        %2944 = vmatpush1.bf16.msra.mxu0 0
        %2945 = vmatprep.subr.bf16.mxu0 0
        %2946 = vmatpush1.bf16.msra.mxu0 0
        %2947 = vmatprep.subr.bf16.mxu0 0
        %2948 = vmatpush1.bf16.msra.mxu0 0
        %2949 = vmatprep.subr.bf16.mxu0 0
        %2950 = vmatpush1.bf16.msra.mxu0 0
        %2951 = vmatprep.subr.bf16.mxu0 0
        %2952 = vmatpush1.bf16.msra.mxu0 0
        %2953 = vmatprep.subr.bf16.mxu0 0
        %2954 = vmatpush1.bf16.msra.mxu0 0
        %2955 = vmatprep.subr.bf16.mxu0 0
        %2956 = vmatpush1.bf16.msra.mxu0 0
        %2957 = vmatprep.subr.bf16.mxu0 0
        %2958 = vmatpush1.bf16.msra.mxu0 0
        %2959 = vmatprep.subr.bf16.mxu0 0
        %2960 = vmatpush1.bf16.msra.mxu0 0
        %2961 = vmatprep.mubr.bf16.mxu0 0
        %2962 = vmatmul.mubr.bf16.gmra.mrb[0].mxu0 %v2927
        %v2963 = vpop.f32.mrb[0].mxu0
        %v2964 = vadd.f32 0.0, %v2963
        %v2965 = vpop.f32.mrb[0].mxu0
        %v2966 = vpop.f32.mrb[0].mxu0
        %v2967 = vadd.f32 0.0, %v2966
        %v2968 = vpop.f32.mrb[0].mxu0
        %2969 = vdwg.mxu0
        %2971 = vrot.lane.b32.xlu0 %v724, 64
        %v2972 = vpop.permute.xlu0 %2971
        %v2975 = vsel %vm2445, %v2420, 0
        %2977 = vmatprep.subr.bf16.mxu0 0
        %2978 = vmatpush1.bf16.msra.mxu0 %v2972
        %2979 = vmatprep.subr.bf16.mxu0 0
        %2980 = vmatpush1.bf16.msra.mxu0 0
        %2981 = vmatprep.subr.bf16.mxu0 0
        %2982 = vmatpush1.bf16.msra.mxu0 0
        %2983 = vmatprep.subr.bf16.mxu0 0
        %2984 = vmatpush1.bf16.msra.mxu0 0
        %2985 = vmatprep.subr.bf16.mxu0 0
        %2986 = vmatpush1.bf16.msra.mxu0 0
        %2987 = vmatprep.subr.bf16.mxu0 0
        %2988 = vmatpush1.bf16.msra.mxu0 0
        %2989 = vmatprep.subr.bf16.mxu0 0
        %2990 = vmatpush1.bf16.msra.mxu0 0
        %2991 = vmatprep.subr.bf16.mxu0 0
        %2992 = vmatpush1.bf16.msra.mxu0 0
        %2993 = vmatprep.subr.bf16.mxu0 0
        %2994 = vmatpush1.bf16.msra.mxu0 0
        %2995 = vmatprep.subr.bf16.mxu0 0
        %2996 = vmatpush1.bf16.msra.mxu0 0
        %2997 = vmatprep.subr.bf16.mxu0 0
        %2998 = vmatpush1.bf16.msra.mxu0 0
        %2999 = vmatprep.subr.bf16.mxu0 0
        %3000 = vmatpush1.bf16.msra.mxu0 0
        %3001 = vmatprep.subr.bf16.mxu0 0
        %3002 = vmatpush1.bf16.msra.mxu0 0
        %3003 = vmatprep.subr.bf16.mxu0 0
        %3004 = vmatpush1.bf16.msra.mxu0 0
        %3005 = vmatprep.subr.bf16.mxu0 0
        %3006 = vmatpush1.bf16.msra.mxu0 0
        %3007 = vmatprep.subr.bf16.mxu0 0
        %3008 = vmatpush1.bf16.msra.mxu0 0
        %3009 = vmatprep.mubr.bf16.mxu0 0
        %3010 = vmatmul.mubr.bf16.gmra.mrb[0].mxu0 %v2975
        %v3011 = vpop.f32.mrb[0].mxu0
        %v3012 = vadd.f32 0.0, %v3011
        %v3013 = vpop.f32.mrb[0].mxu0
        %v3014 = vpop.f32.mrb[0].mxu0
        %v3015 = vadd.f32 0.0, %v3014
        %v3016 = vpop.f32.mrb[0].mxu0
        %3017 = vdwg.mxu0
        %3019 = vrot.lane.b32.xlu0 %v725, 64
        %v3020 = vpop.permute.xlu0 %3019
        %v3023 = vsel %vm2445, %v2421, 0
        %3025 = vmatprep.subr.bf16.mxu0 0
        %3026 = vmatpush1.bf16.msra.mxu0 %v3020
        %3027 = vmatprep.subr.bf16.mxu0 0
        %3028 = vmatpush1.bf16.msra.mxu0 0
        %3029 = vmatprep.subr.bf16.mxu0 0
        %3030 = vmatpush1.bf16.msra.mxu0 0
        %3031 = vmatprep.subr.bf16.mxu0 0
        %3032 = vmatpush1.bf16.msra.mxu0 0
        %3033 = vmatprep.subr.bf16.mxu0 0
        %3034 = vmatpush1.bf16.msra.mxu0 0
        %3035 = vmatprep.subr.bf16.mxu0 0
        %3036 = vmatpush1.bf16.msra.mxu0 0
        %3037 = vmatprep.subr.bf16.mxu0 0
        %3038 = vmatpush1.bf16.msra.mxu0 0
        %3039 = vmatprep.subr.bf16.mxu0 0
        %3040 = vmatpush1.bf16.msra.mxu0 0
        %3041 = vmatprep.subr.bf16.mxu0 0
        %3042 = vmatpush1.bf16.msra.mxu0 0
        %3043 = vmatprep.subr.bf16.mxu0 0
        %3044 = vmatpush1.bf16.msra.mxu0 0
        %3045 = vmatprep.subr.bf16.mxu0 0
        %3046 = vmatpush1.bf16.msra.mxu0 0
        %3047 = vmatprep.subr.bf16.mxu0 0
        %3048 = vmatpush1.bf16.msra.mxu0 0
        %3049 = vmatprep.subr.bf16.mxu0 0
        %3050 = vmatpush1.bf16.msra.mxu0 0
        %3051 = vmatprep.subr.bf16.mxu0 0
        %3052 = vmatpush1.bf16.msra.mxu0 0
        %3053 = vmatprep.subr.bf16.mxu0 0
        %3054 = vmatpush1.bf16.msra.mxu0 0
        %3055 = vmatprep.subr.bf16.mxu0 0
        %3056 = vmatpush1.bf16.msra.mxu0 0
        %3057 = vmatprep.mubr.bf16.mxu0 0
        %3058 = vmatmul.mubr.bf16.gmra.mrb[0].mxu0 %v3023
        %v3059 = vpop.f32.mrb[0].mxu0
        %v3060 = vadd.f32 0.0, %v3059
        %v3061 = vpop.f32.mrb[0].mxu0
        %v3062 = vpop.f32.mrb[0].mxu0
        %v3063 = vadd.f32 0.0, %v3062
        %v3064 = vpop.f32.mrb[0].mxu0
        %3065 = vdwg.mxu0
        %3067 = vrot.lane.b32.xlu0 %v726, 64
        %v3068 = vpop.permute.xlu0 %3067
        %v3071 = vsel %vm2445, %v2422, 0
        %3073 = vmatprep.subr.bf16.mxu0 0
        %3074 = vmatpush1.bf16.msra.mxu0 %v3068
        %3075 = vmatprep.subr.bf16.mxu0 0
        %3076 = vmatpush1.bf16.msra.mxu0 0
        %3077 = vmatprep.subr.bf16.mxu0 0
        %3078 = vmatpush1.bf16.msra.mxu0 0
        %3079 = vmatprep.subr.bf16.mxu0 0
        %3080 = vmatpush1.bf16.msra.mxu0 0
        %3081 = vmatprep.subr.bf16.mxu0 0
        %3082 = vmatpush1.bf16.msra.mxu0 0
        %3083 = vmatprep.subr.bf16.mxu0 0
        %3084 = vmatpush1.bf16.msra.mxu0 0
        %3085 = vmatprep.subr.bf16.mxu0 0
        %3086 = vmatpush1.bf16.msra.mxu0 0
        %3087 = vmatprep.subr.bf16.mxu0 0
        %3088 = vmatpush1.bf16.msra.mxu0 0
        %3089 = vmatprep.subr.bf16.mxu0 0
        %3090 = vmatpush1.bf16.msra.mxu0 0
        %3091 = vmatprep.subr.bf16.mxu0 0
        %3092 = vmatpush1.bf16.msra.mxu0 0
        %3093 = vmatprep.subr.bf16.mxu0 0
        %3094 = vmatpush1.bf16.msra.mxu0 0
        %3095 = vmatprep.subr.bf16.mxu0 0
        %3096 = vmatpush1.bf16.msra.mxu0 0
        %3097 = vmatprep.subr.bf16.mxu0 0
        %3098 = vmatpush1.bf16.msra.mxu0 0
        %3099 = vmatprep.subr.bf16.mxu0 0
        %3100 = vmatpush1.bf16.msra.mxu0 0
        %3101 = vmatprep.subr.bf16.mxu0 0
        %3102 = vmatpush1.bf16.msra.mxu0 0
        %3103 = vmatprep.subr.bf16.mxu0 0
        %3104 = vmatpush1.bf16.msra.mxu0 0
        %3105 = vmatprep.mubr.bf16.mxu0 0
        %3106 = vmatmul.mubr.bf16.gmra.mrb[0].mxu0 %v3071
        %v3107 = vpop.f32.mrb[0].mxu0
        %v3108 = vadd.f32 0.0, %v3107
        %v3109 = vpop.f32.mrb[0].mxu0
        %v3110 = vpop.f32.mrb[0].mxu0
        %v3111 = vadd.f32 0.0, %v3110
        %v3112 = vpop.f32.mrb[0].mxu0
        %3113 = vdwg.mxu0
        %3115 = vrot.lane.b32.xlu0 %v727, 64
        %v3116 = vpop.permute.xlu0 %3115
        %v3119 = vsel %vm2445, %v2423, 0
        %3121 = vmatprep.subr.bf16.mxu0 0
        %3122 = vmatpush1.bf16.msra.mxu0 %v3116
        %3123 = vmatprep.subr.bf16.mxu0 0
        %3124 = vmatpush1.bf16.msra.mxu0 0
        %3125 = vmatprep.subr.bf16.mxu0 0
        %3126 = vmatpush1.bf16.msra.mxu0 0
        %3127 = vmatprep.subr.bf16.mxu0 0
        %3128 = vmatpush1.bf16.msra.mxu0 0
        %3129 = vmatprep.subr.bf16.mxu0 0
        %3130 = vmatpush1.bf16.msra.mxu0 0
        %3131 = vmatprep.subr.bf16.mxu0 0
        %3132 = vmatpush1.bf16.msra.mxu0 0
        %3133 = vmatprep.subr.bf16.mxu0 0
        %3134 = vmatpush1.bf16.msra.mxu0 0
        %3135 = vmatprep.subr.bf16.mxu0 0
        %3136 = vmatpush1.bf16.msra.mxu0 0
        %3137 = vmatprep.subr.bf16.mxu0 0
        %3138 = vmatpush1.bf16.msra.mxu0 0
        %3139 = vmatprep.subr.bf16.mxu0 0
        %3140 = vmatpush1.bf16.msra.mxu0 0
        %3141 = vmatprep.subr.bf16.mxu0 0
        %3142 = vmatpush1.bf16.msra.mxu0 0
        %3143 = vmatprep.subr.bf16.mxu0 0
        %3144 = vmatpush1.bf16.msra.mxu0 0
        %3145 = vmatprep.subr.bf16.mxu0 0
        %3146 = vmatpush1.bf16.msra.mxu0 0
        %3147 = vmatprep.subr.bf16.mxu0 0
        %3148 = vmatpush1.bf16.msra.mxu0 0
        %3149 = vmatprep.subr.bf16.mxu0 0
        %3150 = vmatpush1.bf16.msra.mxu0 0
        %3151 = vmatprep.subr.bf16.mxu0 0
        %3152 = vmatpush1.bf16.msra.mxu0 0
        %3153 = vmatprep.mubr.bf16.mxu0 0
        %3154 = vmatmul.mubr.bf16.gmra.mrb[0].mxu0 %v3119
        %v3155 = vpop.f32.mrb[0].mxu0
        %v3156 = vadd.f32 0.0, %v3155
        %v3157 = vpop.f32.mrb[0].mxu0
        %v3158 = vpop.f32.mrb[0].mxu0
        %v3159 = vadd.f32 0.0, %v3158
        %v3160 = vpop.f32.mrb[0].mxu0
        %3161 = vdwg.mxu0
        %3163 = vrot.lane.b32.xlu0 %v728, 64
        %v3164 = vpop.permute.xlu0 %3163
        %v3167 = vsel %vm2445, %v2424, 0
        %3169 = vmatprep.subr.bf16.mxu0 0
        %3170 = vmatpush1.bf16.msra.mxu0 %v3164
        %3171 = vmatprep.subr.bf16.mxu0 0
        %3172 = vmatpush1.bf16.msra.mxu0 0
        %3173 = vmatprep.subr.bf16.mxu0 0
        %3174 = vmatpush1.bf16.msra.mxu0 0
        %3175 = vmatprep.subr.bf16.mxu0 0
        %3176 = vmatpush1.bf16.msra.mxu0 0
        %3177 = vmatprep.subr.bf16.mxu0 0
        %3178 = vmatpush1.bf16.msra.mxu0 0
        %3179 = vmatprep.subr.bf16.mxu0 0
        %3180 = vmatpush1.bf16.msra.mxu0 0
        %3181 = vmatprep.subr.bf16.mxu0 0
        %3182 = vmatpush1.bf16.msra.mxu0 0
        %3183 = vmatprep.subr.bf16.mxu0 0
        %3184 = vmatpush1.bf16.msra.mxu0 0
        %3185 = vmatprep.subr.bf16.mxu0 0
        %3186 = vmatpush1.bf16.msra.mxu0 0
        %3187 = vmatprep.subr.bf16.mxu0 0
        %3188 = vmatpush1.bf16.msra.mxu0 0
        %3189 = vmatprep.subr.bf16.mxu0 0
        %3190 = vmatpush1.bf16.msra.mxu0 0
        %3191 = vmatprep.subr.bf16.mxu0 0
        %3192 = vmatpush1.bf16.msra.mxu0 0
        %3193 = vmatprep.subr.bf16.mxu0 0
        %3194 = vmatpush1.bf16.msra.mxu0 0
        %3195 = vmatprep.subr.bf16.mxu0 0
        %3196 = vmatpush1.bf16.msra.mxu0 0
        %3197 = vmatprep.subr.bf16.mxu0 0
        %3198 = vmatpush1.bf16.msra.mxu0 0
        %3199 = vmatprep.subr.bf16.mxu0 0
        %3200 = vmatpush1.bf16.msra.mxu0 0
        %3201 = vmatprep.mubr.bf16.mxu0 0
        %3202 = vmatmul.mubr.bf16.gmra.mrb[0].mxu0 %v3167
        %v3203 = vpop.f32.mrb[0].mxu0
        %v3204 = vadd.f32 0.0, %v3203
        %v3205 = vpop.f32.mrb[0].mxu0
        %v3206 = vpop.f32.mrb[0].mxu0
        %v3207 = vadd.f32 0.0, %v3206
        %v3208 = vpop.f32.mrb[0].mxu0
        %3209 = vdwg.mxu0
        %3211 = vrot.lane.b32.xlu0 %v729, 64
        %v3212 = vpop.permute.xlu0 %3211
        %v3215 = vsel %vm2445, %v2425, 0
        %3217 = vmatprep.subr.bf16.mxu0 0
        %3218 = vmatpush1.bf16.msra.mxu0 %v3212
        %3219 = vmatprep.subr.bf16.mxu0 0
        %3220 = vmatpush1.bf16.msra.mxu0 0
        %3221 = vmatprep.subr.bf16.mxu0 0
        %3222 = vmatpush1.bf16.msra.mxu0 0
        %3223 = vmatprep.subr.bf16.mxu0 0
        %3224 = vmatpush1.bf16.msra.mxu0 0
        %3225 = vmatprep.subr.bf16.mxu0 0
        %3226 = vmatpush1.bf16.msra.mxu0 0
        %3227 = vmatprep.subr.bf16.mxu0 0
        %3228 = vmatpush1.bf16.msra.mxu0 0
        %3229 = vmatprep.subr.bf16.mxu0 0
        %3230 = vmatpush1.bf16.msra.mxu0 0
        %3231 = vmatprep.subr.bf16.mxu0 0
        %3232 = vmatpush1.bf16.msra.mxu0 0
        %3233 = vmatprep.subr.bf16.mxu0 0
        %3234 = vmatpush1.bf16.msra.mxu0 0
        %3235 = vmatprep.subr.bf16.mxu0 0
        %3236 = vmatpush1.bf16.msra.mxu0 0
        %3237 = vmatprep.subr.bf16.mxu0 0
        %3238 = vmatpush1.bf16.msra.mxu0 0
        %3239 = vmatprep.subr.bf16.mxu0 0
        %3240 = vmatpush1.bf16.msra.mxu0 0
        %3241 = vmatprep.subr.bf16.mxu0 0
        %3242 = vmatpush1.bf16.msra.mxu0 0
        %3243 = vmatprep.subr.bf16.mxu0 0
        %3244 = vmatpush1.bf16.msra.mxu0 0
        %3245 = vmatprep.subr.bf16.mxu0 0
        %3246 = vmatpush1.bf16.msra.mxu0 0
        %3247 = vmatprep.subr.bf16.mxu0 0
        %3248 = vmatpush1.bf16.msra.mxu0 0
        %3249 = vmatprep.mubr.bf16.mxu0 0
        %3250 = vmatmul.mubr.bf16.gmra.mrb[0].mxu0 %v3215
        %v3251 = vpop.f32.mrb[0].mxu0
        %v3252 = vadd.f32 0.0, %v3251
        %v3253 = vpop.f32.mrb[0].mxu0
        %v3254 = vpop.f32.mrb[0].mxu0
        %v3255 = vadd.f32 0.0, %v3254
        %v3256 = vpop.f32.mrb[0].mxu0
        %3257 = vdwg.mxu0
        %3259 = vrot.lane.b32.xlu0 %v730, 64
        %v3260 = vpop.permute.xlu0 %3259
        %v3263 = vsel %vm2445, %v2426, 0
        %3265 = vmatprep.subr.bf16.mxu0 0
        %3266 = vmatpush1.bf16.msra.mxu0 %v3260
        %3267 = vmatprep.subr.bf16.mxu0 0
        %3268 = vmatpush1.bf16.msra.mxu0 0
        %3269 = vmatprep.subr.bf16.mxu0 0
        %3270 = vmatpush1.bf16.msra.mxu0 0
        %3271 = vmatprep.subr.bf16.mxu0 0
        %3272 = vmatpush1.bf16.msra.mxu0 0
        %3273 = vmatprep.subr.bf16.mxu0 0
        %3274 = vmatpush1.bf16.msra.mxu0 0
        %3275 = vmatprep.subr.bf16.mxu0 0
        %3276 = vmatpush1.bf16.msra.mxu0 0
        %3277 = vmatprep.subr.bf16.mxu0 0
        %3278 = vmatpush1.bf16.msra.mxu0 0
        %3279 = vmatprep.subr.bf16.mxu0 0
        %3280 = vmatpush1.bf16.msra.mxu0 0
        %3281 = vmatprep.subr.bf16.mxu0 0
        %3282 = vmatpush1.bf16.msra.mxu0 0
        %3283 = vmatprep.subr.bf16.mxu0 0
        %3284 = vmatpush1.bf16.msra.mxu0 0
        %3285 = vmatprep.subr.bf16.mxu0 0
        %3286 = vmatpush1.bf16.msra.mxu0 0
        %3287 = vmatprep.subr.bf16.mxu0 0
        %3288 = vmatpush1.bf16.msra.mxu0 0
        %3289 = vmatprep.subr.bf16.mxu0 0
        %3290 = vmatpush1.bf16.msra.mxu0 0
        %3291 = vmatprep.subr.bf16.mxu0 0
        %3292 = vmatpush1.bf16.msra.mxu0 0
        %3293 = vmatprep.subr.bf16.mxu0 0
        %3294 = vmatpush1.bf16.msra.mxu0 0
        %3295 = vmatprep.subr.bf16.mxu0 0
        %3296 = vmatpush1.bf16.msra.mxu0 0
        %3297 = vmatprep.mubr.bf16.mxu0 0
        %3298 = vmatmul.mubr.bf16.gmra.mrb[0].mxu0 %v3263
        %v3299 = vpop.f32.mrb[0].mxu0
        %v3300 = vadd.f32 0.0, %v3299
        %v3301 = vpop.f32.mrb[0].mxu0
        %v3302 = vpop.f32.mrb[0].mxu0
        %v3303 = vadd.f32 0.0, %v3302
        %v3304 = vpop.f32.mrb[0].mxu0
        %3305 = vdwg.mxu0
        %3307 = vrot.lane.b32.xlu0 %v731, 64
        %v3308 = vpop.permute.xlu0 %3307
        %v3311 = vsel %vm2445, %v2427, 0
        %3313 = vmatprep.subr.bf16.mxu0 0
        %3314 = vmatpush1.bf16.msra.mxu0 %v3308
        %3315 = vmatprep.subr.bf16.mxu0 0
        %3316 = vmatpush1.bf16.msra.mxu0 0
        %3317 = vmatprep.subr.bf16.mxu0 0
        %3318 = vmatpush1.bf16.msra.mxu0 0
        %3319 = vmatprep.subr.bf16.mxu0 0
        %3320 = vmatpush1.bf16.msra.mxu0 0
        %3321 = vmatprep.subr.bf16.mxu0 0
        %3322 = vmatpush1.bf16.msra.mxu0 0
        %3323 = vmatprep.subr.bf16.mxu0 0
        %3324 = vmatpush1.bf16.msra.mxu0 0
        %3325 = vmatprep.subr.bf16.mxu0 0
        %3326 = vmatpush1.bf16.msra.mxu0 0
        %3327 = vmatprep.subr.bf16.mxu0 0
        %3328 = vmatpush1.bf16.msra.mxu0 0
        %3329 = vmatprep.subr.bf16.mxu0 0
        %3330 = vmatpush1.bf16.msra.mxu0 0
        %3331 = vmatprep.subr.bf16.mxu0 0
        %3332 = vmatpush1.bf16.msra.mxu0 0
        %3333 = vmatprep.subr.bf16.mxu0 0
        %3334 = vmatpush1.bf16.msra.mxu0 0
        %3335 = vmatprep.subr.bf16.mxu0 0
        %3336 = vmatpush1.bf16.msra.mxu0 0
        %3337 = vmatprep.subr.bf16.mxu0 0
        %3338 = vmatpush1.bf16.msra.mxu0 0
        %3339 = vmatprep.subr.bf16.mxu0 0
        %3340 = vmatpush1.bf16.msra.mxu0 0
        %3341 = vmatprep.subr.bf16.mxu0 0
        %3342 = vmatpush1.bf16.msra.mxu0 0
        %3343 = vmatprep.subr.bf16.mxu0 0
        %3344 = vmatpush1.bf16.msra.mxu0 0
        %3345 = vmatprep.mubr.bf16.mxu0 0
        %3346 = vmatmul.mubr.bf16.gmra.mrb[0].mxu0 %v3311
        %v3347 = vpop.f32.mrb[0].mxu0
        %v3348 = vadd.f32 0.0, %v3347
        %v3349 = vpop.f32.mrb[0].mxu0
        %v3350 = vpop.f32.mrb[0].mxu0
        %v3351 = vadd.f32 0.0, %v3350
        %v3352 = vpop.f32.mrb[0].mxu0
        %3353 = vdwg.mxu0
        %3355 = vrot.lane.b32.xlu0 %v732, 64
        %v3356 = vpop.permute.xlu0 %3355
        %v3359 = vsel %vm2445, %v2428, 0
        %3361 = vmatprep.subr.bf16.mxu0 0
        %3362 = vmatpush1.bf16.msra.mxu0 %v3356
        %3363 = vmatprep.subr.bf16.mxu0 0
        %3364 = vmatpush1.bf16.msra.mxu0 0
        %3365 = vmatprep.subr.bf16.mxu0 0
        %3366 = vmatpush1.bf16.msra.mxu0 0
        %3367 = vmatprep.subr.bf16.mxu0 0
        %3368 = vmatpush1.bf16.msra.mxu0 0
        %3369 = vmatprep.subr.bf16.mxu0 0
        %3370 = vmatpush1.bf16.msra.mxu0 0
        %3371 = vmatprep.subr.bf16.mxu0 0
        %3372 = vmatpush1.bf16.msra.mxu0 0
        %3373 = vmatprep.subr.bf16.mxu0 0
        %3374 = vmatpush1.bf16.msra.mxu0 0
        %3375 = vmatprep.subr.bf16.mxu0 0
        %3376 = vmatpush1.bf16.msra.mxu0 0
        %3377 = vmatprep.subr.bf16.mxu0 0
        %3378 = vmatpush1.bf16.msra.mxu0 0
        %3379 = vmatprep.subr.bf16.mxu0 0
        %3380 = vmatpush1.bf16.msra.mxu0 0
        %3381 = vmatprep.subr.bf16.mxu0 0
        %3382 = vmatpush1.bf16.msra.mxu0 0
        %3383 = vmatprep.subr.bf16.mxu0 0
        %3384 = vmatpush1.bf16.msra.mxu0 0
        %3385 = vmatprep.subr.bf16.mxu0 0
        %3386 = vmatpush1.bf16.msra.mxu0 0
        %3387 = vmatprep.subr.bf16.mxu0 0
        %3388 = vmatpush1.bf16.msra.mxu0 0
        %3389 = vmatprep.subr.bf16.mxu0 0
        %3390 = vmatpush1.bf16.msra.mxu0 0
        %3391 = vmatprep.subr.bf16.mxu0 0
        %3392 = vmatpush1.bf16.msra.mxu0 0
        %3393 = vmatprep.mubr.bf16.mxu0 0
        %3394 = vmatmul.mubr.bf16.gmra.mrb[0].mxu0 %v3359
        %v3395 = vpop.f32.mrb[0].mxu0
        %v3396 = vadd.f32 0.0, %v3395
        %v3397 = vpop.f32.mrb[0].mxu0
        %v3398 = vpop.f32.mrb[0].mxu0
        %v3399 = vadd.f32 0.0, %v3398
        %v3400 = vpop.f32.mrb[0].mxu0
        %3401 = vdwg.mxu0
        %3403 = vrot.lane.b32.xlu0 %v733, 64
        %v3404 = vpop.permute.xlu0 %3403
        %v3407 = vsel %vm2445, %v2429, 0
        %3409 = vmatprep.subr.bf16.mxu0 0
        %3410 = vmatpush1.bf16.msra.mxu0 %v3404
        %3411 = vmatprep.subr.bf16.mxu0 0
        %3412 = vmatpush1.bf16.msra.mxu0 0
        %3413 = vmatprep.subr.bf16.mxu0 0
        %3414 = vmatpush1.bf16.msra.mxu0 0
        %3415 = vmatprep.subr.bf16.mxu0 0
        %3416 = vmatpush1.bf16.msra.mxu0 0
        %3417 = vmatprep.subr.bf16.mxu0 0
        %3418 = vmatpush1.bf16.msra.mxu0 0
        %3419 = vmatprep.subr.bf16.mxu0 0
        %3420 = vmatpush1.bf16.msra.mxu0 0
        %3421 = vmatprep.subr.bf16.mxu0 0
        %3422 = vmatpush1.bf16.msra.mxu0 0
        %3423 = vmatprep.subr.bf16.mxu0 0
        %3424 = vmatpush1.bf16.msra.mxu0 0
        %3425 = vmatprep.subr.bf16.mxu0 0
        %3426 = vmatpush1.bf16.msra.mxu0 0
        %3427 = vmatprep.subr.bf16.mxu0 0
        %3428 = vmatpush1.bf16.msra.mxu0 0
        %3429 = vmatprep.subr.bf16.mxu0 0
        %3430 = vmatpush1.bf16.msra.mxu0 0
        %3431 = vmatprep.subr.bf16.mxu0 0
        %3432 = vmatpush1.bf16.msra.mxu0 0
        %3433 = vmatprep.subr.bf16.mxu0 0
        %3434 = vmatpush1.bf16.msra.mxu0 0
        %3435 = vmatprep.subr.bf16.mxu0 0
        %3436 = vmatpush1.bf16.msra.mxu0 0
        %3437 = vmatprep.subr.bf16.mxu0 0
        %3438 = vmatpush1.bf16.msra.mxu0 0
        %3439 = vmatprep.subr.bf16.mxu0 0
        %3440 = vmatpush1.bf16.msra.mxu0 0
        %3441 = vmatprep.mubr.bf16.mxu0 0
        %3442 = vmatmul.mubr.bf16.gmra.mrb[0].mxu0 %v3407
        %v3443 = vpop.f32.mrb[0].mxu0
        %v3444 = vadd.f32 0.0, %v3443
        %v3445 = vpop.f32.mrb[0].mxu0
        %v3446 = vpop.f32.mrb[0].mxu0
        %v3447 = vadd.f32 0.0, %v3446
        %v3448 = vpop.f32.mrb[0].mxu0
        %3449 = vdwg.mxu0
        %3451 = vrot.lane.b32.xlu0 %v734, 64
        %v3452 = vpop.permute.xlu0 %3451
        %v3455 = vsel %vm2445, %v2430, 0
        %3457 = vmatprep.subr.bf16.mxu0 0
        %3458 = vmatpush1.bf16.msra.mxu0 %v3452
        %3459 = vmatprep.subr.bf16.mxu0 0
        %3460 = vmatpush1.bf16.msra.mxu0 0
        %3461 = vmatprep.subr.bf16.mxu0 0
        %3462 = vmatpush1.bf16.msra.mxu0 0
        %3463 = vmatprep.subr.bf16.mxu0 0
        %3464 = vmatpush1.bf16.msra.mxu0 0
        %3465 = vmatprep.subr.bf16.mxu0 0
        %3466 = vmatpush1.bf16.msra.mxu0 0
        %3467 = vmatprep.subr.bf16.mxu0 0
        %3468 = vmatpush1.bf16.msra.mxu0 0
        %3469 = vmatprep.subr.bf16.mxu0 0
        %3470 = vmatpush1.bf16.msra.mxu0 0
        %3471 = vmatprep.subr.bf16.mxu0 0
        %3472 = vmatpush1.bf16.msra.mxu0 0
        %3473 = vmatprep.subr.bf16.mxu0 0
        %3474 = vmatpush1.bf16.msra.mxu0 0
        %3475 = vmatprep.subr.bf16.mxu0 0
        %3476 = vmatpush1.bf16.msra.mxu0 0
        %3477 = vmatprep.subr.bf16.mxu0 0
        %3478 = vmatpush1.bf16.msra.mxu0 0
        %3479 = vmatprep.subr.bf16.mxu0 0
        %3480 = vmatpush1.bf16.msra.mxu0 0
        %3481 = vmatprep.subr.bf16.mxu0 0
        %3482 = vmatpush1.bf16.msra.mxu0 0
        %3483 = vmatprep.subr.bf16.mxu0 0
        %3484 = vmatpush1.bf16.msra.mxu0 0
        %3485 = vmatprep.subr.bf16.mxu0 0
        %3486 = vmatpush1.bf16.msra.mxu0 0
        %3487 = vmatprep.subr.bf16.mxu0 0
        %3488 = vmatpush1.bf16.msra.mxu0 0
        %3489 = vmatprep.mubr.bf16.mxu0 0
        %3490 = vmatmul.mubr.bf16.gmra.mrb[0].mxu0 %v3455
        %v3491 = vpop.f32.mrb[0].mxu0
        %v3492 = vadd.f32 0.0, %v3491
        %v3493 = vpop.f32.mrb[0].mxu0
        %v3494 = vpop.f32.mrb[0].mxu0
        %v3495 = vadd.f32 0.0, %v3494
        %v3496 = vpop.f32.mrb[0].mxu0
        %3497 = vdwg.mxu0
        %3499 = vrot.lane.b32.xlu0 %v735, 64
        %v3500 = vpop.permute.xlu0 %3499
        %v3503 = vsel %vm2445, %v2431, 0
        %3505 = vmatprep.subr.bf16.mxu0 0
        %3506 = vmatpush1.bf16.msra.mxu0 %v3500
        %3507 = vmatprep.subr.bf16.mxu0 0
        %3508 = vmatpush1.bf16.msra.mxu0 0
        %3509 = vmatprep.subr.bf16.mxu0 0
        %3510 = vmatpush1.bf16.msra.mxu0 0
        %3511 = vmatprep.subr.bf16.mxu0 0
        %3512 = vmatpush1.bf16.msra.mxu0 0
        %3513 = vmatprep.subr.bf16.mxu0 0
        %3514 = vmatpush1.bf16.msra.mxu0 0
        %3515 = vmatprep.subr.bf16.mxu0 0
        %3516 = vmatpush1.bf16.msra.mxu0 0
        %3517 = vmatprep.subr.bf16.mxu0 0
        %3518 = vmatpush1.bf16.msra.mxu0 0
        %3519 = vmatprep.subr.bf16.mxu0 0
        %3520 = vmatpush1.bf16.msra.mxu0 0
        %3521 = vmatprep.subr.bf16.mxu0 0
        %3522 = vmatpush1.bf16.msra.mxu0 0
        %3523 = vmatprep.subr.bf16.mxu0 0
        %3524 = vmatpush1.bf16.msra.mxu0 0
        %3525 = vmatprep.subr.bf16.mxu0 0
        %3526 = vmatpush1.bf16.msra.mxu0 0
        %3527 = vmatprep.subr.bf16.mxu0 0
        %3528 = vmatpush1.bf16.msra.mxu0 0
        %3529 = vmatprep.subr.bf16.mxu0 0
        %3530 = vmatpush1.bf16.msra.mxu0 0
        %3531 = vmatprep.subr.bf16.mxu0 0
        %3532 = vmatpush1.bf16.msra.mxu0 0
        %3533 = vmatprep.subr.bf16.mxu0 0
        %3534 = vmatpush1.bf16.msra.mxu0 0
        %3535 = vmatprep.subr.bf16.mxu0 0
        %3536 = vmatpush1.bf16.msra.mxu0 0
        %3537 = vmatprep.mubr.bf16.mxu0 0
        %3538 = vmatmul.mubr.bf16.gmra.mrb[0].mxu0 %v3503
        %v3539 = vpop.f32.mrb[0].mxu0
        %v3540 = vadd.f32 0.0, %v3539
        %v3541 = vpop.f32.mrb[0].mxu0
        %v3542 = vpop.f32.mrb[0].mxu0
        %v3543 = vadd.f32 0.0, %v3542
        %v3544 = vpop.f32.mrb[0].mxu0
        %3545 = vdwg.mxu0
        %3547 = vrot.lane.b32.xlu0 %v736, 64
        %v3548 = vpop.permute.xlu0 %3547
        %v3551 = vsel %vm2445, %v2432, 0
        %3553 = vmatprep.subr.bf16.mxu0 0
        %3554 = vmatpush1.bf16.msra.mxu0 %v3548
        %3555 = vmatprep.subr.bf16.mxu0 0
        %3556 = vmatpush1.bf16.msra.mxu0 0
        %3557 = vmatprep.subr.bf16.mxu0 0
        %3558 = vmatpush1.bf16.msra.mxu0 0
        %3559 = vmatprep.subr.bf16.mxu0 0
        %3560 = vmatpush1.bf16.msra.mxu0 0
        %3561 = vmatprep.subr.bf16.mxu0 0
        %3562 = vmatpush1.bf16.msra.mxu0 0
        %3563 = vmatprep.subr.bf16.mxu0 0
        %3564 = vmatpush1.bf16.msra.mxu0 0
        %3565 = vmatprep.subr.bf16.mxu0 0
        %3566 = vmatpush1.bf16.msra.mxu0 0
        %3567 = vmatprep.subr.bf16.mxu0 0
        %3568 = vmatpush1.bf16.msra.mxu0 0
        %3569 = vmatprep.subr.bf16.mxu0 0
        %3570 = vmatpush1.bf16.msra.mxu0 0
        %3571 = vmatprep.subr.bf16.mxu0 0
        %3572 = vmatpush1.bf16.msra.mxu0 0
        %3573 = vmatprep.subr.bf16.mxu0 0
        %3574 = vmatpush1.bf16.msra.mxu0 0
        %3575 = vmatprep.subr.bf16.mxu0 0
        %3576 = vmatpush1.bf16.msra.mxu0 0
        %3577 = vmatprep.subr.bf16.mxu0 0
        %3578 = vmatpush1.bf16.msra.mxu0 0
        %3579 = vmatprep.subr.bf16.mxu0 0
        %3580 = vmatpush1.bf16.msra.mxu0 0
        %3581 = vmatprep.subr.bf16.mxu0 0
        %3582 = vmatpush1.bf16.msra.mxu0 0
        %3583 = vmatprep.subr.bf16.mxu0 0
        %3584 = vmatpush1.bf16.msra.mxu0 0
        %3585 = vmatprep.mubr.bf16.mxu0 0
        %3586 = vmatmul.mubr.bf16.gmra.mrb[0].mxu0 %v3551
        %v3587 = vpop.f32.mrb[0].mxu0
        %v3588 = vadd.f32 0.0, %v3587
        %v3589 = vpop.f32.mrb[0].mxu0
        %v3590 = vpop.f32.mrb[0].mxu0
        %v3591 = vadd.f32 0.0, %v3590
        %v3592 = vpop.f32.mrb[0].mxu0
        %3593 = vdwg.mxu0
        %3595 = vrot.lane.b32.xlu0 %v737, 64
        %v3596 = vpop.permute.xlu0 %3595
        %v3599 = vsel %vm2445, %v2433, 0
        %3601 = vmatprep.subr.bf16.mxu0 0
        %3602 = vmatpush1.bf16.msra.mxu0 %v3596
        %3603 = vmatprep.subr.bf16.mxu0 0
        %3604 = vmatpush1.bf16.msra.mxu0 0
        %3605 = vmatprep.subr.bf16.mxu0 0
        %3606 = vmatpush1.bf16.msra.mxu0 0
        %3607 = vmatprep.subr.bf16.mxu0 0
        %3608 = vmatpush1.bf16.msra.mxu0 0
        %3609 = vmatprep.subr.bf16.mxu0 0
        %3610 = vmatpush1.bf16.msra.mxu0 0
        %3611 = vmatprep.subr.bf16.mxu0 0
        %3612 = vmatpush1.bf16.msra.mxu0 0
        %3613 = vmatprep.subr.bf16.mxu0 0
        %3614 = vmatpush1.bf16.msra.mxu0 0
        %3615 = vmatprep.subr.bf16.mxu0 0
        %3616 = vmatpush1.bf16.msra.mxu0 0
        %3617 = vmatprep.subr.bf16.mxu0 0
        %3618 = vmatpush1.bf16.msra.mxu0 0
        %3619 = vmatprep.subr.bf16.mxu0 0
        %3620 = vmatpush1.bf16.msra.mxu0 0
        %3621 = vmatprep.subr.bf16.mxu0 0
        %3622 = vmatpush1.bf16.msra.mxu0 0
        %3623 = vmatprep.subr.bf16.mxu0 0
        %3624 = vmatpush1.bf16.msra.mxu0 0
        %3625 = vmatprep.subr.bf16.mxu0 0
        %3626 = vmatpush1.bf16.msra.mxu0 0
        %3627 = vmatprep.subr.bf16.mxu0 0
        %3628 = vmatpush1.bf16.msra.mxu0 0
        %3629 = vmatprep.subr.bf16.mxu0 0
        %3630 = vmatpush1.bf16.msra.mxu0 0
        %3631 = vmatprep.subr.bf16.mxu0 0
        %3632 = vmatpush1.bf16.msra.mxu0 0
        %3633 = vmatprep.mubr.bf16.mxu0 0
        %3634 = vmatmul.mubr.bf16.gmra.mrb[0].mxu0 %v3599
        %v3635 = vpop.f32.mrb[0].mxu0
        %v3636 = vadd.f32 0.0, %v3635
        %v3637 = vpop.f32.mrb[0].mxu0
        %v3638 = vpop.f32.mrb[0].mxu0
        %v3639 = vadd.f32 0.0, %v3638
        %v3640 = vpop.f32.mrb[0].mxu0
        %3641 = vdwg.mxu0
        %3643 = vrot.lane.b32.xlu0 %v738, 64
        %v3644 = vpop.permute.xlu0 %3643
        %v3647 = vsel %vm2445, %v2434, 0
        %3649 = vmatprep.subr.bf16.mxu0 0
        %3650 = vmatpush1.bf16.msra.mxu0 %v3644
        %3651 = vmatprep.subr.bf16.mxu0 0
        %3652 = vmatpush1.bf16.msra.mxu0 0
        %3653 = vmatprep.subr.bf16.mxu0 0
        %3654 = vmatpush1.bf16.msra.mxu0 0
        %3655 = vmatprep.subr.bf16.mxu0 0
        %3656 = vmatpush1.bf16.msra.mxu0 0
        %3657 = vmatprep.subr.bf16.mxu0 0
        %3658 = vmatpush1.bf16.msra.mxu0 0
        %3659 = vmatprep.subr.bf16.mxu0 0
        %3660 = vmatpush1.bf16.msra.mxu0 0
        %3661 = vmatprep.subr.bf16.mxu0 0
        %3662 = vmatpush1.bf16.msra.mxu0 0
        %3663 = vmatprep.subr.bf16.mxu0 0
        %3664 = vmatpush1.bf16.msra.mxu0 0
        %3665 = vmatprep.subr.bf16.mxu0 0
        %3666 = vmatpush1.bf16.msra.mxu0 0
        %3667 = vmatprep.subr.bf16.mxu0 0
        %3668 = vmatpush1.bf16.msra.mxu0 0
        %3669 = vmatprep.subr.bf16.mxu0 0
        %3670 = vmatpush1.bf16.msra.mxu0 0
        %3671 = vmatprep.subr.bf16.mxu0 0
        %3672 = vmatpush1.bf16.msra.mxu0 0
        %3673 = vmatprep.subr.bf16.mxu0 0
        %3674 = vmatpush1.bf16.msra.mxu0 0
        %3675 = vmatprep.subr.bf16.mxu0 0
        %3676 = vmatpush1.bf16.msra.mxu0 0
        %3677 = vmatprep.subr.bf16.mxu0 0
        %3678 = vmatpush1.bf16.msra.mxu0 0
        %3679 = vmatprep.subr.bf16.mxu0 0
        %3680 = vmatpush1.bf16.msra.mxu0 0
        %3681 = vmatprep.mubr.bf16.mxu0 0
        %3682 = vmatmul.mubr.bf16.gmra.mrb[0].mxu0 %v3647
        %v3683 = vpop.f32.mrb[0].mxu0
        %v3684 = vadd.f32 0.0, %v3683
        %v3685 = vpop.f32.mrb[0].mxu0
        %v3686 = vpop.f32.mrb[0].mxu0
        %v3687 = vadd.f32 0.0, %v3686
        %v3688 = vpop.f32.mrb[0].mxu0
        %3689 = vdwg.mxu0
        %3691 = vrot.lane.b32.xlu0 %v739, 64
        %v3692 = vpop.permute.xlu0 %3691
        %v3695 = vsel %vm2445, %v2435, 0
        %3697 = vmatprep.subr.bf16.mxu0 0
        %3698 = vmatpush1.bf16.msra.mxu0 %v3692
        %3699 = vmatprep.subr.bf16.mxu0 0
        %3700 = vmatpush1.bf16.msra.mxu0 0
        %3701 = vmatprep.subr.bf16.mxu0 0
        %3702 = vmatpush1.bf16.msra.mxu0 0
        %3703 = vmatprep.subr.bf16.mxu0 0
        %3704 = vmatpush1.bf16.msra.mxu0 0
        %3705 = vmatprep.subr.bf16.mxu0 0
        %3706 = vmatpush1.bf16.msra.mxu0 0
        %3707 = vmatprep.subr.bf16.mxu0 0
        %3708 = vmatpush1.bf16.msra.mxu0 0
        %3709 = vmatprep.subr.bf16.mxu0 0
        %3710 = vmatpush1.bf16.msra.mxu0 0
        %3711 = vmatprep.subr.bf16.mxu0 0
        %3712 = vmatpush1.bf16.msra.mxu0 0
        %3713 = vmatprep.subr.bf16.mxu0 0
        %3714 = vmatpush1.bf16.msra.mxu0 0
        %3715 = vmatprep.subr.bf16.mxu0 0
        %3716 = vmatpush1.bf16.msra.mxu0 0
        %3717 = vmatprep.subr.bf16.mxu0 0
        %3718 = vmatpush1.bf16.msra.mxu0 0
        %3719 = vmatprep.subr.bf16.mxu0 0
        %3720 = vmatpush1.bf16.msra.mxu0 0
        %3721 = vmatprep.subr.bf16.mxu0 0
        %3722 = vmatpush1.bf16.msra.mxu0 0
        %3723 = vmatprep.subr.bf16.mxu0 0
        %3724 = vmatpush1.bf16.msra.mxu0 0
        %3725 = vmatprep.subr.bf16.mxu0 0
        %3726 = vmatpush1.bf16.msra.mxu0 0
        %3727 = vmatprep.subr.bf16.mxu0 0
        %3728 = vmatpush1.bf16.msra.mxu0 0
        %3729 = vmatprep.mubr.bf16.mxu0 0
        %3730 = vmatmul.mubr.bf16.gmra.mrb[0].mxu0 %v3695
        %v3731 = vpop.f32.mrb[0].mxu0
        %v3732 = vadd.f32 0.0, %v3731
        %v3733 = vpop.f32.mrb[0].mxu0
        %v3734 = vpop.f32.mrb[0].mxu0
        %v3735 = vadd.f32 0.0, %v3734
        %v3736 = vpop.f32.mrb[0].mxu0
        %3737 = vdwg.mxu0
        %3739 = vrot.lane.b32.xlu0 %v740, 64
        %v3740 = vpop.permute.xlu0 %3739
        %v3743 = vsel %vm2445, %v2436, 0
        %3745 = vmatprep.subr.bf16.mxu0 0
        %3746 = vmatpush1.bf16.msra.mxu0 %v3740
        %3747 = vmatprep.subr.bf16.mxu0 0
        %3748 = vmatpush1.bf16.msra.mxu0 0
        %3749 = vmatprep.subr.bf16.mxu0 0
        %3750 = vmatpush1.bf16.msra.mxu0 0
        %3751 = vmatprep.subr.bf16.mxu0 0
        %3752 = vmatpush1.bf16.msra.mxu0 0
        %3753 = vmatprep.subr.bf16.mxu0 0
        %3754 = vmatpush1.bf16.msra.mxu0 0
        %3755 = vmatprep.subr.bf16.mxu0 0
        %3756 = vmatpush1.bf16.msra.mxu0 0
        %3757 = vmatprep.subr.bf16.mxu0 0
        %3758 = vmatpush1.bf16.msra.mxu0 0
        %3759 = vmatprep.subr.bf16.mxu0 0
        %3760 = vmatpush1.bf16.msra.mxu0 0
        %3761 = vmatprep.subr.bf16.mxu0 0
        %3762 = vmatpush1.bf16.msra.mxu0 0
        %3763 = vmatprep.subr.bf16.mxu0 0
        %3764 = vmatpush1.bf16.msra.mxu0 0
        %3765 = vmatprep.subr.bf16.mxu0 0
        %3766 = vmatpush1.bf16.msra.mxu0 0
        %3767 = vmatprep.subr.bf16.mxu0 0
        %3768 = vmatpush1.bf16.msra.mxu0 0
        %3769 = vmatprep.subr.bf16.mxu0 0
        %3770 = vmatpush1.bf16.msra.mxu0 0
        %3771 = vmatprep.subr.bf16.mxu0 0
        %3772 = vmatpush1.bf16.msra.mxu0 0
        %3773 = vmatprep.subr.bf16.mxu0 0
        %3774 = vmatpush1.bf16.msra.mxu0 0
        %3775 = vmatprep.subr.bf16.mxu0 0
        %3776 = vmatpush1.bf16.msra.mxu0 0
        %3777 = vmatprep.mubr.bf16.mxu0 0
        %3778 = vmatmul.mubr.bf16.gmra.mrb[0].mxu0 %v3743
        %v3779 = vpop.f32.mrb[0].mxu0
        %v3780 = vadd.f32 0.0, %v3779
        %v3781 = vpop.f32.mrb[0].mxu0
        %v3782 = vpop.f32.mrb[0].mxu0
        %v3783 = vadd.f32 0.0, %v3782
        %v3784 = vpop.f32.mrb[0].mxu0
        %3785 = vdwg.mxu0
        %3787 = vrot.lane.b32.xlu0 %v741, 64
        %v3788 = vpop.permute.xlu0 %3787
        %v3791 = vsel %vm2445, %v2437, 0
        %3793 = vmatprep.subr.bf16.mxu0 0
        %3794 = vmatpush1.bf16.msra.mxu0 %v3788
        %3795 = vmatprep.subr.bf16.mxu0 0
        %3796 = vmatpush1.bf16.msra.mxu0 0
        %3797 = vmatprep.subr.bf16.mxu0 0
        %3798 = vmatpush1.bf16.msra.mxu0 0
        %3799 = vmatprep.subr.bf16.mxu0 0
        %3800 = vmatpush1.bf16.msra.mxu0 0
        %3801 = vmatprep.subr.bf16.mxu0 0
        %3802 = vmatpush1.bf16.msra.mxu0 0
        %3803 = vmatprep.subr.bf16.mxu0 0
        %3804 = vmatpush1.bf16.msra.mxu0 0
        %3805 = vmatprep.subr.bf16.mxu0 0
        %3806 = vmatpush1.bf16.msra.mxu0 0
        %3807 = vmatprep.subr.bf16.mxu0 0
        %3808 = vmatpush1.bf16.msra.mxu0 0
        %3809 = vmatprep.subr.bf16.mxu0 0
        %3810 = vmatpush1.bf16.msra.mxu0 0
        %3811 = vmatprep.subr.bf16.mxu0 0
        %3812 = vmatpush1.bf16.msra.mxu0 0
        %3813 = vmatprep.subr.bf16.mxu0 0
        %3814 = vmatpush1.bf16.msra.mxu0 0
        %3815 = vmatprep.subr.bf16.mxu0 0
        %3816 = vmatpush1.bf16.msra.mxu0 0
        %3817 = vmatprep.subr.bf16.mxu0 0
        %3818 = vmatpush1.bf16.msra.mxu0 0
        %3819 = vmatprep.subr.bf16.mxu0 0
        %3820 = vmatpush1.bf16.msra.mxu0 0
        %3821 = vmatprep.subr.bf16.mxu0 0
        %3822 = vmatpush1.bf16.msra.mxu0 0
        %3823 = vmatprep.subr.bf16.mxu0 0
        %3824 = vmatpush1.bf16.msra.mxu0 0
        %3825 = vmatprep.mubr.bf16.mxu0 0
        %3826 = vmatmul.mubr.bf16.gmra.mrb[0].mxu0 %v3791
        %v3827 = vpop.f32.mrb[0].mxu0
        %v3828 = vadd.f32 0.0, %v3827
        %v3829 = vpop.f32.mrb[0].mxu0
        %v3830 = vpop.f32.mrb[0].mxu0
        %v3831 = vadd.f32 0.0, %v3830
        %v3832 = vpop.f32.mrb[0].mxu0
        %3833 = vdwg.mxu0
        %3835 = vrot.lane.b32.xlu0 %v742, 64
        %v3836 = vpop.permute.xlu0 %3835
        %v3839 = vsel %vm2445, %v2438, 0
        %3841 = vmatprep.subr.bf16.mxu0 0
        %3842 = vmatpush1.bf16.msra.mxu0 %v3836
        %3843 = vmatprep.subr.bf16.mxu0 0
        %3844 = vmatpush1.bf16.msra.mxu0 0
        %3845 = vmatprep.subr.bf16.mxu0 0
        %3846 = vmatpush1.bf16.msra.mxu0 0
        %3847 = vmatprep.subr.bf16.mxu0 0
        %3848 = vmatpush1.bf16.msra.mxu0 0
        %3849 = vmatprep.subr.bf16.mxu0 0
        %3850 = vmatpush1.bf16.msra.mxu0 0
        %3851 = vmatprep.subr.bf16.mxu0 0
        %3852 = vmatpush1.bf16.msra.mxu0 0
        %3853 = vmatprep.subr.bf16.mxu0 0
        %3854 = vmatpush1.bf16.msra.mxu0 0
        %3855 = vmatprep.subr.bf16.mxu0 0
        %3856 = vmatpush1.bf16.msra.mxu0 0
        %3857 = vmatprep.subr.bf16.mxu0 0
        %3858 = vmatpush1.bf16.msra.mxu0 0
        %3859 = vmatprep.subr.bf16.mxu0 0
        %3860 = vmatpush1.bf16.msra.mxu0 0
        %3861 = vmatprep.subr.bf16.mxu0 0
        %3862 = vmatpush1.bf16.msra.mxu0 0
        %3863 = vmatprep.subr.bf16.mxu0 0
        %3864 = vmatpush1.bf16.msra.mxu0 0
        %3865 = vmatprep.subr.bf16.mxu0 0
        %3866 = vmatpush1.bf16.msra.mxu0 0
        %3867 = vmatprep.subr.bf16.mxu0 0
        %3868 = vmatpush1.bf16.msra.mxu0 0
        %3869 = vmatprep.subr.bf16.mxu0 0
        %3870 = vmatpush1.bf16.msra.mxu0 0
        %3871 = vmatprep.subr.bf16.mxu0 0
        %3872 = vmatpush1.bf16.msra.mxu0 0
        %3873 = vmatprep.mubr.bf16.mxu0 0
        %3874 = vmatmul.mubr.bf16.gmra.mrb[0].mxu0 %v3839
        %v3875 = vpop.f32.mrb[0].mxu0
        %v3876 = vadd.f32 0.0, %v3875
        %v3877 = vpop.f32.mrb[0].mxu0
        %v3878 = vpop.f32.mrb[0].mxu0
        %v3879 = vadd.f32 0.0, %v3878
        %v3880 = vpop.f32.mrb[0].mxu0
        %3881 = vdwg.mxu0
        %3883 = vrot.lane.b32.xlu0 %v743, 64
        %v3884 = vpop.permute.xlu0 %3883
        %v3887 = vsel %vm2445, %v2439, 0
        %3889 = vmatprep.subr.bf16.mxu0 0
        %3890 = vmatpush1.bf16.msra.mxu0 %v3884
        %3891 = vmatprep.subr.bf16.mxu0 0
        %3892 = vmatpush1.bf16.msra.mxu0 0
        %3893 = vmatprep.subr.bf16.mxu0 0
        %3894 = vmatpush1.bf16.msra.mxu0 0
        %3895 = vmatprep.subr.bf16.mxu0 0
        %3896 = vmatpush1.bf16.msra.mxu0 0
        %3897 = vmatprep.subr.bf16.mxu0 0
        %3898 = vmatpush1.bf16.msra.mxu0 0
        %3899 = vmatprep.subr.bf16.mxu0 0
        %3900 = vmatpush1.bf16.msra.mxu0 0
        %3901 = vmatprep.subr.bf16.mxu0 0
        %3902 = vmatpush1.bf16.msra.mxu0 0
        %3903 = vmatprep.subr.bf16.mxu0 0
        %3904 = vmatpush1.bf16.msra.mxu0 0
        %3905 = vmatprep.subr.bf16.mxu0 0
        %3906 = vmatpush1.bf16.msra.mxu0 0
        %3907 = vmatprep.subr.bf16.mxu0 0
        %3908 = vmatpush1.bf16.msra.mxu0 0
        %3909 = vmatprep.subr.bf16.mxu0 0
        %3910 = vmatpush1.bf16.msra.mxu0 0
        %3911 = vmatprep.subr.bf16.mxu0 0
        %3912 = vmatpush1.bf16.msra.mxu0 0
        %3913 = vmatprep.subr.bf16.mxu0 0
        %3914 = vmatpush1.bf16.msra.mxu0 0
        %3915 = vmatprep.subr.bf16.mxu0 0
        %3916 = vmatpush1.bf16.msra.mxu0 0
        %3917 = vmatprep.subr.bf16.mxu0 0
        %3918 = vmatpush1.bf16.msra.mxu0 0
        %3919 = vmatprep.subr.bf16.mxu0 0
        %3920 = vmatpush1.bf16.msra.mxu0 0
        %3921 = vmatprep.mubr.bf16.mxu0 0
        %3922 = vmatmul.mubr.bf16.gmra.mrb[0].mxu0 %v3887
        %v3923 = vpop.f32.mrb[0].mxu0
        %v3924 = vadd.f32 0.0, %v3923
        %v3925 = vpop.f32.mrb[0].mxu0
        %v3926 = vpop.f32.mrb[0].mxu0
        %v3927 = vadd.f32 0.0, %v3926
        %v3928 = vpop.f32.mrb[0].mxu0
        %3929 = vdwg.mxu0
        %3931 = vrot.lane.b32.xlu0 %v744, 64
        %v3932 = vpop.permute.xlu0 %3931
        %v3935 = vsel %vm2445, %v2440, 0
        %3937 = vmatprep.subr.bf16.mxu0 0
        %3938 = vmatpush1.bf16.msra.mxu0 %v3932
        %3939 = vmatprep.subr.bf16.mxu0 0
        %3940 = vmatpush1.bf16.msra.mxu0 0
        %3941 = vmatprep.subr.bf16.mxu0 0
        %3942 = vmatpush1.bf16.msra.mxu0 0
        %3943 = vmatprep.subr.bf16.mxu0 0
        %3944 = vmatpush1.bf16.msra.mxu0 0
        %3945 = vmatprep.subr.bf16.mxu0 0
        %3946 = vmatpush1.bf16.msra.mxu0 0
        %3947 = vmatprep.subr.bf16.mxu0 0
        %3948 = vmatpush1.bf16.msra.mxu0 0
        %3949 = vmatprep.subr.bf16.mxu0 0
        %3950 = vmatpush1.bf16.msra.mxu0 0
        %3951 = vmatprep.subr.bf16.mxu0 0
        %3952 = vmatpush1.bf16.msra.mxu0 0
        %3953 = vmatprep.subr.bf16.mxu0 0
        %3954 = vmatpush1.bf16.msra.mxu0 0
        %3955 = vmatprep.subr.bf16.mxu0 0
        %3956 = vmatpush1.bf16.msra.mxu0 0
        %3957 = vmatprep.subr.bf16.mxu0 0
        %3958 = vmatpush1.bf16.msra.mxu0 0
        %3959 = vmatprep.subr.bf16.mxu0 0
        %3960 = vmatpush1.bf16.msra.mxu0 0
        %3961 = vmatprep.subr.bf16.mxu0 0
        %3962 = vmatpush1.bf16.msra.mxu0 0
        %3963 = vmatprep.subr.bf16.mxu0 0
        %3964 = vmatpush1.bf16.msra.mxu0 0
        %3965 = vmatprep.subr.bf16.mxu0 0
        %3966 = vmatpush1.bf16.msra.mxu0 0
        %3967 = vmatprep.subr.bf16.mxu0 0
        %3968 = vmatpush1.bf16.msra.mxu0 0
        %3969 = vmatprep.mubr.bf16.mxu0 0
        %3970 = vmatmul.mubr.bf16.gmra.mrb[0].mxu0 %v3935
        %v3971 = vpop.f32.mrb[0].mxu0
        %v3972 = vadd.f32 0.0, %v3971
        %v3973 = vpop.f32.mrb[0].mxu0
        %v3974 = vpop.f32.mrb[0].mxu0
        %v3975 = vadd.f32 0.0, %v3974
        %v3976 = vpop.f32.mrb[0].mxu0
        %3977 = vdwg.mxu0
        %v3978 = vadd.f32 %v2484, %v2676
        %v3979 = vadd.f32 %v2487, %v2679
        %v3980 = vadd.f32 %v2532, %v2724
        %v3981 = vadd.f32 %v2535, %v2727
        %v3982 = vadd.f32 %v2580, %v2772
        %v3983 = vadd.f32 %v2583, %v2775
        %v3984 = vadd.f32 %v2628, %v2820
        %v3985 = vadd.f32 %v2631, %v2823
        %v3986 = vadd.f32 %v3978, %v2868
        %v3987 = vadd.f32 %v3979, %v2871
        %v3988 = vadd.f32 %v3980, %v2916
        %v3989 = vadd.f32 %v3981, %v2919
        %v3990 = vadd.f32 %v3982, %v2964
        %v3991 = vadd.f32 %v3983, %v2967
        %v3992 = vadd.f32 %v3984, %v3012
        %v3993 = vadd.f32 %v3985, %v3015
        %v3994 = vadd.f32 %v3986, %v3060
        %v3995 = vadd.f32 %v3987, %v3063
        %v3996 = vadd.f32 %v3988, %v3108
        %v3997 = vadd.f32 %v3989, %v3111
        %v3998 = vadd.f32 %v3990, %v3156
        %v3999 = vadd.f32 %v3991, %v3159
        %v4000 = vadd.f32 %v3992, %v3204
        %v4001 = vadd.f32 %v3993, %v3207
        %v4002 = vadd.f32 %v3994, %v3252
        %v4003 = vadd.f32 %v3995, %v3255
        %v4004 = vadd.f32 %v3996, %v3300
        %v4005 = vadd.f32 %v3997, %v3303
        %v4006 = vadd.f32 %v3998, %v3348
        %v4007 = vadd.f32 %v3999, %v3351
        %v4008 = vadd.f32 %v4000, %v3396
        %v4009 = vadd.f32 %v4001, %v3399
        %v4010 = vadd.f32 %v4002, %v3444
        %v4011 = vadd.f32 %v4003, %v3447
        %v4012 = vadd.f32 %v4004, %v3492
        %v4013 = vadd.f32 %v4005, %v3495
        %v4014 = vadd.f32 %v4006, %v3540
        %v4015 = vadd.f32 %v4007, %v3543
        %v4016 = vadd.f32 %v4008, %v3588
        %v4017 = vadd.f32 %v4009, %v3591
        %v4018 = vadd.f32 %v4010, %v3636
        %v4019 = vadd.f32 %v4011, %v3639
        %v4020 = vadd.f32 %v4012, %v3684
        %v4021 = vadd.f32 %v4013, %v3687
        %v4022 = vadd.f32 %v4014, %v3732
        %v4023 = vadd.f32 %v4015, %v3735
        %v4024 = vadd.f32 %v4016, %v3780
        %v4025 = vadd.f32 %v4017, %v3783
        %v4026 = vadd.f32 %v4018, %v3828
        %v4027 = vadd.f32 %v4019, %v3831
        %v4028 = vadd.f32 %v4020, %v3876
        %v4029 = vadd.f32 %v4021, %v3879
        %v4030 = vadd.f32 %v4022, %v3924
        %v4031 = vadd.f32 %v4023, %v3927
        %v4032 = vadd.f32 %v4024, %v3972
        %v4033 = vadd.f32 %v4025, %v3975
        %v4034 = vmul.f32 %v4026, 0.5
        %v4035 = vmul.f32 %v4027, 0.5
        %v4036 = vadd.f32 %v4034, 0.0
        %v4037 = vadd.f32 %v4035, 0.0
        %vm4038 = vcmp.ge.f32.partialorder %v4036, 0.5
        %vm4039 = vcmp.ge.f32.partialorder %v4037, 0.5
        %v4040 = vsel %vm4038, 1.0, 0.0
        %v4041 = vsel %vm4039, 1.0, 0.0
        %v4042 = vsel %vm4038, 0.0, %v4036
        %v4043 = vsel %vm4039, 0.0, %v4037
        %v4044 = vsub.f32 %v4028, %v4042
        %v4045 = vsub.f32 %v4029, %v4043
        %v4046 = vmul.f32 %v4044, 0.5
        %v4047 = vmul.f32 %v4045, 0.5
        %v4048 = vadd.f32 %v4042, %v4046
        %v4049 = vadd.f32 %v4043, %v4047
        %vm4050 = vcmp.ge.f32.partialorder %v4048, 0.5
        %vm4051 = vcmp.ge.f32.partialorder %v4049, 0.5
        %v4052 = vsel %vm4050, 1.0, 0.0
        %v4053 = vsel %vm4051, 1.0, 0.0
        %v4054 = vsel %vm4050, 0.0, %v4048
        %v4055 = vsel %vm4051, 0.0, %v4049
        %v4056 = vsub.f32 %v4030, %v4054
        %v4057 = vsub.f32 %v4031, %v4055
        %v4058 = vmul.f32 %v4056, 0.5
        %v4059 = vmul.f32 %v4057, 0.5
        %v4060 = vadd.f32 %v4054, %v4058
        %v4061 = vadd.f32 %v4055, %v4059
        %vm4062 = vcmp.ge.f32.partialorder %v4060, 0.5
        %vm4063 = vcmp.ge.f32.partialorder %v4061, 0.5
        %v4064 = vsel %vm4062, 1.0, 0.0
        %v4065 = vsel %vm4063, 1.0, 0.0
        %v4066 = vsel %vm4062, 0.0, %v4060
        %v4067 = vsel %vm4063, 0.0, %v4061
        %v4068 = vsub.f32 %v4032, %v4066
        %v4069 = vsub.f32 %v4033, %v4067
        %v4070 = vmul.f32 %v4068, 0.5
        %v4071 = vmul.f32 %v4069, 0.5
        %v4072 = vadd.f32 %v4066, %v4070
        %v4073 = vadd.f32 %v4067, %v4071
        %vm4074 = vcmp.ge.f32.partialorder %v4072, 0.5
        %vm4075 = vcmp.ge.f32.partialorder %v4073, 0.5
        %v4076 = vsel %vm4074, 1.0, 0.0
        %v4077 = vsel %vm4075, 1.0, 0.0
        %v4078 = vld [vmem:[#allocation7] sm:$0xff]
        %v4079 = vld [vmem:[#allocation7 + $0x8] sm:$0xff]
        %v4080 = vld [vmem:[#allocation7 + $0x10] sm:$0xff]
        %v4081 = vld [vmem:[#allocation7 + $0x18] sm:$0xff]
        %v4082 = vld [vmem:[%s4] sm:$0x1]
        %v4084 = vlaneseq
        %v4085 = vshrl.u32 %v4084, 7
        %v4086 = vsub.s32 0, %v4085
        %v4087 = vrot.slane %v4082, %v4086
        %v4090 = vsel %vm359, %v4040, 0
        %v4093 = vsel %vm359, %v4041, 0
        %v4096 = vsel %vm359, %v4052, 0
        %v4099 = vsel %vm359, %v4053, 0
        %v4102 = vsel %vm359, %v4064, 0
        %v4105 = vsel %vm359, %v4065, 0
        %v4108 = vsel %vm359, %v4076, 0
        %v4111 = vsel %vm359, %v4077, 0
        %4113 = vmatprep.subr.mxu0 0.0
        %4114 = vmatpush1.msra.mxu0 %v4078
        %4115 = vmatprep.subr.mxu0 0.0
        %4116 = vmatpush1.msra.mxu0 %v4079
        %4117 = vmatprep.subr.mxu0 0.0
        %4118 = vmatpush1.msra.mxu0 %v4080
        %4119 = vmatprep.subr.mxu0 0.0
        %4120 = vmatpush1.msra.mxu0 %v4081
        %4121 = vmatprep.subr.mxu0 0.0
        %4122 = vmatpush1.msra.mxu0 0.0
        %4123 = vmatprep.subr.mxu0 0.0
        %4124 = vmatpush1.msra.mxu0 0.0
        %4125 = vmatprep.subr.mxu0 0.0
        %4126 = vmatpush1.msra.mxu0 0.0
        %4127 = vmatprep.subr.mxu0 0.0
        %4128 = vmatpush1.msra.mxu0 0.0
        %4129 = vmatprep.subr.mxu0 0.0
        %4130 = vmatpush1.msra.mxu0 0.0
        %4131 = vmatprep.subr.mxu0 0.0
        %4132 = vmatpush1.msra.mxu0 0.0
        %4133 = vmatprep.subr.mxu0 0.0
        %4134 = vmatpush1.msra.mxu0 0.0
        %4135 = vmatprep.subr.mxu0 0.0
        %4136 = vmatpush1.msra.mxu0 0.0
        %4137 = vmatprep.subr.mxu0 0.0
        %4138 = vmatpush1.msra.mxu0 0.0
        %4139 = vmatprep.subr.mxu0 0.0
        %4140 = vmatpush1.msra.mxu0 0.0
        %4141 = vmatprep.subr.mxu0 0.0
        %4142 = vmatpush1.msra.mxu0 0.0
        %4143 = vmatprep.subr.mxu0 0.0
        %4144 = vmatpush1.msra.mxu0 0.0
        %4145 = vmatprep.subr.mxu0 0.0
        %4146 = vmatpush1.msra.mxu0 0.0
        %4147 = vmatprep.subr.mxu0 0.0
        %4148 = vmatpush1.msra.mxu0 0.0
        %4149 = vmatprep.subr.mxu0 0.0
        %4150 = vmatpush1.msra.mxu0 0.0
        %4151 = vmatprep.subr.mxu0 0.0
        %4152 = vmatpush1.msra.mxu0 0.0
        %4153 = vmatprep.subr.mxu0 0.0
        %4154 = vmatpush1.msra.mxu0 0.0
        %4155 = vmatprep.subr.mxu0 0.0
        %4156 = vmatpush1.msra.mxu0 0.0
        %4157 = vmatprep.subr.mxu0 0.0
        %4158 = vmatpush1.msra.mxu0 0.0
        %4159 = vmatprep.subr.mxu0 0.0
        %4160 = vmatpush1.msra.mxu0 0.0
        %4161 = vmatprep.subr.mxu0 0.0
        %4162 = vmatpush1.msra.mxu0 0.0
        %4163 = vmatprep.subr.mxu0 0.0
        %4164 = vmatpush1.msra.mxu0 0.0
        %4165 = vmatprep.subr.mxu0 0.0
        %4166 = vmatpush1.msra.mxu0 0.0
        %4167 = vmatprep.subr.mxu0 0.0
        %4168 = vmatpush1.msra.mxu0 0.0
        %4169 = vmatprep.subr.mxu0 0.0
        %4170 = vmatpush1.msra.mxu0 0.0
        %4171 = vmatprep.subr.mxu0 0.0
        %4172 = vmatpush1.msra.mxu0 0.0
        %4173 = vmatprep.subr.mxu0 0.0
        %4174 = vmatpush1.msra.mxu0 0.0
        %4175 = vmatprep.subr.mxu0 0.0
        %4176 = vmatpush1.msra.mxu0 0.0
        %4177 = vmatprep.mubr.f32.mxu0 0.0
        %4178 = vmatmul.mubr.f32.gmra.mrb[0].mxu0 %v4090
        %v4179 = vpop.f32.mrb[0].mxu0
        %v4180 = vadd.f32 %v4087, %v4179
        %v4181 = vpop.f32.mrb[0].mxu0
        %4182 = vmatprep.mubr.f32.mxu0 0.0
        %4183 = vmatmul.mubr.f32.gmra.mrb[0].mxu0 %v4093
        %v4184 = vpop.f32.mrb[0].mxu0
        %v4185 = vadd.f32 %v4087, %v4184
        %v4186 = vpop.f32.mrb[0].mxu0
        %4187 = vmatprep.mubr.f32.mxu0 0.0
        %4188 = vmatmul.mubr.f32.gmra.mrb[0].mxu0 %v4096
        %v4189 = vpop.f32.mrb[0].mxu0
        %v4190 = vadd.f32 %v4087, %v4189
        %v4191 = vpop.f32.mrb[0].mxu0
        %4192 = vmatprep.mubr.f32.mxu0 0.0
        %4193 = vmatmul.mubr.f32.gmra.mrb[0].mxu0 %v4099
        %v4194 = vpop.f32.mrb[0].mxu0
        %v4195 = vadd.f32 %v4087, %v4194
        %v4196 = vpop.f32.mrb[0].mxu0
        %4197 = vmatprep.mubr.f32.mxu0 0.0
        %4198 = vmatmul.mubr.f32.gmra.mrb[0].mxu0 %v4102
        %v4199 = vpop.f32.mrb[0].mxu0
        %v4200 = vadd.f32 %v4087, %v4199
        %v4201 = vpop.f32.mrb[0].mxu0
        %4202 = vmatprep.mubr.f32.mxu0 0.0
        %4203 = vmatmul.mubr.f32.gmra.mrb[0].mxu0 %v4105
        %v4204 = vpop.f32.mrb[0].mxu0
        %v4205 = vadd.f32 %v4087, %v4204
        %v4206 = vpop.f32.mrb[0].mxu0
        %4207 = vmatprep.mubr.f32.mxu0 0.0
        %4208 = vmatmul.mubr.f32.gmra.mrb[0].mxu0 %v4108
        %v4209 = vpop.f32.mrb[0].mxu0
        %v4210 = vadd.f32 %v4087, %v4209
        %v4211 = vpop.f32.mrb[0].mxu0
        %4212 = vmatprep.mubr.f32.mxu0 0.0
        %4213 = vmatmul.mubr.f32.gmra.mrb[0].mxu0 %v4111
        %v4214 = vpop.f32.mrb[0].mxu0
        %v4215 = vadd.f32 %v4087, %v4214
        %v4216 = vpop.f32.mrb[0].mxu0
        %4217 = vdwg.mxu0
        %v4218 = vmul.f32 %v4180, 0.5
        %v4219 = vmul.f32 %v4185, 0.5
        %v4220 = vadd.f32 %v4218, 0.0
        %v4221 = vadd.f32 %v4219, 0.0
        %vm4222 = vcmp.ge.f32.partialorder %v4220, 1.0
        %vm4223 = vcmp.ge.f32.partialorder %v4221, 1.0
        %v4224 = vsel %vm4222, 1.0, 0.0
        %v4225 = vsel %vm4223, 1.0, 0.0
        %4226 = vst.msk [vmem:[%s338] sm:$0xff] %vm359, %v4224
        %4227 = vst.msk [vmem:[%s338 + $0x8] sm:$0xff] %vm359, %v4225
        %v4228 = vsel %vm4222, 0.0, %v4220
        %v4229 = vsel %vm4223, 0.0, %v4221
        %v4230 = vsub.f32 %v4190, %v4228
        %v4231 = vsub.f32 %v4195, %v4229
        %v4232 = vmul.f32 %v4230, 0.5
        %v4233 = vmul.f32 %v4231, 0.5
        %v4234 = vadd.f32 %v4228, %v4232
        %v4235 = vadd.f32 %v4229, %v4233
        %vm4236 = vcmp.ge.f32.partialorder %v4234, 1.0
        %vm4237 = vcmp.ge.f32.partialorder %v4235, 1.0
        %v4238 = vsel %vm4236, 1.0, 0.0
        %v4239 = vsel %vm4237, 1.0, 0.0
        %s4240 = scalar_lea.vmem %s338, 16 [#allocation10]
        %4241 = vst.msk [vmem:[%s4240] sm:$0xff] %vm359, %v4238
        %4242 = vst.msk [vmem:[%s4240 + $0x8] sm:$0xff] %vm359, %v4239
        %v4243 = vsel %vm4236, 0.0, %v4234
        %v4244 = vsel %vm4237, 0.0, %v4235
        %v4245 = vsub.f32 %v4200, %v4243
        %v4246 = vsub.f32 %v4205, %v4244
        %v4247 = vmul.f32 %v4245, 0.5
        %v4248 = vmul.f32 %v4246, 0.5
        %v4249 = vadd.f32 %v4243, %v4247
        %v4250 = vadd.f32 %v4244, %v4248
        %vm4251 = vcmp.ge.f32.partialorder %v4249, 1.0
        %vm4252 = vcmp.ge.f32.partialorder %v4250, 1.0
        %v4253 = vsel %vm4251, 1.0, 0.0
        %v4254 = vsel %vm4252, 1.0, 0.0
        %s4255 = scalar_lea.vmem %s338, 32 [#allocation10]
        %4256 = vst.msk [vmem:[%s4255] sm:$0xff] %vm359, %v4253
        %4257 = vst.msk [vmem:[%s4255 + $0x8] sm:$0xff] %vm359, %v4254
        %v4258 = vsel %vm4251, 0.0, %v4249
        %v4259 = vsel %vm4252, 0.0, %v4250
        %v4260 = vsub.f32 %v4210, %v4258
        %v4261 = vsub.f32 %v4215, %v4259
        %v4262 = vmul.f32 %v4260, 0.5
        %v4263 = vmul.f32 %v4261, 0.5
        %v4264 = vadd.f32 %v4258, %v4262
        %v4265 = vadd.f32 %v4259, %v4263
        %vm4266 = vcmp.ge.f32.partialorder %v4264, 1.0
        %vm4267 = vcmp.ge.f32.partialorder %v4265, 1.0
        %v4268 = vsel %vm4266, 1.0, 0.0
        %v4269 = vsel %vm4267, 1.0, 0.0
        %s4270 = scalar_lea.vmem %s338, 48 [#allocation10]
        %4271 = vst.msk [vmem:[%s4270] sm:$0xff] %vm359, %v4268
        %4272 = vst.msk [vmem:[%s4270 + $0x8] sm:$0xff] %vm359, %v4269
        %s4273 = sand.u32 %s164, 1
        %s4274 = scalar_lea.sflag [#allocation4], %s4273
        %s4275 = sand.u32 %s164, 1
        %s4276 = smul.addr %s4275, 64
        %s4277 = scalar_lea.vmem [#allocation10], %s4276
        // Predicated region
        $region61: #{tpu_custom_call.1} parent=43 // pred_check
          %p4278 = pneg %p174
        $region62: #{tpu_custom_call.1} parent=43 // pred_check_branch
          %4280 = sbr.rel (%p4278) target = $region64
        $region63: #{tpu_custom_call.1} parent=43 // pred_region
          #allocation14 [shape = 'u32[6]{0}', space=smem, size = 0x18, scoped, tag = 'DMA stride descriptor']
          %s4282 = ssub.s32 1024, 1024
          %4283 = vsyncadd %s4274, %s4282
          %s4284 = smul.addr %s25, 2
          %s4285 = smul.addr %s4284, 128
          %s4286 = scalar_lea.hbm %s6, %s4285
          %s4288 = sshll.u32 1, 14
          %s4289 = sxor.u32 4294967295, %s4288
          %s4292 = sshll.u32 7, 18
          %s4293 = sxor.u32 4294967295, %s4292
          %s4294 = sand.u32 0, %s4293
          %s4296 = sor.u32 %s4294, 0
          %s4298 = sshll.u32 3, 24
          %s4299 = sxor.u32 4294967295, %s4298
          %s4300 = sand.u32 %s4296, %s4299
          %s4302 = sor.u32 %s4300, 0
          %s4303 = sshll.u32 %s4277, 4
          %s4304 = int_to_ptr.vmem [resolvable:$true] %s4303
          %4310 = sst [smem:[#allocation14]] 256
          %s4311 = scalar_lea.smem [#allocation14], 1
          %4312 = sst [smem:[%s4311]] 512
          %s4313 = scalar_lea.smem [#allocation14], 2
          %4314 = sst [smem:[%s4313]] 2
          %s4315 = scalar_lea.smem [#allocation14], 3
          %4316 = sst [smem:[%s4315]] 128
          %s4317 = scalar_lea.smem [#allocation14], 4
          %4318 = sst [smem:[%s4317]] 128
          %s4319 = scalar_lea.smem [#allocation14], 5
          %4320 = sst [smem:[%s4319]] 8
          %4322 = dma.general %s4304, 1024, %s4286, %s4274, [#allocation13], [#allocation14], %s4302, 0
        $region64: #{tpu_custom_call.1} parent=43 // pred_fallthru
          _
      $region44: #{tpu_custom_call.1} parent=5 // pred_fallthru
        _
      %p4323 = scmp.le.s32.totalorder 2, %s20
      // Predicated region
      $region65: #{tpu_custom_call.1} parent=5 // pred_check
        %p4324 = pneg %p4323
      $region66: #{tpu_custom_call.1} parent=5 // pred_check_branch
        %4326 = sbr.rel (%p4324) target = $region68
      $region67: #{tpu_custom_call.1} parent=5 // pred_region
        %s4327 = ssub.s32 %s20, 2
        // Predicated region
        $region69: #{tpu_custom_call.1} parent=67 // pred_check
          %p4328 = pneg %p180
        $region70: #{tpu_custom_call.1} parent=67 // pred_check_branch
          %4330 = sbr.rel (%p4328) target = $region72
        $region71: #{tpu_custom_call.1} parent=67 // pred_region
          %s4331 = sand.u32 %s165, 1
          %s4332 = scalar_lea.sflag [#allocation4], %s4331
          %s4333 = sand.u32 %s165, 1
          %s4334 = smul.addr %s4333, 64
          %s4335 = scalar_lea.vmem [#allocation10], %s4334
          %4336 = dma.done %s4332, 1024
        $region72: #{tpu_custom_call.1} parent=67 // pred_fallthru
          _
      $region68: #{tpu_custom_call.1} parent=5 // pred_fallthru
        _
    $region6: #{tpu_custom_call.1} parent=1 // loop_footer
      %s24 = sadd.s32 1, %s20
    $region7: #{tpu_custom_call.1} parent=1 // loop_footer_branch
      %19 = sbr.rel target = $region3
    $region8: #{tpu_custom_call.1} parent=1 // loop_exit
      _
    %4337 = vsyncpa [#allocation3], 1
    %s4338 = scalar_lea.sflag [#allocation3], 1
    %4339 = vsyncpa %s4338, 1
    %4340 = vsyncpa [#allocation6], 1
    %4341 = vsyncpa [#allocation9], 1
    %4342 = vsyncpa [#allocation4], 1
    %s4343 = scalar_lea.sflag [#allocation4], 1
    %4344 = vsyncpa %s4343, 1

</llo_original>
